<compile_context>
chip_gen: v7x
topology: tpu7x:2x2x1
jax: 0.10.0
libtpu: 0.0.40
codegen_flags: <defaults>
</compile_context>

<pallas_src>
import functools

import numpy as np
import jax
import jax.numpy as jnp
from jax.experimental import pallas as pl
from jax.experimental.pallas import tpu as pltpu


def _round_up(x, m):
    return (x + m - 1) // m * m


# ----------------------------- Pallas kernel -------------------------------------------

def _basic_block_kernel(x_ref, w1_ref, b1_ref, w2_ref, b2_ref, mask_ref, o_ref,
                        xb_ref, patch_ref, mid_ref, *,
                        offsets_x, offsets_m, cp, w_mid, p_out, res_off, final_relu):
    """Fused conv1+BN1+ReLU -> conv2+BN2 (+identity) (+ReLU) for one batch element.

    x_ref    : (cp, L_in)     f32, lead-zero-padded flat padded-spatial input (channels padded to cp)
    w1_ref   : (cp, 27*cp)    bf16, BN1-scale-folded im2col weights (out channels padded to cp)
    w2_ref   : (Cout, 27*cp)  bf16, BN2-scale-folded im2col weights
    b1/b2    : (C, 1)         f32 folded BN biases
    mask_ref : (1, W_mid)     1.0 on interior voxels of the padded mid volume, 0.0 on halo/tail
    o_ref    : (Cout, P_out)  conv2 output, corner-flat layout, lane-dense (128-multiple)
    xb_ref   : (cp, L_in)     bf16 scratch copy of the input (halves per-tap copy bytes)
    patch_ref: (27*cp, W_mid) bf16 im2col patch scratch, SHARED by conv1 and conv2
    mid_ref  : (cp, W_mid)    bf16 intermediate activation (never touches HBM)
    """
    # one-time bf16 copy of the input so the 27 per-tap copies move half the bytes
    xb_ref[...] = x_ref[...].astype(jnp.bfloat16)

    # ---- conv1: 27-tap im2col (bf16, pack-aligned rows) + one MXU matmul (f32 acc) ----
    for k, off in enumerate(offsets_x):                          # 27 static shifted copies
        patch_ref[k * cp:(k + 1) * cp, :] = xb_ref[:, off:off + w_mid]
    mid = jnp.dot(w1_ref[...], patch_ref[...], preferred_element_type=jnp.float32)
    # folded BN1 bias + ReLU + zero the halo/tail so conv2 sees correct zero padding
    mid_ref[...] = (jnp.maximum(mid + b1_ref[...], 0.0) * mask_ref[...]).astype(jnp.bfloat16)

    # ---- conv2: reuse the SAME patch scratch (conv1's patches are dead after its dot) ----
    for k, off in enumerate(offsets_m):
        patch_ref[k * cp:(k + 1) * cp, :p_out] = mid_ref[:, off:off + p_out]
    out = jnp.dot(w2_ref[...], patch_ref[:, :p_out], preferred_element_type=jnp.float32)

    # folded BN2 bias + identity residual (aligned, exact f32) + optional ReLU
    cout = o_ref.shape[0]
    out = out + b2_ref[...] + x_ref[:cout, res_off:res_off + p_out]
    if final_relu:
        out = jnp.maximum(out, 0.0)
    o_ref[...] = out.astype(o_ref.dtype)


# ----------------------------- Wrapper / glue ------------------------------------------

def basic_block_forward(x, params, final_relu=1):
    """Pallas forward for BasicBlock(inplanes=planes, stride=1, downsample=None)."""
    n, cin, d, h, w = x.shape
    cmid = params["w1"].shape[0]
    cout = params["w2"].shape[0]
    assert cin == cmid == cout, "identity residual requires inplanes == planes (no downsample)"

    cp = _round_up(max(cin, 1), 16)            # bf16 sublane pack = 16 rows

    dp, hp, wp = d + 2, h + 2, w + 2
    hw = hp * wp
    p_pad = dp * hw                            # padded-flat volume size
    center = hw + wp + 1                       # flat offset of voxel (1,1,1)
    max_off = 2 * center                       # largest im2col shift
    p_out = _round_up(d * hw, 128)             # conv2 output lanes (corner-flat)
    w_mid = _round_up(p_out + max_off, 128)    # intermediate (padded-flat) lanes
    delta = (-max_off) % 128                   # extra lead pad -> residual offset is 128-aligned
    res_off = max_off + delta                  # multiple of 128
    lead = center + delta
    l_in = _round_up(w_mid + max_off + delta, 128)
    assert lead + p_pad <= l_in and res_off % 128 == 0

    offsets = tuple(kd * hw + kh * wp + kw
                    for kd in range(3) for kh in range(3) for kw in range(3))
    offsets_x = tuple(o + delta for o in offsets)   # conv1 reads shifted by the extra lead pad

    # input: pad channels to cp, spatial by 1, flatten, prepend `lead` zeros, lane-pad the tail
    xp = jnp.pad(x, ((0, 0), (0, cp - cin), (1, 1), (1, 1), (1, 1)))
    xf = xp.reshape(n, cp, p_pad)
    x_lead = jnp.pad(xf, ((0, 0), (0, 0), (lead, l_in - p_pad - lead)))

    # fold BN scale into im2col weights (bf16 for the MXU), BN shift into a (C,1) f32 bias
    def fold(wgt, gamma, beta, mean, var, ci_pad, co_pad, eps=1e-5):
        co, ci = wgt.shape[0], wgt.shape[1]
        scale = gamma / jnp.sqrt(var + eps)
        wm = jnp.transpose(wgt, (0, 2, 3, 4, 1)) * scale[:, None, None, None, None]
        wm = jnp.pad(wm, ((0, co_pad - co), (0, 0), (0, 0), (0, 0), (0, ci_pad - ci)))
        wm = wm.reshape(co_pad, 27 * ci_pad).astype(jnp.bfloat16)
        b = jnp.pad(beta - mean * scale, (0, co_pad - co)).reshape(-1, 1).astype(jnp.float32)
        return wm, b

    w1m, b1 = fold(params["w1"], params["bn1_gamma"], params["bn1_beta"],
                   params["bn1_mean"], params["bn1_var"], ci_pad=cp, co_pad=cp)
    w2m, b2 = fold(params["w2"], params["bn2_gamma"], params["bn2_beta"],
                   params["bn2_mean"], params["bn2_var"], ci_pad=cp, co_pad=cout)

    # interior mask for the intermediate (padded-flat layout): 1 on real voxels, 0 on halo/tail
    q = np.arange(w_mid)
    dq, r = q // hw, q % hw
    hq, wq = r // wp, r % wp
    interior = ((q < p_pad) & (dq >= 1) & (dq <= d)
                & (hq >= 1) & (hq <= h) & (wq >= 1) & (wq <= w))
    mask = jnp.asarray(interior.astype(np.float32)).reshape(1, w_mid)

    kern = functools.partial(
        _basic_block_kernel, offsets_x=offsets_x, offsets_m=offsets, cp=cp,
        w_mid=w_mid, p_out=p_out, res_off=res_off, final_relu=bool(final_relu))

    # VMEM working-set estimate -> explicit scoped limit (2x headroom, clamped to [16, 64] MiB)
    scratch_bytes = 2 * (cp * l_in + 27 * cp * w_mid + cp * w_mid)          # bf16 scratch
    io_bytes = 2 * 4 * (cp * l_in + cout * p_out)                           # double-buffered x / out
    const_bytes = 2 * (2 * (cp + cout) * 27 * cp + 4 * (cp + cout + w_mid))
    vmem_limit = int(min(64 * 2**20,
                         max(16 * 2**20, 2 * (scratch_bytes + io_bytes + const_bytes))))

    out_flat = pl.pallas_call(
        kern,
        grid=(n,),
        in_specs=[
            pl.BlockSpec((None, cp, l_in), lambda i: (i, 0, 0)),     # per-batch input (f32)
            pl.BlockSpec((cp, 27 * cp), lambda i: (0, 0)),           # conv1 weights (bf16)
            pl.BlockSpec((cp, 1), lambda i: (0, 0)),                 # bn1 bias
            pl.BlockSpec((cout, 27 * cp), lambda i: (0, 0)),         # conv2 weights (bf16)
            pl.BlockSpec((cout, 1), lambda i: (0, 0)),               # bn2 bias
            pl.BlockSpec((1, w_mid), lambda i: (0, 0)),              # interior mask
        ],
        out_specs=pl.BlockSpec((None, cout, p_out), lambda i: (i, 0, 0)),
        out_shape=jax.ShapeDtypeStruct((n, cout, p_out), x.dtype),
        scratch_shapes=[
            pltpu.VMEM((cp, l_in), jnp.bfloat16),        # bf16 copy of the input block
            pltpu.VMEM((27 * cp, w_mid), jnp.bfloat16),  # shared im2col patches (conv1 & conv2)
            pltpu.VMEM((cp, w_mid), jnp.bfloat16),       # intermediate activation (never hits HBM)
        ],
        compiler_params=pltpu.CompilerParams(
            dimension_semantics=("parallel",),
            vmem_limit_bytes=vmem_limit),
    )(x_lead, w1m, b1, w2m, b2, mask)

    # corner-flat -> NCDHW (valid positions are p = d0*Hp*Wp + h0*Wp + w0 with h0 < H, w0 < W)
    return out_flat[:, :, :d * hw].reshape(n, cout, d, hp, wp)[:, :, :, :h, :w]


# ----------------------------- pure-JAX reference --------------------------------------

def _ref_forward(x, params, final_relu=1, eps=1e-5):
    def conv(y, wgt):
        return jax.lax.conv_general_dilated(
            y, wgt, window_strides=(1, 1, 1), padding=((1, 1), (1, 1), (1, 1)),
            dimension_numbers=("NCDHW", "OIDHW", "NCDHW"))

    def bn(y, g, b, m, v):
        sh = (1, -1, 1, 1, 1)
        return (y - m.reshape(sh)) / jnp.sqrt(v.reshape(sh) + eps) * g.reshape(sh) + b.reshape(sh)

    out = jax.nn.relu(bn(conv(x, params["w1"]), params["bn1_gamma"], params["bn1_beta"],
                         params["bn1_mean"], params["bn1_var"]))
    out = bn(conv(out, params["w2"]), params["bn2_gamma"], params["bn2_beta"],
             params["bn2_mean"], params["bn2_var"])
    out = out + x
    if final_relu:
        out = jax.nn.relu(out)
    return out


# ----------------------------- main -----------------------------------------------------

if __name__ == "__main__":
    N, C, D, H, W = 2, 8, 8, 8, 8          # inplanes = planes = 8, stride = 1
    key = jax.random.PRNGKey(0)
    ks = jax.random.split(key, 11)

    x = jax.random.normal(ks[0], (N, C, D, H, W), jnp.float32)
    params = {
        "w1": 0.1 * jax.random.normal(ks[1], (C, C, 3, 3, 3), jnp.float32),
        "w2": 0.1 * jax.random.normal(ks[2], (C, C, 3, 3, 3), jnp.float32),
        "bn1_gamma": jax.random.uniform(ks[3], (C,), jnp.float32, 0.5, 1.5),
        "bn1_beta": 0.1 * jax.random.normal(ks[4], (C,), jnp.float32),
        "bn1_mean": 0.1 * jax.random.normal(ks[5], (C,), jnp.float32),
        "bn1_var": jax.random.uniform(ks[6], (C,), jnp.float32, 0.5, 1.5),
        "bn2_gamma": jax.random.uniform(ks[7], (C,), jnp.float32, 0.5, 1.5),
        "bn2_beta": 0.1 * jax.random.normal(ks[8], (C,), jnp.float32),
        "bn2_mean": 0.1 * jax.random.normal(ks[9], (C,), jnp.float32),
        "bn2_var": jax.random.uniform(ks[10], (C,), jnp.float32, 0.5, 1.5),
    }

    out = jax.block_until_ready(basic_block_forward(x, params, final_relu=1))
    ref = jax.block_until_ready(_ref_forward(x, params, final_relu=1))

    assert out.shape == (N, C, D, H, W), out.shape
    # bf16 MXU inputs with f32 accumulation over 27*C-term sums: expected max abs error ~1e-2..3e-2
    # at these magnitudes (the pure-f32 path met 2e-3), hence the widened atol/rtol check.
    err = jnp.abs(out - ref)
    tol = 6e-2 + 1e-2 * jnp.abs(ref)
    max_err = float(jnp.max(err))
    assert bool(jnp.all(err <= tol)), f"max abs error {max_err}"
    print("KERNEL_OK")
</pallas_src>

<mosaic_0001>
module attributes {stable_mosaic.version = 11 : i64} {
  func.func @_basic_block_kernel(%arg0: i32, %arg1: memref<1x16x1408xf32, #tpu.memory_space<vmem>>, %arg2: memref<16x432xbf16, #tpu.memory_space<vmem>>, %arg3: memref<16x1xf32, #tpu.memory_space<vmem>>, %arg4: memref<8x432xbf16, #tpu.memory_space<vmem>>, %arg5: memref<8x1xf32, #tpu.memory_space<vmem>>, %arg6: memref<1x1152xf32, #tpu.memory_space<vmem>>, %arg7: memref<1x8x896xf32, #tpu.memory_space<vmem>>, %arg8: memref<16x1408xbf16, #tpu.memory_space<vmem>>, %arg9: memref<432x1152xbf16, #tpu.memory_space<vmem>>, %arg10: memref<16x1152xbf16, #tpu.memory_space<vmem>>) attributes {dimension_semantics = [#tpu.dimension_semantics<parallel>], iteration_bounds = array<i64: 2>, scalar_prefetch = 0 : i64, scratch_operands = 3 : i64, tpu.core_type = #tpu.core_type<tc>, window_params = [{transform_indices = @transform_0, window_bounds = array<i64: 1, 16, 1408>}, {pipeline_mode = #tpu.pipeline_mode<synchronous>, transform_indices = @transform_1, window_bounds = array<i64: 16, 432>}, {pipeline_mode = #tpu.pipeline_mode<synchronous>, transform_indices = @transform_2, window_bounds = array<i64: 16, 1>}, {pipeline_mode = #tpu.pipeline_mode<synchronous>, transform_indices = @transform_3, window_bounds = array<i64: 8, 432>}, {pipeline_mode = #tpu.pipeline_mode<synchronous>, transform_indices = @transform_4, window_bounds = array<i64: 8, 1>}, {pipeline_mode = #tpu.pipeline_mode<synchronous>, transform_indices = @transform_5, window_bounds = array<i64: 1, 1152>}, {transform_indices = @transform_6, window_bounds = array<i64: 1, 8, 896>}]} {
    %c0 = arith.constant 0 : index
    %c0_0 = arith.constant 0 : index
    %c0_1 = arith.constant 0 : index
    %0 = vector.load %arg1[%c0, %c0_0, %c0_1] : memref<1x16x1408xf32, #tpu.memory_space<vmem>>, vector<1x16x1408xf32>
    %1 = vector.shape_cast %0 : vector<1x16x1408xf32> to vector<16x1408xf32>
    %2 = arith.truncf %1 : vector<16x1408xf32> to vector<16x1408xbf16>
    %c0_2 = arith.constant 0 : index
    %c0_3 = arith.constant 0 : index
    %3 = vector.load %arg8[%c0_2, %c0_3] : memref<16x1408xbf16, #tpu.memory_space<vmem>>, vector<16x1408xbf16>
    tpu.vector_store %arg8[%c0_2, %c0_3], %2 {strides = array<i32>} : memref<16x1408xbf16, #tpu.memory_space<vmem>>, vector<16x1408xbf16>,
    %c0_4 = arith.constant 0 : index
    %c34 = arith.constant 34 : index
    %4 = vector.load %arg8[%c0_4, %c34] : memref<16x1408xbf16, #tpu.memory_space<vmem>>, vector<16x1152xbf16>
    %c0_5 = arith.constant 0 : index
    %c0_6 = arith.constant 0 : index
    %5 = vector.load %arg9[%c0_5, %c0_6] : memref<432x1152xbf16, #tpu.memory_space<vmem>>, vector<16x1152xbf16>
    tpu.vector_store %arg9[%c0_5, %c0_6], %4 {strides = array<i32>} : memref<432x1152xbf16, #tpu.memory_space<vmem>>, vector<16x1152xbf16>,
    %c0_7 = arith.constant 0 : index
    %c35 = arith.constant 35 : index
    %6 = vector.load %arg8[%c0_7, %c35] : memref<16x1408xbf16, #tpu.memory_space<vmem>>, vector<16x1152xbf16>
    %c16 = arith.constant 16 : index
    %c0_8 = arith.constant 0 : index
    %7 = vector.load %arg9[%c16, %c0_8] : memref<432x1152xbf16, #tpu.memory_space<vmem>>, vector<16x1152xbf16>
    tpu.vector_store %arg9[%c16, %c0_8], %6 {strides = array<i32>} : memref<432x1152xbf16, #tpu.memory_space<vmem>>, vector<16x1152xbf16>,
    %c0_9 = arith.constant 0 : index
    %c36 = arith.constant 36 : index
    %8 = vector.load %arg8[%c0_9, %c36] : memref<16x1408xbf16, #tpu.memory_space<vmem>>, vector<16x1152xbf16>
    %c32 = arith.constant 32 : index
    %c0_10 = arith.constant 0 : index
    %9 = vector.load %arg9[%c32, %c0_10] : memref<432x1152xbf16, #tpu.memory_space<vmem>>, vector<16x1152xbf16>
    tpu.vector_store %arg9[%c32, %c0_10], %8 {strides = array<i32>} : memref<432x1152xbf16, #tpu.memory_space<vmem>>, vector<16x1152xbf16>,
    %c0_11 = arith.constant 0 : index
    %c44 = arith.constant 44 : index
    %10 = vector.load %arg8[%c0_11, %c44] : memref<16x1408xbf16, #tpu.memory_space<vmem>>, vector<16x1152xbf16>
    %c48 = arith.constant 48 : index
    %c0_12 = arith.constant 0 : index
    %11 = vector.load %arg9[%c48, %c0_12] : memref<432x1152xbf16, #tpu.memory_space<vmem>>, vector<16x1152xbf16>
    tpu.vector_store %arg9[%c48, %c0_12], %10 {strides = array<i32>} : memref<432x1152xbf16, #tpu.memory_space<vmem>>, vector<16x1152xbf16>,
    %c0_13 = arith.constant 0 : index
    %c45 = arith.constant 45 : index
    %12 = vector.load %arg8[%c0_13, %c45] : memref<16x1408xbf16, #tpu.memory_space<vmem>>, vector<16x1152xbf16>
    %c64 = arith.constant 64 : index
    %c0_14 = arith.constant 0 : index
    %13 = vector.load %arg9[%c64, %c0_14] : memref<432x1152xbf16, #tpu.memory_space<vmem>>, vector<16x1152xbf16>
    tpu.vector_store %arg9[%c64, %c0_14], %12 {strides = array<i32>} : memref<432x1152xbf16, #tpu.memory_space<vmem>>, vector<16x1152xbf16>,
    %c0_15 = arith.constant 0 : index
    %c46 = arith.constant 46 : index
    %14 = vector.load %arg8[%c0_15, %c46] : memref<16x1408xbf16, #tpu.memory_space<vmem>>, vector<16x1152xbf16>
    %c80 = arith.constant 80 : index
    %c0_16 = arith.constant 0 : index
    %15 = vector.load %arg9[%c80, %c0_16] : memref<432x1152xbf16, #tpu.memory_space<vmem>>, vector<16x1152xbf16>
    tpu.vector_store %arg9[%c80, %c0_16], %14 {strides = array<i32>} : memref<432x1152xbf16, #tpu.memory_space<vmem>>, vector<16x1152xbf16>,
    %c0_17 = arith.constant 0 : index
    %c54 = arith.constant 54 : index
    %16 = vector.load %arg8[%c0_17, %c54] : memref<16x1408xbf16, #tpu.memory_space<vmem>>, vector<16x1152xbf16>
    %c96 = arith.constant 96 : index
    %c0_18 = arith.constant 0 : index
    %17 = vector.load %arg9[%c96, %c0_18] : memref<432x1152xbf16, #tpu.memory_space<vmem>>, vector<16x1152xbf16>
    tpu.vector_store %arg9[%c96, %c0_18], %16 {strides = array<i32>} : memref<432x1152xbf16, #tpu.memory_space<vmem>>, vector<16x1152xbf16>,
    %c0_19 = arith.constant 0 : index
    %c55 = arith.constant 55 : index
    %18 = vector.load %arg8[%c0_19, %c55] : memref<16x1408xbf16, #tpu.memory_space<vmem>>, vector<16x1152xbf16>
    %c112 = arith.constant 112 : index
    %c0_20 = arith.constant 0 : index
    %19 = vector.load %arg9[%c112, %c0_20] : memref<432x1152xbf16, #tpu.memory_space<vmem>>, vector<16x1152xbf16>
    tpu.vector_store %arg9[%c112, %c0_20], %18 {strides = array<i32>} : memref<432x1152xbf16, #tpu.memory_space<vmem>>, vector<16x1152xbf16>,
    %c0_21 = arith.constant 0 : index
    %c56 = arith.constant 56 : index
    %20 = vector.load %arg8[%c0_21, %c56] : memref<16x1408xbf16, #tpu.memory_space<vmem>>, vector<16x1152xbf16>
    %c128 = arith.constant 128 : index
    %c0_22 = arith.constant 0 : index
    %21 = vector.load %arg9[%c128, %c0_22] : memref<432x1152xbf16, #tpu.memory_space<vmem>>, vector<16x1152xbf16>
    tpu.vector_store %arg9[%c128, %c0_22], %20 {strides = array<i32>} : memref<432x1152xbf16, #tpu.memory_space<vmem>>, vector<16x1152xbf16>,
    %c0_23 = arith.constant 0 : index
    %c134 = arith.constant 134 : index
    %22 = vector.load %arg8[%c0_23, %c134] : memref<16x1408xbf16, #tpu.memory_space<vmem>>, vector<16x1152xbf16>
    %c144 = arith.constant 144 : index
    %c0_24 = arith.constant 0 : index
    %23 = vector.load %arg9[%c144, %c0_24] : memref<432x1152xbf16, #tpu.memory_space<vmem>>, vector<16x1152xbf16>
    tpu.vector_store %arg9[%c144, %c0_24], %22 {strides = array<i32>} : memref<432x1152xbf16, #tpu.memory_space<vmem>>, vector<16x1152xbf16>,
    %c0_25 = arith.constant 0 : index
    %c135 = arith.constant 135 : index
    %24 = vector.load %arg8[%c0_25, %c135] : memref<16x1408xbf16, #tpu.memory_space<vmem>>, vector<16x1152xbf16>
    %c160 = arith.constant 160 : index
    %c0_26 = arith.constant 0 : index
    %25 = vector.load %arg9[%c160, %c0_26] : memref<432x1152xbf16, #tpu.memory_space<vmem>>, vector<16x1152xbf16>
    tpu.vector_store %arg9[%c160, %c0_26], %24 {strides = array<i32>} : memref<432x1152xbf16, #tpu.memory_space<vmem>>, vector<16x1152xbf16>,
    %c0_27 = arith.constant 0 : index
    %c136 = arith.constant 136 : index
    %26 = vector.load %arg8[%c0_27, %c136] : memref<16x1408xbf16, #tpu.memory_space<vmem>>, vector<16x1152xbf16>
    %c176 = arith.constant 176 : index
    %c0_28 = arith.constant 0 : index
    %27 = vector.load %arg9[%c176, %c0_28] : memref<432x1152xbf16, #tpu.memory_space<vmem>>, vector<16x1152xbf16>
    tpu.vector_store %arg9[%c176, %c0_28], %26 {strides = array<i32>} : memref<432x1152xbf16, #tpu.memory_space<vmem>>, vector<16x1152xbf16>,
    %c0_29 = arith.constant 0 : index
    %c144_30 = arith.constant 144 : index
    %28 = vector.load %arg8[%c0_29, %c144_30] : memref<16x1408xbf16, #tpu.memory_space<vmem>>, vector<16x1152xbf16>
    %c192 = arith.constant 192 : index
    %c0_31 = arith.constant 0 : index
    %29 = vector.load %arg9[%c192, %c0_31] : memref<432x1152xbf16, #tpu.memory_space<vmem>>, vector<16x1152xbf16>
    tpu.vector_store %arg9[%c192, %c0_31], %28 {strides = array<i32>} : memref<432x1152xbf16, #tpu.memory_space<vmem>>, vector<16x1152xbf16>,
    %c0_32 = arith.constant 0 : index
    %c145 = arith.constant 145 : index
    %30 = vector.load %arg8[%c0_32, %c145] : memref<16x1408xbf16, #tpu.memory_space<vmem>>, vector<16x1152xbf16>
    %c208 = arith.constant 208 : index
    %c0_33 = arith.constant 0 : index
    %31 = vector.load %arg9[%c208, %c0_33] : memref<432x1152xbf16, #tpu.memory_space<vmem>>, vector<16x1152xbf16>
    tpu.vector_store %arg9[%c208, %c0_33], %30 {strides = array<i32>} : memref<432x1152xbf16, #tpu.memory_space<vmem>>, vector<16x1152xbf16>,
    %c0_34 = arith.constant 0 : index
    %c146 = arith.constant 146 : index
    %32 = vector.load %arg8[%c0_34, %c146] : memref<16x1408xbf16, #tpu.memory_space<vmem>>, vector<16x1152xbf16>
    %c224 = arith.constant 224 : index
    %c0_35 = arith.constant 0 : index
    %33 = vector.load %arg9[%c224, %c0_35] : memref<432x1152xbf16, #tpu.memory_space<vmem>>, vector<16x1152xbf16>
    tpu.vector_store %arg9[%c224, %c0_35], %32 {strides = array<i32>} : memref<432x1152xbf16, #tpu.memory_space<vmem>>, vector<16x1152xbf16>,
    %c0_36 = arith.constant 0 : index
    %c154 = arith.constant 154 : index
    %34 = vector.load %arg8[%c0_36, %c154] : memref<16x1408xbf16, #tpu.memory_space<vmem>>, vector<16x1152xbf16>
    %c240 = arith.constant 240 : index
    %c0_37 = arith.constant 0 : index
    %35 = vector.load %arg9[%c240, %c0_37] : memref<432x1152xbf16, #tpu.memory_space<vmem>>, vector<16x1152xbf16>
    tpu.vector_store %arg9[%c240, %c0_37], %34 {strides = array<i32>} : memref<432x1152xbf16, #tpu.memory_space<vmem>>, vector<16x1152xbf16>,
    %c0_38 = arith.constant 0 : index
    %c155 = arith.constant 155 : index
    %36 = vector.load %arg8[%c0_38, %c155] : memref<16x1408xbf16, #tpu.memory_space<vmem>>, vector<16x1152xbf16>
    %c256 = arith.constant 256 : index
    %c0_39 = arith.constant 0 : index
    %37 = vector.load %arg9[%c256, %c0_39] : memref<432x1152xbf16, #tpu.memory_space<vmem>>, vector<16x1152xbf16>
    tpu.vector_store %arg9[%c256, %c0_39], %36 {strides = array<i32>} : memref<432x1152xbf16, #tpu.memory_space<vmem>>, vector<16x1152xbf16>,
    %c0_40 = arith.constant 0 : index
    %c156 = arith.constant 156 : index
    %38 = vector.load %arg8[%c0_40, %c156] : memref<16x1408xbf16, #tpu.memory_space<vmem>>, vector<16x1152xbf16>
    %c272 = arith.constant 272 : index
    %c0_41 = arith.constant 0 : index
    %39 = vector.load %arg9[%c272, %c0_41] : memref<432x1152xbf16, #tpu.memory_space<vmem>>, vector<16x1152xbf16>
    tpu.vector_store %arg9[%c272, %c0_41], %38 {strides = array<i32>} : memref<432x1152xbf16, #tpu.memory_space<vmem>>, vector<16x1152xbf16>,
    %c0_42 = arith.constant 0 : index
    %c234 = arith.constant 234 : index
    %40 = vector.load %arg8[%c0_42, %c234] : memref<16x1408xbf16, #tpu.memory_space<vmem>>, vector<16x1152xbf16>
    %c288 = arith.constant 288 : index
    %c0_43 = arith.constant 0 : index
    %41 = vector.load %arg9[%c288, %c0_43] : memref<432x1152xbf16, #tpu.memory_space<vmem>>, vector<16x1152xbf16>
    tpu.vector_store %arg9[%c288, %c0_43], %40 {strides = array<i32>} : memref<432x1152xbf16, #tpu.memory_space<vmem>>, vector<16x1152xbf16>,
    %c0_44 = arith.constant 0 : index
    %c235 = arith.constant 235 : index
    %42 = vector.load %arg8[%c0_44, %c235] : memref<16x1408xbf16, #tpu.memory_space<vmem>>, vector<16x1152xbf16>
    %c304 = arith.constant 304 : index
    %c0_45 = arith.constant 0 : index
    %43 = vector.load %arg9[%c304, %c0_45] : memref<432x1152xbf16, #tpu.memory_space<vmem>>, vector<16x1152xbf16>
    tpu.vector_store %arg9[%c304, %c0_45], %42 {strides = array<i32>} : memref<432x1152xbf16, #tpu.memory_space<vmem>>, vector<16x1152xbf16>,
    %c0_46 = arith.constant 0 : index
    %c236 = arith.constant 236 : index
    %44 = vector.load %arg8[%c0_46, %c236] : memref<16x1408xbf16, #tpu.memory_space<vmem>>, vector<16x1152xbf16>
    %c320 = arith.constant 320 : index
    %c0_47 = arith.constant 0 : index
    %45 = vector.load %arg9[%c320, %c0_47] : memref<432x1152xbf16, #tpu.memory_space<vmem>>, vector<16x1152xbf16>
    tpu.vector_store %arg9[%c320, %c0_47], %44 {strides = array<i32>} : memref<432x1152xbf16, #tpu.memory_space<vmem>>, vector<16x1152xbf16>,
    %c0_48 = arith.constant 0 : index
    %c244 = arith.constant 244 : index
    %46 = vector.load %arg8[%c0_48, %c244] : memref<16x1408xbf16, #tpu.memory_space<vmem>>, vector<16x1152xbf16>
    %c336 = arith.constant 336 : index
    %c0_49 = arith.constant 0 : index
    %47 = vector.load %arg9[%c336, %c0_49] : memref<432x1152xbf16, #tpu.memory_space<vmem>>, vector<16x1152xbf16>
    tpu.vector_store %arg9[%c336, %c0_49], %46 {strides = array<i32>} : memref<432x1152xbf16, #tpu.memory_space<vmem>>, vector<16x1152xbf16>,
    %c0_50 = arith.constant 0 : index
    %c245 = arith.constant 245 : index
    %48 = vector.load %arg8[%c0_50, %c245] : memref<16x1408xbf16, #tpu.memory_space<vmem>>, vector<16x1152xbf16>
    %c352 = arith.constant 352 : index
    %c0_51 = arith.constant 0 : index
    %49 = vector.load %arg9[%c352, %c0_51] : memref<432x1152xbf16, #tpu.memory_space<vmem>>, vector<16x1152xbf16>
    tpu.vector_store %arg9[%c352, %c0_51], %48 {strides = array<i32>} : memref<432x1152xbf16, #tpu.memory_space<vmem>>, vector<16x1152xbf16>,
    %c0_52 = arith.constant 0 : index
    %c246 = arith.constant 246 : index
    %50 = vector.load %arg8[%c0_52, %c246] : memref<16x1408xbf16, #tpu.memory_space<vmem>>, vector<16x1152xbf16>
    %c368 = arith.constant 368 : index
    %c0_53 = arith.constant 0 : index
    %51 = vector.load %arg9[%c368, %c0_53] : memref<432x1152xbf16, #tpu.memory_space<vmem>>, vector<16x1152xbf16>
    tpu.vector_store %arg9[%c368, %c0_53], %50 {strides = array<i32>} : memref<432x1152xbf16, #tpu.memory_space<vmem>>, vector<16x1152xbf16>,
    %c0_54 = arith.constant 0 : index
    %c254 = arith.constant 254 : index
    %52 = vector.load %arg8[%c0_54, %c254] : memref<16x1408xbf16, #tpu.memory_space<vmem>>, vector<16x1152xbf16>
    %c384 = arith.constant 384 : index
    %c0_55 = arith.constant 0 : index
    %53 = vector.load %arg9[%c384, %c0_55] : memref<432x1152xbf16, #tpu.memory_space<vmem>>, vector<16x1152xbf16>
    tpu.vector_store %arg9[%c384, %c0_55], %52 {strides = array<i32>} : memref<432x1152xbf16, #tpu.memory_space<vmem>>, vector<16x1152xbf16>,
    %c0_56 = arith.constant 0 : index
    %c255 = arith.constant 255 : index
    %54 = vector.load %arg8[%c0_56, %c255] : memref<16x1408xbf16, #tpu.memory_space<vmem>>, vector<16x1152xbf16>
    %c400 = arith.constant 400 : index
    %c0_57 = arith.constant 0 : index
    %55 = vector.load %arg9[%c400, %c0_57] : memref<432x1152xbf16, #tpu.memory_space<vmem>>, vector<16x1152xbf16>
    tpu.vector_store %arg9[%c400, %c0_57], %54 {strides = array<i32>} : memref<432x1152xbf16, #tpu.memory_space<vmem>>, vector<16x1152xbf16>,
    %c0_58 = arith.constant 0 : index
    %c256_59 = arith.constant 256 : index
    %56 = vector.load %arg8[%c0_58, %c256_59] : memref<16x1408xbf16, #tpu.memory_space<vmem>>, vector<16x1152xbf16>
    %c416 = arith.constant 416 : index
    %c0_60 = arith.constant 0 : index
    %57 = vector.load %arg9[%c416, %c0_60] : memref<432x1152xbf16, #tpu.memory_space<vmem>>, vector<16x1152xbf16>
    tpu.vector_store %arg9[%c416, %c0_60], %56 {strides = array<i32>} : memref<432x1152xbf16, #tpu.memory_space<vmem>>, vector<16x1152xbf16>,
    %c0_61 = arith.constant 0 : index
    %c0_62 = arith.constant 0 : index
    %58 = vector.load %arg2[%c0_61, %c0_62] : memref<16x432xbf16, #tpu.memory_space<vmem>>, vector<16x432xbf16>
    %c0_63 = arith.constant 0 : index
    %c0_64 = arith.constant 0 : index
    %59 = vector.load %arg9[%c0_63, %c0_64] : memref<432x1152xbf16, #tpu.memory_space<vmem>>, vector<432x1152xbf16>
    %cst = arith.constant dense<0.000000e+00> : vector<16x1152xf32>
    %60 = tpu.matmul %58, %59, %cst {dimension_numbers = #tpu.dot_dimension_numbers<[1], [0], [0], [1], [0, 0, 1, 1], [], []>} : vector<16x432xbf16>, vector<432x1152xbf16>, vector<16x1152xf32> -> vector<16x1152xf32>
    %c0_65 = arith.constant 0 : index
    %c0_66 = arith.constant 0 : index
    %61 = vector.load %arg3[%c0_65, %c0_66] : memref<16x1xf32, #tpu.memory_space<vmem>>, vector<16x1xf32>
    %62 = vector.broadcast %61 : vector<16x1xf32> to vector<16x1152xf32>
    %63 = arith.addf %60, %62 : vector<16x1152xf32>
    %cst_67 = arith.constant 0.000000e+00 : f32
    %64 = vector.broadcast %cst_67 : f32 to vector<16x1152xf32>
    %65 = arith.maximumf %63, %64 : vector<16x1152xf32>
    %c0_68 = arith.constant 0 : index
    %c0_69 = arith.constant 0 : index
    %66 = vector.load %arg6[%c0_68, %c0_69] : memref<1x1152xf32, #tpu.memory_space<vmem>>, vector<1x1152xf32>
    %67 = vector.broadcast %66 : vector<1x1152xf32> to vector<16x1152xf32>
    %68 = arith.mulf %65, %67 : vector<16x1152xf32>
    %69 = arith.truncf %68 : vector<16x1152xf32> to vector<16x1152xbf16>
    %c0_70 = arith.constant 0 : index
    %c0_71 = arith.constant 0 : index
    %70 = vector.load %arg10[%c0_70, %c0_71] : memref<16x1152xbf16, #tpu.memory_space<vmem>>, vector<16x1152xbf16>
    tpu.vector_store %arg10[%c0_70, %c0_71], %69 {strides = array<i32>} : memref<16x1152xbf16, #tpu.memory_space<vmem>>, vector<16x1152xbf16>,
    %c0_72 = arith.constant 0 : index
    %c0_73 = arith.constant 0 : index
    %71 = vector.load %arg10[%c0_72, %c0_73] : memref<16x1152xbf16, #tpu.memory_space<vmem>>, vector<16x896xbf16>
    %c0_74 = arith.constant 0 : index
    %c0_75 = arith.constant 0 : index
    %72 = vector.load %arg9[%c0_74, %c0_75] : memref<432x1152xbf16, #tpu.memory_space<vmem>>, vector<16x896xbf16>
    tpu.vector_store %arg9[%c0_74, %c0_75], %71 {strides = array<i32>} : memref<432x1152xbf16, #tpu.memory_space<vmem>>, vector<16x896xbf16>,
    %c0_76 = arith.constant 0 : index
    %c1 = arith.constant 1 : index
    %73 = vector.load %arg10[%c0_76, %c1] : memref<16x1152xbf16, #tpu.memory_space<vmem>>, vector<16x896xbf16>
    %c16_77 = arith.constant 16 : index
    %c0_78 = arith.constant 0 : index
    %74 = vector.load %arg9[%c16_77, %c0_78] : memref<432x1152xbf16, #tpu.memory_space<vmem>>, vector<16x896xbf16>
    tpu.vector_store %arg9[%c16_77, %c0_78], %73 {strides = array<i32>} : memref<432x1152xbf16, #tpu.memory_space<vmem>>, vector<16x896xbf16>,
    %c0_79 = arith.constant 0 : index
    %c2 = arith.constant 2 : index
    %75 = vector.load %arg10[%c0_79, %c2] : memref<16x1152xbf16, #tpu.memory_space<vmem>>, vector<16x896xbf16>
    %c32_80 = arith.constant 32 : index
    %c0_81 = arith.constant 0 : index
    %76 = vector.load %arg9[%c32_80, %c0_81] : memref<432x1152xbf16, #tpu.memory_space<vmem>>, vector<16x896xbf16>
    tpu.vector_store %arg9[%c32_80, %c0_81], %75 {strides = array<i32>} : memref<432x1152xbf16, #tpu.memory_space<vmem>>, vector<16x896xbf16>,
    %c0_82 = arith.constant 0 : index
    %c10 = arith.constant 10 : index
    %77 = vector.load %arg10[%c0_82, %c10] : memref<16x1152xbf16, #tpu.memory_space<vmem>>, vector<16x896xbf16>
    %c48_83 = arith.constant 48 : index
    %c0_84 = arith.constant 0 : index
    %78 = vector.load %arg9[%c48_83, %c0_84] : memref<432x1152xbf16, #tpu.memory_space<vmem>>, vector<16x896xbf16>
    tpu.vector_store %arg9[%c48_83, %c0_84], %77 {strides = array<i32>} : memref<432x1152xbf16, #tpu.memory_space<vmem>>, vector<16x896xbf16>,
    %c0_85 = arith.constant 0 : index
    %c11 = arith.constant 11 : index
    %79 = vector.load %arg10[%c0_85, %c11] : memref<16x1152xbf16, #tpu.memory_space<vmem>>, vector<16x896xbf16>
    %c64_86 = arith.constant 64 : index
    %c0_87 = arith.constant 0 : index
    %80 = vector.load %arg9[%c64_86, %c0_87] : memref<432x1152xbf16, #tpu.memory_space<vmem>>, vector<16x896xbf16>
    tpu.vector_store %arg9[%c64_86, %c0_87], %79 {strides = array<i32>} : memref<432x1152xbf16, #tpu.memory_space<vmem>>, vector<16x896xbf16>,
    %c0_88 = arith.constant 0 : index
    %c12 = arith.constant 12 : index
    %81 = vector.load %arg10[%c0_88, %c12] : memref<16x1152xbf16, #tpu.memory_space<vmem>>, vector<16x896xbf16>
    %c80_89 = arith.constant 80 : index
    %c0_90 = arith.constant 0 : index
    %82 = vector.load %arg9[%c80_89, %c0_90] : memref<432x1152xbf16, #tpu.memory_space<vmem>>, vector<16x896xbf16>
    tpu.vector_store %arg9[%c80_89, %c0_90], %81 {strides = array<i32>} : memref<432x1152xbf16, #tpu.memory_space<vmem>>, vector<16x896xbf16>,
    %c0_91 = arith.constant 0 : index
    %c20 = arith.constant 20 : index
    %83 = vector.load %arg10[%c0_91, %c20] : memref<16x1152xbf16, #tpu.memory_space<vmem>>, vector<16x896xbf16>
    %c96_92 = arith.constant 96 : index
    %c0_93 = arith.constant 0 : index
    %84 = vector.load %arg9[%c96_92, %c0_93] : memref<432x1152xbf16, #tpu.memory_space<vmem>>, vector<16x896xbf16>
    tpu.vector_store %arg9[%c96_92, %c0_93], %83 {strides = array<i32>} : memref<432x1152xbf16, #tpu.memory_space<vmem>>, vector<16x896xbf16>,
    %c0_94 = arith.constant 0 : index
    %c21 = arith.constant 21 : index
    %85 = vector.load %arg10[%c0_94, %c21] : memref<16x1152xbf16, #tpu.memory_space<vmem>>, vector<16x896xbf16>
    %c112_95 = arith.constant 112 : index
    %c0_96 = arith.constant 0 : index
    %86 = vector.load %arg9[%c112_95, %c0_96] : memref<432x1152xbf16, #tpu.memory_space<vmem>>, vector<16x896xbf16>
    tpu.vector_store %arg9[%c112_95, %c0_96], %85 {strides = array<i32>} : memref<432x1152xbf16, #tpu.memory_space<vmem>>, vector<16x896xbf16>,
    %c0_97 = arith.constant 0 : index
    %c22 = arith.constant 22 : index
    %87 = vector.load %arg10[%c0_97, %c22] : memref<16x1152xbf16, #tpu.memory_space<vmem>>, vector<16x896xbf16>
    %c128_98 = arith.constant 128 : index
    %c0_99 = arith.constant 0 : index
    %88 = vector.load %arg9[%c128_98, %c0_99] : memref<432x1152xbf16, #tpu.memory_space<vmem>>, vector<16x896xbf16>
    tpu.vector_store %arg9[%c128_98, %c0_99], %87 {strides = array<i32>} : memref<432x1152xbf16, #tpu.memory_space<vmem>>, vector<16x896xbf16>,
    %c0_100 = arith.constant 0 : index
    %c100 = arith.constant 100 : index
    %89 = vector.load %arg10[%c0_100, %c100] : memref<16x1152xbf16, #tpu.memory_space<vmem>>, vector<16x896xbf16>
    %c144_101 = arith.constant 144 : index
    %c0_102 = arith.constant 0 : index
    %90 = vector.load %arg9[%c144_101, %c0_102] : memref<432x1152xbf16, #tpu.memory_space<vmem>>, vector<16x896xbf16>
    tpu.vector_store %arg9[%c144_101, %c0_102], %89 {strides = array<i32>} : memref<432x1152xbf16, #tpu.memory_space<vmem>>, vector<16x896xbf16>,
    %c0_103 = arith.constant 0 : index
    %c101 = arith.constant 101 : index
    %91 = vector.load %arg10[%c0_103, %c101] : memref<16x1152xbf16, #tpu.memory_space<vmem>>, vector<16x896xbf16>
    %c160_104 = arith.constant 160 : index
    %c0_105 = arith.constant 0 : index
    %92 = vector.load %arg9[%c160_104, %c0_105] : memref<432x1152xbf16, #tpu.memory_space<vmem>>, vector<16x896xbf16>
    tpu.vector_store %arg9[%c160_104, %c0_105], %91 {strides = array<i32>} : memref<432x1152xbf16, #tpu.memory_space<vmem>>, vector<16x896xbf16>,
    %c0_106 = arith.constant 0 : index
    %c102 = arith.constant 102 : index
    %93 = vector.load %arg10[%c0_106, %c102] : memref<16x1152xbf16, #tpu.memory_space<vmem>>, vector<16x896xbf16>
    %c176_107 = arith.constant 176 : index
    %c0_108 = arith.constant 0 : index
    %94 = vector.load %arg9[%c176_107, %c0_108] : memref<432x1152xbf16, #tpu.memory_space<vmem>>, vector<16x896xbf16>
    tpu.vector_store %arg9[%c176_107, %c0_108], %93 {strides = array<i32>} : memref<432x1152xbf16, #tpu.memory_space<vmem>>, vector<16x896xbf16>,
    %c0_109 = arith.constant 0 : index
    %c110 = arith.constant 110 : index
    %95 = vector.load %arg10[%c0_109, %c110] : memref<16x1152xbf16, #tpu.memory_space<vmem>>, vector<16x896xbf16>
    %c192_110 = arith.constant 192 : index
    %c0_111 = arith.constant 0 : index
    %96 = vector.load %arg9[%c192_110, %c0_111] : memref<432x1152xbf16, #tpu.memory_space<vmem>>, vector<16x896xbf16>
    tpu.vector_store %arg9[%c192_110, %c0_111], %95 {strides = array<i32>} : memref<432x1152xbf16, #tpu.memory_space<vmem>>, vector<16x896xbf16>,
    %c0_112 = arith.constant 0 : index
    %c111 = arith.constant 111 : index
    %97 = vector.load %arg10[%c0_112, %c111] : memref<16x1152xbf16, #tpu.memory_space<vmem>>, vector<16x896xbf16>
    %c208_113 = arith.constant 208 : index
    %c0_114 = arith.constant 0 : index
    %98 = vector.load %arg9[%c208_113, %c0_114] : memref<432x1152xbf16, #tpu.memory_space<vmem>>, vector<16x896xbf16>
    tpu.vector_store %arg9[%c208_113, %c0_114], %97 {strides = array<i32>} : memref<432x1152xbf16, #tpu.memory_space<vmem>>, vector<16x896xbf16>,
    %c0_115 = arith.constant 0 : index
    %c112_116 = arith.constant 112 : index
    %99 = vector.load %arg10[%c0_115, %c112_116] : memref<16x1152xbf16, #tpu.memory_space<vmem>>, vector<16x896xbf16>
    %c224_117 = arith.constant 224 : index
    %c0_118 = arith.constant 0 : index
    %100 = vector.load %arg9[%c224_117, %c0_118] : memref<432x1152xbf16, #tpu.memory_space<vmem>>, vector<16x896xbf16>
    tpu.vector_store %arg9[%c224_117, %c0_118], %99 {strides = array<i32>} : memref<432x1152xbf16, #tpu.memory_space<vmem>>, vector<16x896xbf16>,
    %c0_119 = arith.constant 0 : index
    %c120 = arith.constant 120 : index
    %101 = vector.load %arg10[%c0_119, %c120] : memref<16x1152xbf16, #tpu.memory_space<vmem>>, vector<16x896xbf16>
    %c240_120 = arith.constant 240 : index
    %c0_121 = arith.constant 0 : index
    %102 = vector.load %arg9[%c240_120, %c0_121] : memref<432x1152xbf16, #tpu.memory_space<vmem>>, vector<16x896xbf16>
    tpu.vector_store %arg9[%c240_120, %c0_121], %101 {strides = array<i32>} : memref<432x1152xbf16, #tpu.memory_space<vmem>>, vector<16x896xbf16>,
    %c0_122 = arith.constant 0 : index
    %c121 = arith.constant 121 : index
    %103 = vector.load %arg10[%c0_122, %c121] : memref<16x1152xbf16, #tpu.memory_space<vmem>>, vector<16x896xbf16>
    %c256_123 = arith.constant 256 : index
    %c0_124 = arith.constant 0 : index
    %104 = vector.load %arg9[%c256_123, %c0_124] : memref<432x1152xbf16, #tpu.memory_space<vmem>>, vector<16x896xbf16>
    tpu.vector_store %arg9[%c256_123, %c0_124], %103 {strides = array<i32>} : memref<432x1152xbf16, #tpu.memory_space<vmem>>, vector<16x896xbf16>,
    %c0_125 = arith.constant 0 : index
    %c122 = arith.constant 122 : index
    %105 = vector.load %arg10[%c0_125, %c122] : memref<16x1152xbf16, #tpu.memory_space<vmem>>, vector<16x896xbf16>
    %c272_126 = arith.constant 272 : index
    %c0_127 = arith.constant 0 : index
    %106 = vector.load %arg9[%c272_126, %c0_127] : memref<432x1152xbf16, #tpu.memory_space<vmem>>, vector<16x896xbf16>
    tpu.vector_store %arg9[%c272_126, %c0_127], %105 {strides = array<i32>} : memref<432x1152xbf16, #tpu.memory_space<vmem>>, vector<16x896xbf16>,
    %c0_128 = arith.constant 0 : index
    %c200 = arith.constant 200 : index
    %107 = vector.load %arg10[%c0_128, %c200] : memref<16x1152xbf16, #tpu.memory_space<vmem>>, vector<16x896xbf16>
    %c288_129 = arith.constant 288 : index
    %c0_130 = arith.constant 0 : index
    %108 = vector.load %arg9[%c288_129, %c0_130] : memref<432x1152xbf16, #tpu.memory_space<vmem>>, vector<16x896xbf16>
    tpu.vector_store %arg9[%c288_129, %c0_130], %107 {strides = array<i32>} : memref<432x1152xbf16, #tpu.memory_space<vmem>>, vector<16x896xbf16>,
    %c0_131 = arith.constant 0 : index
    %c201 = arith.constant 201 : index
    %109 = vector.load %arg10[%c0_131, %c201] : memref<16x1152xbf16, #tpu.memory_space<vmem>>, vector<16x896xbf16>
    %c304_132 = arith.constant 304 : index
    %c0_133 = arith.constant 0 : index
    %110 = vector.load %arg9[%c304_132, %c0_133] : memref<432x1152xbf16, #tpu.memory_space<vmem>>, vector<16x896xbf16>
    tpu.vector_store %arg9[%c304_132, %c0_133], %109 {strides = array<i32>} : memref<432x1152xbf16, #tpu.memory_space<vmem>>, vector<16x896xbf16>,
    %c0_134 = arith.constant 0 : index
    %c202 = arith.constant 202 : index
    %111 = vector.load %arg10[%c0_134, %c202] : memref<16x1152xbf16, #tpu.memory_space<vmem>>, vector<16x896xbf16>
    %c320_135 = arith.constant 320 : index
    %c0_136 = arith.constant 0 : index
    %112 = vector.load %arg9[%c320_135, %c0_136] : memref<432x1152xbf16, #tpu.memory_space<vmem>>, vector<16x896xbf16>
    tpu.vector_store %arg9[%c320_135, %c0_136], %111 {strides = array<i32>} : memref<432x1152xbf16, #tpu.memory_space<vmem>>, vector<16x896xbf16>,
    %c0_137 = arith.constant 0 : index
    %c210 = arith.constant 210 : index
    %113 = vector.load %arg10[%c0_137, %c210] : memref<16x1152xbf16, #tpu.memory_space<vmem>>, vector<16x896xbf16>
    %c336_138 = arith.constant 336 : index
    %c0_139 = arith.constant 0 : index
    %114 = vector.load %arg9[%c336_138, %c0_139] : memref<432x1152xbf16, #tpu.memory_space<vmem>>, vector<16x896xbf16>
    tpu.vector_store %arg9[%c336_138, %c0_139], %113 {strides = array<i32>} : memref<432x1152xbf16, #tpu.memory_space<vmem>>, vector<16x896xbf16>,
    %c0_140 = arith.constant 0 : index
    %c211 = arith.constant 211 : index
    %115 = vector.load %arg10[%c0_140, %c211] : memref<16x1152xbf16, #tpu.memory_space<vmem>>, vector<16x896xbf16>
    %c352_141 = arith.constant 352 : index
    %c0_142 = arith.constant 0 : index
    %116 = vector.load %arg9[%c352_141, %c0_142] : memref<432x1152xbf16, #tpu.memory_space<vmem>>, vector<16x896xbf16>
    tpu.vector_store %arg9[%c352_141, %c0_142], %115 {strides = array<i32>} : memref<432x1152xbf16, #tpu.memory_space<vmem>>, vector<16x896xbf16>,
    %c0_143 = arith.constant 0 : index
    %c212 = arith.constant 212 : index
    %117 = vector.load %arg10[%c0_143, %c212] : memref<16x1152xbf16, #tpu.memory_space<vmem>>, vector<16x896xbf16>
    %c368_144 = arith.constant 368 : index
    %c0_145 = arith.constant 0 : index
    %118 = vector.load %arg9[%c368_144, %c0_145] : memref<432x1152xbf16, #tpu.memory_space<vmem>>, vector<16x896xbf16>
    tpu.vector_store %arg9[%c368_144, %c0_145], %117 {strides = array<i32>} : memref<432x1152xbf16, #tpu.memory_space<vmem>>, vector<16x896xbf16>,
    %c0_146 = arith.constant 0 : index
    %c220 = arith.constant 220 : index
    %119 = vector.load %arg10[%c0_146, %c220] : memref<16x1152xbf16, #tpu.memory_space<vmem>>, vector<16x896xbf16>
    %c384_147 = arith.constant 384 : index
    %c0_148 = arith.constant 0 : index
    %120 = vector.load %arg9[%c384_147, %c0_148] : memref<432x1152xbf16, #tpu.memory_space<vmem>>, vector<16x896xbf16>
    tpu.vector_store %arg9[%c384_147, %c0_148], %119 {strides = array<i32>} : memref<432x1152xbf16, #tpu.memory_space<vmem>>, vector<16x896xbf16>,
    %c0_149 = arith.constant 0 : index
    %c221 = arith.constant 221 : index
    %121 = vector.load %arg10[%c0_149, %c221] : memref<16x1152xbf16, #tpu.memory_space<vmem>>, vector<16x896xbf16>
    %c400_150 = arith.constant 400 : index
    %c0_151 = arith.constant 0 : index
    %122 = vector.load %arg9[%c400_150, %c0_151] : memref<432x1152xbf16, #tpu.memory_space<vmem>>, vector<16x896xbf16>
    tpu.vector_store %arg9[%c400_150, %c0_151], %121 {strides = array<i32>} : memref<432x1152xbf16, #tpu.memory_space<vmem>>, vector<16x896xbf16>,
    %c0_152 = arith.constant 0 : index
    %c222 = arith.constant 222 : index
    %123 = vector.load %arg10[%c0_152, %c222] : memref<16x1152xbf16, #tpu.memory_space<vmem>>, vector<16x896xbf16>
    %c416_153 = arith.constant 416 : index
    %c0_154 = arith.constant 0 : index
    %124 = vector.load %arg9[%c416_153, %c0_154] : memref<432x1152xbf16, #tpu.memory_space<vmem>>, vector<16x896xbf16>
    tpu.vector_store %arg9[%c416_153, %c0_154], %123 {strides = array<i32>} : memref<432x1152xbf16, #tpu.memory_space<vmem>>, vector<16x896xbf16>,
    %c0_155 = arith.constant 0 : index
    %c0_156 = arith.constant 0 : index
    %125 = vector.load %arg4[%c0_155, %c0_156] : memref<8x432xbf16, #tpu.memory_space<vmem>>, vector<8x432xbf16>
    %c0_157 = arith.constant 0 : index
    %c0_158 = arith.constant 0 : index
    %126 = vector.load %arg9[%c0_157, %c0_158] : memref<432x1152xbf16, #tpu.memory_space<vmem>>, vector<432x896xbf16>
    %cst_159 = arith.constant dense<0.000000e+00> : vector<8x896xf32>
    %127 = tpu.matmul %125, %126, %cst_159 {dimension_numbers = #tpu.dot_dimension_numbers<[1], [0], [0], [1], [0, 0, 1, 1], [], []>} : vector<8x432xbf16>, vector<432x896xbf16>, vector<8x896xf32> -> vector<8x896xf32>
    %c0_160 = arith.constant 0 : index
    %c0_161 = arith.constant 0 : index
    %128 = vector.load %arg5[%c0_160, %c0_161] : memref<8x1xf32, #tpu.memory_space<vmem>>, vector<8x1xf32>
    %129 = vector.broadcast %128 : vector<8x1xf32> to vector<8x896xf32>
    %130 = arith.addf %127, %129 : vector<8x896xf32>
    %c0_162 = arith.constant 0 : index
    %c0_163 = arith.constant 0 : index
    %c256_164 = arith.constant 256 : index
    %131 = vector.load %arg1[%c0_162, %c0_163, %c256_164] : memref<1x16x1408xf32, #tpu.memory_space<vmem>>, vector<1x8x896xf32>
    %132 = vector.shape_cast %131 : vector<1x8x896xf32> to vector<8x896xf32>
    %133 = arith.addf %130, %132 : vector<8x896xf32>
    %cst_165 = arith.constant 0.000000e+00 : f32
    %134 = vector.broadcast %cst_165 : f32 to vector<8x896xf32>
    %135 = arith.maximumf %133, %134 : vector<8x896xf32>
    %c0_166 = arith.constant 0 : index
    %c0_167 = arith.constant 0 : index
    %c0_168 = arith.constant 0 : index
    %136 = vector.load %arg7[%c0_166, %c0_167, %c0_168] : memref<1x8x896xf32, #tpu.memory_space<vmem>>, vector<1x8x896xf32>
    %137 = vector.shape_cast %136 : vector<1x8x896xf32> to vector<8x896xf32>
    %138 = vector.shape_cast %135 : vector<8x896xf32> to vector<1x8x896xf32>
    tpu.vector_store %arg7[%c0_166, %c0_167, %c0_168], %138 {strides = array<i32>} : memref<1x8x896xf32, #tpu.memory_space<vmem>>, vector<1x8x896xf32>,
    return
  }
  func.func @transform_0(%arg0: i32) -> (i32, i32, i32) {
    %c0_i32 = arith.constant 0 : i32
    %c0_i32_0 = arith.constant 0 : i32
    %c0_i32_1 = arith.constant 0 : i32
    return %arg0, %c0_i32, %c0_i32_0 : i32, i32, i32
  }
  func.func @transform_1(%arg0: i32) -> (i32, i32) {
    %c0_i32 = arith.constant 0 : i32
    %c0_i32_0 = arith.constant 0 : i32
    %c0_i32_1 = arith.constant 0 : i32
    return %c0_i32, %c0_i32_0 : i32, i32
  }
  func.func @transform_2(%arg0: i32) -> (i32, i32) {
    %c0_i32 = arith.constant 0 : i32
    %c0_i32_0 = arith.constant 0 : i32
    %c0_i32_1 = arith.constant 0 : i32
    return %c0_i32, %c0_i32_0 : i32, i32
  }
  func.func @transform_3(%arg0: i32) -> (i32, i32) {
    %c0_i32 = arith.constant 0 : i32
    %c0_i32_0 = arith.constant 0 : i32
    %c0_i32_1 = arith.constant 0 : i32
    return %c0_i32, %c0_i32_0 : i32, i32
  }
  func.func @transform_4(%arg0: i32) -> (i32, i32) {
    %c0_i32 = arith.constant 0 : i32
    %c0_i32_0 = arith.constant 0 : i32
    %c0_i32_1 = arith.constant 0 : i32
    return %c0_i32, %c0_i32_0 : i32, i32
  }
  func.func @transform_5(%arg0: i32) -> (i32, i32) {
    %c0_i32 = arith.constant 0 : i32
    %c0_i32_0 = arith.constant 0 : i32
    %c0_i32_1 = arith.constant 0 : i32
    return %c0_i32, %c0_i32_0 : i32, i32
  }
  func.func @transform_6(%arg0: i32) -> (i32, i32, i32) {
    %c0_i32 = arith.constant 0 : i32
    %c0_i32_0 = arith.constant 0 : i32
    %c0_i32_1 = arith.constant 0 : i32
    return %arg0, %c0_i32, %c0_i32_0 : i32, i32, i32
  }
}

</mosaic_0001>

<llo_original>
// kernel: tpu_custom_call.1
$region0: #{tpu_custom_call.1}
  #allocation0 [shape = 'u32[]', space=smem, size = 0x4, offset = 0x4, fixed_abs, tag = 'smem constant byte address 0x4 - core index']
  #allocation1 [shape = 'u32[144,128]{1,0:T(1,128)}', space=vmem, size = 0x12000, scoped, tag = 'internal scratch']
  #allocation2 [shape = 'bf16[16,1408]{1,0:T(16,128)(2,1)}', space=vmem, size = 0xb000, scoped, tag = 'scratch operand']
  #allocation3 [shape = 'bf16[432,1152]{1,0:T(16,128)(2,1)}', space=vmem, size = 0xf3000, scoped, tag = 'scratch operand']
  #allocation4 [shape = 'bf16[16,1152]{1,0:T(16,128)(2,1)}', space=vmem, size = 0x9000, scoped, tag = 'scratch operand']
  %s0 = inlined_call_operand.hbm [shape: f32[2,16,1408], index: 0, kind: input, shape index: {}]
  %s1 = inlined_call_operand.hbm [shape: bf16[16,432], index: 1, kind: input, shape index: {}]
  %s2 = inlined_call_operand.vmem [shape: f32[16,1], index: 2, kind: input, shape index: {}]
  %s3 = inlined_call_operand.vmem [shape: bf16[8,432], index: 3, kind: input, shape index: {}]
  %s4 = inlined_call_operand.vmem [shape: f32[8,1], index: 4, kind: input, shape index: {}]
  %s5 = inlined_call_operand.vmem [shape: f32[1,1152], index: 5, kind: input, shape index: {}]
  %s6 = inlined_call_operand.hbm [shape: f32[2,8,896], index: 6, kind: output, shape index: {}]
  %s7 = sld [smem:[#allocation0]]
  $region65: #{tpu_custom_call.1} parent=0
    _
  %s9 = ssub.s32 1, %s7
  %s10 = scalar_select 0, %s9, %s7
  $region1: #{tpu_custom_call.1} parent=0
    #allocation5 [shape = 'u8[180224]{0}', space=vmem, size = 0x2c000, scoped, tag = 'input window, operand 0']
    #allocation6 [shape = 's32[2]{0}', space=sflag, size = 0x8, scoped, tag = 'scoped memory for tpu_custom_call.1']
    #allocation7 [shape = 's32[2]{0}', space=sflag, size = 0x8, scoped, tag = 'scoped memory for tpu_custom_call.1']
    #allocation8 [shape = 'u8[16384]{0}', space=vmem, size = 0x4000, scoped, tag = 'input window, operand 1, single buffered']
    #allocation9 [shape = 's32[1]{0}', space=sflag, size = 0x4, scoped, tag = 'scoped memory for tpu_custom_call.1']
    #allocation10 [shape = 'u8[57344]{0}', space=vmem, size = 0xe000, scoped, tag = 'output window, operand 0']
    %11 = vsyncpa [#allocation6], 0
    %s12 = scalar_lea.sflag [#allocation6], 1
    %13 = vsyncpa %s12, 0
    %14 = vsyncpa [#allocation9], 0
    %15 = vsyncpa [#allocation7], 0
    %s16 = scalar_lea.sflag [#allocation7], 1
    %17 = vsyncpa %s16, 0
    loop: start=0, step=1, limit=4
    $region2: #{tpu_custom_call.1} parent=1 // loop_pre_header
      _
    $region3: #{tpu_custom_call.1} parent=1 // loop_header
      %s19 = sphi 0, %s23
      %p20 = scmp.ge.s32.totalorder %s19, 4
      %s29 = sphi 0, %s31
      %s32 = sphi 0, %s29
      %s33 = sphi 0, %s32
      %s49 = sphi 0, %s33
      %s53 = sphi 0, %s53
      %s55 = sphi 0, %s53
      %s56 = sphi 0, %s55
      %s70 = sphi 0, %s56
      %s74 = sphi 0, %s74
      %s76 = sphi 0, %s74
      %s77 = sphi 0, %s76
      %s91 = sphi 0, %s77
      %s95 = sphi 0, %s95
      %s97 = sphi 0, %s95
      %s98 = sphi 0, %s97
      %s112 = sphi 0, %s98
      %s116 = sphi 0, %s116
      %s118 = sphi 0, %s116
      %s119 = sphi 0, %s118
      %s133 = sphi 0, %s119
      %s137 = sphi 0, %s137
      %s139 = sphi 0, %s137
      %s140 = sphi 0, %s139
      %s154 = sphi 0, %s140
      %s160 = sphi 0, %s162
      %s163 = sphi 0, %s160
      %s164 = sphi 0, %s163
      %s180 = sphi 0, %s164
    $region4: #{tpu_custom_call.1} parent=1 // loop_header_branch
      %22 = sbr.rel (%p20) target = $region8
    $region5: #{tpu_custom_call.1} parent=1 // loop_body
      %s24 = ssub.s32 %s19, 1
      %s25 = ssub.s32 %s19, 2
      %s26 = sadd.s32 %s19, 1
      %s27 = ssub.s32 %s19, %s26
      %p28 = scmp.eq.s32.totalorder %s27, 0
      %s30 = sadd.s32 %s29, 1
      %s31 = scalar_select %p28, %s29, %s30
      %p34 = pneg %p28
      %p35 = scmp.eq.s32.totalorder %s19, 1
      %p36 = por %p34, %p35
      %p37 = scmp.ne.s32.totalorder %s29, %s32
      %p38 = scmp.eq.s32.totalorder %s19, 0
      %p39 = por %p37, %p38
      %p40 = scmp.ne.s32.totalorder %s29, %s32
      %p41 = scmp.eq.s32.totalorder %s24, 1
      %p42 = por %p40, %p41
      %p43 = scmp.ne.s32.totalorder %s32, %s33
      %p44 = scmp.eq.s32.totalorder %s24, 0
      %p45 = por %p43, %p44
      %p46 = scmp.ne.s32.totalorder %s32, %s33
      %p47 = scmp.eq.s32.totalorder %s25, 1
      %p48 = por %p46, %p47
      %p50 = scmp.ne.s32.totalorder %s33, %s49
      %p51 = scmp.eq.s32.totalorder %s25, 0
      %p52 = por %p50, %p51
      %s54 = sadd.s32 %s53, 1
      %p57 = scmp.eq.s32.totalorder %s19, 1
      %p58 = scmp.ne.s32.totalorder %s53, %s55
      %p59 = scmp.eq.s32.totalorder %s19, 0
      %p60 = por %p58, %p59
      %p61 = scmp.ne.s32.totalorder %s53, %s55
      %p62 = scmp.eq.s32.totalorder %s24, 1
      %p63 = por %p61, %p62
      %p64 = scmp.ne.s32.totalorder %s55, %s56
      %p65 = scmp.eq.s32.totalorder %s24, 0
      %p66 = por %p64, %p65
      %p67 = scmp.ne.s32.totalorder %s55, %s56
      %p68 = scmp.eq.s32.totalorder %s25, 1
      %p69 = por %p67, %p68
      %p71 = scmp.ne.s32.totalorder %s56, %s70
      %p72 = scmp.eq.s32.totalorder %s25, 0
      %p73 = por %p71, %p72
      %s75 = sadd.s32 %s74, 1
      %p78 = scmp.eq.s32.totalorder %s19, 1
      %p79 = scmp.ne.s32.totalorder %s74, %s76
      %p80 = scmp.eq.s32.totalorder %s19, 0
      %p81 = por %p79, %p80
      %p82 = scmp.ne.s32.totalorder %s74, %s76
      %p83 = scmp.eq.s32.totalorder %s24, 1
      %p84 = por %p82, %p83
      %p85 = scmp.ne.s32.totalorder %s76, %s77
      %p86 = scmp.eq.s32.totalorder %s24, 0
      %p87 = por %p85, %p86
      %p88 = scmp.ne.s32.totalorder %s76, %s77
      %p89 = scmp.eq.s32.totalorder %s25, 1
      %p90 = por %p88, %p89
      %p92 = scmp.ne.s32.totalorder %s77, %s91
      %p93 = scmp.eq.s32.totalorder %s25, 0
      %p94 = por %p92, %p93
      %s96 = sadd.s32 %s95, 1
      %p99 = scmp.eq.s32.totalorder %s19, 1
      %p100 = scmp.ne.s32.totalorder %s95, %s97
      %p101 = scmp.eq.s32.totalorder %s19, 0
      %p102 = por %p100, %p101
      %p103 = scmp.ne.s32.totalorder %s95, %s97
      %p104 = scmp.eq.s32.totalorder %s24, 1
      %p105 = por %p103, %p104
      %p106 = scmp.ne.s32.totalorder %s97, %s98
      %p107 = scmp.eq.s32.totalorder %s24, 0
      %p108 = por %p106, %p107
      %p109 = scmp.ne.s32.totalorder %s97, %s98
      %p110 = scmp.eq.s32.totalorder %s25, 1
      %p111 = por %p109, %p110
      %p113 = scmp.ne.s32.totalorder %s98, %s112
      %p114 = scmp.eq.s32.totalorder %s25, 0
      %p115 = por %p113, %p114
      %s117 = sadd.s32 %s116, 1
      %p120 = scmp.eq.s32.totalorder %s19, 1
      %p121 = scmp.ne.s32.totalorder %s116, %s118
      %p122 = scmp.eq.s32.totalorder %s19, 0
      %p123 = por %p121, %p122
      %p124 = scmp.ne.s32.totalorder %s116, %s118
      %p125 = scmp.eq.s32.totalorder %s24, 1
      %p126 = por %p124, %p125
      %p127 = scmp.ne.s32.totalorder %s118, %s119
      %p128 = scmp.eq.s32.totalorder %s24, 0
      %p129 = por %p127, %p128
      %p130 = scmp.ne.s32.totalorder %s118, %s119
      %p131 = scmp.eq.s32.totalorder %s25, 1
      %p132 = por %p130, %p131
      %p134 = scmp.ne.s32.totalorder %s119, %s133
      %p135 = scmp.eq.s32.totalorder %s25, 0
      %p136 = por %p134, %p135
      %s138 = sadd.s32 %s137, 1
      %p141 = scmp.eq.s32.totalorder %s19, 1
      %p142 = scmp.ne.s32.totalorder %s137, %s139
      %p143 = scmp.eq.s32.totalorder %s19, 0
      %p144 = por %p142, %p143
      %p145 = scmp.ne.s32.totalorder %s137, %s139
      %p146 = scmp.eq.s32.totalorder %s24, 1
      %p147 = por %p145, %p146
      %p148 = scmp.ne.s32.totalorder %s139, %s140
      %p149 = scmp.eq.s32.totalorder %s24, 0
      %p150 = por %p148, %p149
      %p151 = scmp.ne.s32.totalorder %s139, %s140
      %p152 = scmp.eq.s32.totalorder %s25, 1
      %p153 = por %p151, %p152
      %p155 = scmp.ne.s32.totalorder %s140, %s154
      %p156 = scmp.eq.s32.totalorder %s25, 0
      %p157 = por %p155, %p156
      %s158 = ssub.s32 %s19, %s26
      %p159 = scmp.eq.s32.totalorder %s158, 0
      %s161 = sadd.s32 %s160, 1
      %s162 = scalar_select %p159, %s160, %s161
      %p165 = pneg %p159
      %p166 = scmp.eq.s32.totalorder %s19, 1
      %p167 = por %p165, %p166
      %p168 = scmp.ne.s32.totalorder %s160, %s163
      %p169 = scmp.eq.s32.totalorder %s19, 0
      %p170 = por %p168, %p169
      %p171 = scmp.ne.s32.totalorder %s160, %s163
      %p172 = scmp.eq.s32.totalorder %s24, 1
      %p173 = por %p171, %p172
      %p174 = scmp.ne.s32.totalorder %s163, %s164
      %p175 = scmp.eq.s32.totalorder %s24, 0
      %p176 = por %p174, %p175
      %p177 = scmp.ne.s32.totalorder %s163, %s164
      %p178 = scmp.eq.s32.totalorder %s25, 1
      %p179 = por %p177, %p178
      %p181 = scmp.ne.s32.totalorder %s164, %s180
      %p182 = scmp.eq.s32.totalorder %s25, 0
      %p183 = por %p181, %p182
      %p184 = scmp.le.s32.totalorder 1, %s19
      %p185 = scmp.lt.s32.totalorder %s19, 3
      %p186 = pnand %p184, %p185
      %p187 = pneg %p186
      // Predicated region
      $region9: #{tpu_custom_call.1} parent=5 // pred_check
        _
      $region10: #{tpu_custom_call.1} parent=5 // pred_check_branch
        %189 = sbr.rel (%p186) target = $region12
      $region11: #{tpu_custom_call.1} parent=5 // pred_region
        %s190 = ssub.s32 %s19, 1
        // Predicated region
        $region13: #{tpu_custom_call.1} parent=11 // pred_check
          %p191 = pneg %p66
        $region14: #{tpu_custom_call.1} parent=11 // pred_check_branch
          %193 = sbr.rel (%p191) target = $region16
        $region15: #{tpu_custom_call.1} parent=11 // pred_region
          %s195 = ssub.s32 512, 512
          %196 = vsyncadd [#allocation9], %s195
          %s197 = sshll.u32 [#allocation8], 4
          %s198 = int_to_ptr.vmem [resolvable:$true] %s197
          %203 = dma.hbm_to_vmem [thread:$0]  %s1, 512, %s198, [#allocation9], 256, 256, 16
        $region16: #{tpu_custom_call.1} parent=11 // pred_fallthru
          _
        // Predicated region
        $region17: #{tpu_custom_call.1} parent=11 // pred_check
          %p204 = pneg %p87
        $region18: #{tpu_custom_call.1} parent=11 // pred_check_branch
          %206 = sbr.rel (%p204) target = $region20
        $region19: #{tpu_custom_call.1} parent=11 // pred_region
          _
        $region20: #{tpu_custom_call.1} parent=11 // pred_fallthru
          _
        // Predicated region
        $region21: #{tpu_custom_call.1} parent=11 // pred_check
          %p207 = pneg %p108
        $region22: #{tpu_custom_call.1} parent=11 // pred_check_branch
          %209 = sbr.rel (%p207) target = $region24
        $region23: #{tpu_custom_call.1} parent=11 // pred_region
          _
        $region24: #{tpu_custom_call.1} parent=11 // pred_fallthru
          _
        // Predicated region
        $region25: #{tpu_custom_call.1} parent=11 // pred_check
          %p210 = pneg %p129
        $region26: #{tpu_custom_call.1} parent=11 // pred_check_branch
          %212 = sbr.rel (%p210) target = $region28
        $region27: #{tpu_custom_call.1} parent=11 // pred_region
          _
        $region28: #{tpu_custom_call.1} parent=11 // pred_fallthru
          _
        // Predicated region
        $region29: #{tpu_custom_call.1} parent=11 // pred_check
          %p213 = pneg %p150
        $region30: #{tpu_custom_call.1} parent=11 // pred_check_branch
          %215 = sbr.rel (%p213) target = $region32
        $region31: #{tpu_custom_call.1} parent=11 // pred_region
          _
        $region32: #{tpu_custom_call.1} parent=11 // pred_fallthru
          _
      $region12: #{tpu_custom_call.1} parent=5 // pred_fallthru
        _
      %p216 = scmp.lt.s32.totalorder %s19, 2
      // Predicated region
      $region33: #{tpu_custom_call.1} parent=5 // pred_check
        %p217 = pneg %p216
      $region34: #{tpu_custom_call.1} parent=5 // pred_check_branch
        %219 = sbr.rel (%p217) target = $region36
      $region35: #{tpu_custom_call.1} parent=5 // pred_region
        // Predicated region
        $region37: #{tpu_custom_call.1} parent=35 // pred_check
          %p220 = pneg %p39
        $region38: #{tpu_custom_call.1} parent=35 // pred_check_branch
          %222 = sbr.rel (%p220) target = $region40
        $region39: #{tpu_custom_call.1} parent=35 // pred_region
          %s223 = sand.u32 %s29, 1
          %s224 = scalar_lea.sflag [#allocation6], %s223
          %s225 = sand.u32 %s29, 1
          %s226 = smul.addr %s225, 176
          %s227 = scalar_lea.vmem [#allocation5], %s226
          %s229 = ssub.s32 2816, 2816
          %230 = vsyncadd %s224, %s229
          %s231 = smul.addr %s19, 22
          %s232 = smul.addr %s231, 128
          %s233 = scalar_lea.hbm %s0, %s232
          %s234 = sshll.u32 %s227, 4
          %s235 = int_to_ptr.vmem [resolvable:$true] %s234
          %240 = dma.hbm_to_vmem [thread:$0]  %s233, 2816, %s235, %s224, 1408, 1408, 88
        $region40: #{tpu_custom_call.1} parent=35 // pred_fallthru
          _
      $region36: #{tpu_custom_call.1} parent=5 // pred_fallthru
        _
      %p241 = scmp.le.s32.totalorder 1, %s19
      %p242 = scmp.lt.s32.totalorder %s19, 3
      %p243 = pnand %p241, %p242
      %p244 = pneg %p243
      // Predicated region
      $region41: #{tpu_custom_call.1} parent=5 // pred_check
        _
      $region42: #{tpu_custom_call.1} parent=5 // pred_check_branch
        %246 = sbr.rel (%p243) target = $region44
      $region43: #{tpu_custom_call.1} parent=5 // pred_region
        %s247 = ssub.s32 %s19, 1
        %s248 = sand.u32 %s32, 1
        %s249 = scalar_lea.sflag [#allocation6], %s248
        %s250 = sand.u32 %s32, 1
        %s251 = smul.addr %s250, 176
        %s252 = scalar_lea.vmem [#allocation5], %s251
        // Predicated region
        $region45: #{tpu_custom_call.1} parent=43 // pred_check
          %p253 = pneg %p45
        $region46: #{tpu_custom_call.1} parent=43 // pred_check_branch
          %255 = sbr.rel (%p253) target = $region48
        $region47: #{tpu_custom_call.1} parent=43 // pred_region
          %256 = dma.done %s249, 2816
        $region48: #{tpu_custom_call.1} parent=43 // pred_fallthru
          _
        // Predicated region
        $region49: #{tpu_custom_call.1} parent=43 // pred_check
          %p257 = pneg %p66
        $region50: #{tpu_custom_call.1} parent=43 // pred_check_branch
          %259 = sbr.rel (%p257) target = $region52
        $region51: #{tpu_custom_call.1} parent=43 // pred_region
          %260 = dma.done [#allocation9], 512
        $region52: #{tpu_custom_call.1} parent=43 // pred_fallthru
          _
        %s261 = sand.u32 %s32, 1
        %s262 = scalar_lea.sflag [#allocation6], %s261
        %s263 = sand.u32 %s32, 1
        %s264 = smul.addr %s263, 176
        %s265 = scalar_lea.vmem [#allocation5], %s264
        %p266 = pneg %p45
        %p267 = pneg %p42
        %p268 = pneg %p66
        %p269 = pneg %p63
        %p270 = pneg %p87
        %p271 = pneg %p84
        %p272 = pneg %p108
        %p273 = pneg %p105
        %p274 = pneg %p129
        %p275 = pneg %p126
        %p276 = pneg %p150
        %p277 = pneg %p147
        %p278 = pneg %p176
        %p279 = pneg %p173
        %s280 = sand.u32 %s163, 1
        %s281 = scalar_lea.sflag [#allocation7], %s280
        %s282 = sand.u32 %s163, 1
        %s283 = smul.addr %s282, 56
        %s284 = scalar_lea.vmem [#allocation10], %s283
        %v286 = vld [vmem:[%s252] sm:$0xff]
        %v287 = vld [vmem:[%s252 + $0x8] sm:$0xff]
        %v288 = vld [vmem:[%s252 + $0x10] sm:$0xff]
        %v289 = vld [vmem:[%s252 + $0x18] sm:$0xff]
        %v290 = vld [vmem:[%s252 + $0x20] sm:$0xff]
        %v291 = vld [vmem:[%s252 + $0x28] sm:$0xff]
        %v292 = vld [vmem:[%s252 + $0x30] sm:$0xff]
        %v293 = vld [vmem:[%s252 + $0x38] sm:$0xff]
        %v294 = vld [vmem:[%s252 + $0x40] sm:$0xff]
        %v295 = vld [vmem:[%s252 + $0x48] sm:$0xff]
        %v296 = vld [vmem:[%s252 + $0x50] sm:$0xff]
        %v297 = vld [vmem:[%s252 + $0x58] sm:$0xff]
        %v298 = vld [vmem:[%s252 + $0x60] sm:$0xff]
        %v299 = vld [vmem:[%s252 + $0x68] sm:$0xff]
        %v300 = vld [vmem:[%s252 + $0x70] sm:$0xff]
        %v301 = vld [vmem:[%s252 + $0x78] sm:$0xff]
        %v302 = vld [vmem:[%s252 + $0x80] sm:$0xff]
        %v303 = vld [vmem:[%s252 + $0x88] sm:$0xff]
        %v304 = vld [vmem:[%s252 + $0x90] sm:$0xff]
        %v305 = vld [vmem:[%s252 + $0x98] sm:$0xff]
        %v306 = vld [vmem:[%s252 + $0xa0] sm:$0xff]
        %v307 = vld [vmem:[%s252 + $0xa8] sm:$0xff]
        %v308 = vpack.c.bf16 %v297, %v286
        %v309 = vpack.c.bf16 %v298, %v287
        %v310 = vpack.c.bf16 %v299, %v288
        %v311 = vpack.c.bf16 %v300, %v289
        %v312 = vpack.c.bf16 %v301, %v290
        %v313 = vpack.c.bf16 %v302, %v291
        %v314 = vpack.c.bf16 %v303, %v292
        %v315 = vpack.c.bf16 %v304, %v293
        %v316 = vpack.c.bf16 %v305, %v294
        %v317 = vpack.c.bf16 %v306, %v295
        %v318 = vpack.c.bf16 %v307, %v296
        %319 = vst [vmem:[#allocation2] sm:$0xff] %v308
        %320 = vst [vmem:[#allocation2 + $0x8] sm:$0xff] %v309
        %321 = vst [vmem:[#allocation2 + $0x10] sm:$0xff] %v310
        %322 = vst [vmem:[#allocation2 + $0x18] sm:$0xff] %v311
        %323 = vst [vmem:[#allocation2 + $0x20] sm:$0xff] %v312
        %324 = vst [vmem:[#allocation2 + $0x28] sm:$0xff] %v313
        %325 = vst [vmem:[#allocation2 + $0x30] sm:$0xff] %v314
        %326 = vst [vmem:[#allocation2 + $0x38] sm:$0xff] %v315
        %327 = vst [vmem:[#allocation2 + $0x40] sm:$0xff] %v316
        %328 = vst [vmem:[#allocation2 + $0x48] sm:$0xff] %v317
        %329 = vst [vmem:[#allocation2 + $0x50] sm:$0xff] %v318
        %v330 = vld [vmem:[#allocation2] sm:$0xff]
        %v331 = vld [vmem:[#allocation2 + $0x8] sm:$0xff]
        %v332 = vld [vmem:[#allocation2 + $0x10] sm:$0xff]
        %v333 = vld [vmem:[#allocation2 + $0x18] sm:$0xff]
        %v334 = vld [vmem:[#allocation2 + $0x20] sm:$0xff]
        %v335 = vld [vmem:[#allocation2 + $0x28] sm:$0xff]
        %v336 = vld [vmem:[#allocation2 + $0x30] sm:$0xff]
        %v337 = vld [vmem:[#allocation2 + $0x38] sm:$0xff]
        %v338 = vld [vmem:[#allocation2 + $0x40] sm:$0xff]
        %v339 = vld [vmem:[#allocation2 + $0x48] sm:$0xff]
        %350 = vrot.lane.b32.xlu0 %v330, 94
        %v351 = vpop.permute.xlu0 %350
        %352 = vrot.lane.b32.xlu0 %v331, 94
        %v353 = vpop.permute.xlu0 %352
        %354 = vrot.lane.b32.xlu0 %v332, 94
        %v355 = vpop.permute.xlu0 %354
        %356 = vrot.lane.b32.xlu0 %v333, 94
        %v357 = vpop.permute.xlu0 %356
        %358 = vrot.lane.b32.xlu0 %v334, 94
        %v359 = vpop.permute.xlu0 %358
        %360 = vrot.lane.b32.xlu0 %v335, 94
        %v361 = vpop.permute.xlu0 %360
        %362 = vrot.lane.b32.xlu0 %v336, 94
        %v363 = vpop.permute.xlu0 %362
        %364 = vrot.lane.b32.xlu0 %v337, 94
        %v365 = vpop.permute.xlu0 %364
        %366 = vrot.lane.b32.xlu0 %v338, 94
        %v367 = vpop.permute.xlu0 %366
        %368 = vrot.lane.b32.xlu0 %v339, 94
        %v369 = vpop.permute.xlu0 %368
        %vm370 = vcmask 769024
        %v371 = vsel %vm370, %v351, %v353
        %v372 = vsel %vm370, %v353, %v355
        %v373 = vsel %vm370, %v355, %v357
        %v374 = vsel %vm370, %v357, %v359
        %v375 = vsel %vm370, %v359, %v361
        %v376 = vsel %vm370, %v361, %v363
        %v377 = vsel %vm370, %v363, %v365
        %v378 = vsel %vm370, %v365, %v367
        %v379 = vsel %vm370, %v367, %v369
        %389 = vst [vmem:[#allocation3] sm:$0xff] %v371
        %390 = vst [vmem:[#allocation3 + $0x8] sm:$0xff] %v372
        %391 = vst [vmem:[#allocation3 + $0x10] sm:$0xff] %v373
        %392 = vst [vmem:[#allocation3 + $0x18] sm:$0xff] %v374
        %393 = vst [vmem:[#allocation3 + $0x20] sm:$0xff] %v375
        %394 = vst [vmem:[#allocation3 + $0x28] sm:$0xff] %v376
        %395 = vst [vmem:[#allocation3 + $0x30] sm:$0xff] %v377
        %396 = vst [vmem:[#allocation3 + $0x38] sm:$0xff] %v378
        %397 = vst [vmem:[#allocation3 + $0x40] sm:$0xff] %v379
        %v398 = vld [vmem:[#allocation2] sm:$0xff]
        %v399 = vld [vmem:[#allocation2 + $0x8] sm:$0xff]
        %v400 = vld [vmem:[#allocation2 + $0x10] sm:$0xff]
        %v401 = vld [vmem:[#allocation2 + $0x18] sm:$0xff]
        %v402 = vld [vmem:[#allocation2 + $0x20] sm:$0xff]
        %v403 = vld [vmem:[#allocation2 + $0x28] sm:$0xff]
        %v404 = vld [vmem:[#allocation2 + $0x30] sm:$0xff]
        %v405 = vld [vmem:[#allocation2 + $0x38] sm:$0xff]
        %v406 = vld [vmem:[#allocation2 + $0x40] sm:$0xff]
        %v407 = vld [vmem:[#allocation2 + $0x48] sm:$0xff]
        %418 = vrot.lane.b32.xlu0 %v398, 93
        %v419 = vpop.permute.xlu0 %418
        %420 = vrot.lane.b32.xlu0 %v399, 93
        %v421 = vpop.permute.xlu0 %420
        %422 = vrot.lane.b32.xlu0 %v400, 93
        %v423 = vpop.permute.xlu0 %422
        %424 = vrot.lane.b32.xlu0 %v401, 93
        %v425 = vpop.permute.xlu0 %424
        %426 = vrot.lane.b32.xlu0 %v402, 93
        %v427 = vpop.permute.xlu0 %426
        %428 = vrot.lane.b32.xlu0 %v403, 93
        %v429 = vpop.permute.xlu0 %428
        %430 = vrot.lane.b32.xlu0 %v404, 93
        %v431 = vpop.permute.xlu0 %430
        %432 = vrot.lane.b32.xlu0 %v405, 93
        %v433 = vpop.permute.xlu0 %432
        %434 = vrot.lane.b32.xlu0 %v406, 93
        %v435 = vpop.permute.xlu0 %434
        %436 = vrot.lane.b32.xlu0 %v407, 93
        %v437 = vpop.permute.xlu0 %436
        %vm438 = vcmask 760832
        %v439 = vsel %vm438, %v419, %v421
        %v440 = vsel %vm438, %v421, %v423
        %v441 = vsel %vm438, %v423, %v425
        %v442 = vsel %vm438, %v425, %v427
        %v443 = vsel %vm438, %v427, %v429
        %v444 = vsel %vm438, %v429, %v431
        %v445 = vsel %vm438, %v431, %v433
        %v446 = vsel %vm438, %v433, %v435
        %v447 = vsel %vm438, %v435, %v437
        %457 = vst [vmem:[#allocation3 + $0x48] sm:$0xff] %v439
        %458 = vst [vmem:[#allocation3 + $0x50] sm:$0xff] %v440
        %459 = vst [vmem:[#allocation3 + $0x58] sm:$0xff] %v441
        %460 = vst [vmem:[#allocation3 + $0x60] sm:$0xff] %v442
        %461 = vst [vmem:[#allocation3 + $0x68] sm:$0xff] %v443
        %462 = vst [vmem:[#allocation3 + $0x70] sm:$0xff] %v444
        %463 = vst [vmem:[#allocation3 + $0x78] sm:$0xff] %v445
        %464 = vst [vmem:[#allocation3 + $0x80] sm:$0xff] %v446
        %465 = vst [vmem:[#allocation3 + $0x88] sm:$0xff] %v447
        %v466 = vld [vmem:[#allocation2] sm:$0xff]
        %v467 = vld [vmem:[#allocation2 + $0x8] sm:$0xff]
        %v468 = vld [vmem:[#allocation2 + $0x10] sm:$0xff]
        %v469 = vld [vmem:[#allocation2 + $0x18] sm:$0xff]
        %v470 = vld [vmem:[#allocation2 + $0x20] sm:$0xff]
        %v471 = vld [vmem:[#allocation2 + $0x28] sm:$0xff]
        %v472 = vld [vmem:[#allocation2 + $0x30] sm:$0xff]
        %v473 = vld [vmem:[#allocation2 + $0x38] sm:$0xff]
        %v474 = vld [vmem:[#allocation2 + $0x40] sm:$0xff]
        %v475 = vld [vmem:[#allocation2 + $0x48] sm:$0xff]
        %486 = vrot.lane.b32.xlu0 %v466, 92
        %v487 = vpop.permute.xlu0 %486
        %488 = vrot.lane.b32.xlu0 %v467, 92
        %v489 = vpop.permute.xlu0 %488
        %490 = vrot.lane.b32.xlu0 %v468, 92
        %v491 = vpop.permute.xlu0 %490
        %492 = vrot.lane.b32.xlu0 %v469, 92
        %v493 = vpop.permute.xlu0 %492
        %494 = vrot.lane.b32.xlu0 %v470, 92
        %v495 = vpop.permute.xlu0 %494
        %496 = vrot.lane.b32.xlu0 %v471, 92
        %v497 = vpop.permute.xlu0 %496
        %498 = vrot.lane.b32.xlu0 %v472, 92
        %v499 = vpop.permute.xlu0 %498
        %500 = vrot.lane.b32.xlu0 %v473, 92
        %v501 = vpop.permute.xlu0 %500
        %502 = vrot.lane.b32.xlu0 %v474, 92
        %v503 = vpop.permute.xlu0 %502
        %504 = vrot.lane.b32.xlu0 %v475, 92
        %v505 = vpop.permute.xlu0 %504
        %vm506 = vcmask 752640
        %v507 = vsel %vm506, %v487, %v489
        %v508 = vsel %vm506, %v489, %v491
        %v509 = vsel %vm506, %v491, %v493
        %v510 = vsel %vm506, %v493, %v495
        %v511 = vsel %vm506, %v495, %v497
        %v512 = vsel %vm506, %v497, %v499
        %v513 = vsel %vm506, %v499, %v501
        %v514 = vsel %vm506, %v501, %v503
        %v515 = vsel %vm506, %v503, %v505
        %525 = vst [vmem:[#allocation3 + $0x90] sm:$0xff] %v507
        %526 = vst [vmem:[#allocation3 + $0x98] sm:$0xff] %v508
        %527 = vst [vmem:[#allocation3 + $0xa0] sm:$0xff] %v509
        %528 = vst [vmem:[#allocation3 + $0xa8] sm:$0xff] %v510
        %529 = vst [vmem:[#allocation3 + $0xb0] sm:$0xff] %v511
        %530 = vst [vmem:[#allocation3 + $0xb8] sm:$0xff] %v512
        %531 = vst [vmem:[#allocation3 + $0xc0] sm:$0xff] %v513
        %532 = vst [vmem:[#allocation3 + $0xc8] sm:$0xff] %v514
        %533 = vst [vmem:[#allocation3 + $0xd0] sm:$0xff] %v515
        %v534 = vld [vmem:[#allocation2] sm:$0xff]
        %v535 = vld [vmem:[#allocation2 + $0x8] sm:$0xff]
        %v536 = vld [vmem:[#allocation2 + $0x10] sm:$0xff]
        %v537 = vld [vmem:[#allocation2 + $0x18] sm:$0xff]
        %v538 = vld [vmem:[#allocation2 + $0x20] sm:$0xff]
        %v539 = vld [vmem:[#allocation2 + $0x28] sm:$0xff]
        %v540 = vld [vmem:[#allocation2 + $0x30] sm:$0xff]
        %v541 = vld [vmem:[#allocation2 + $0x38] sm:$0xff]
        %v542 = vld [vmem:[#allocation2 + $0x40] sm:$0xff]
        %v543 = vld [vmem:[#allocation2 + $0x48] sm:$0xff]
        %554 = vrot.lane.b32.xlu0 %v534, 84
        %v555 = vpop.permute.xlu0 %554
        %556 = vrot.lane.b32.xlu0 %v535, 84
        %v557 = vpop.permute.xlu0 %556
        %558 = vrot.lane.b32.xlu0 %v536, 84
        %v559 = vpop.permute.xlu0 %558
        %560 = vrot.lane.b32.xlu0 %v537, 84
        %v561 = vpop.permute.xlu0 %560
        %562 = vrot.lane.b32.xlu0 %v538, 84
        %v563 = vpop.permute.xlu0 %562
        %564 = vrot.lane.b32.xlu0 %v539, 84
        %v565 = vpop.permute.xlu0 %564
        %566 = vrot.lane.b32.xlu0 %v540, 84
        %v567 = vpop.permute.xlu0 %566
        %568 = vrot.lane.b32.xlu0 %v541, 84
        %v569 = vpop.permute.xlu0 %568
        %570 = vrot.lane.b32.xlu0 %v542, 84
        %v571 = vpop.permute.xlu0 %570
        %572 = vrot.lane.b32.xlu0 %v543, 84
        %v573 = vpop.permute.xlu0 %572
        %vm574 = vcmask 687104
        %v575 = vsel %vm574, %v555, %v557
        %v576 = vsel %vm574, %v557, %v559
        %v577 = vsel %vm574, %v559, %v561
        %v578 = vsel %vm574, %v561, %v563
        %v579 = vsel %vm574, %v563, %v565
        %v580 = vsel %vm574, %v565, %v567
        %v581 = vsel %vm574, %v567, %v569
        %v582 = vsel %vm574, %v569, %v571
        %v583 = vsel %vm574, %v571, %v573
        %593 = vst [vmem:[#allocation3 + $0xd8] sm:$0xff] %v575
        %594 = vst [vmem:[#allocation3 + $0xe0] sm:$0xff] %v576
        %595 = vst [vmem:[#allocation3 + $0xe8] sm:$0xff] %v577
        %596 = vst [vmem:[#allocation3 + $0xf0] sm:$0xff] %v578
        %597 = vst [vmem:[#allocation3 + $0xf8] sm:$0xff] %v579
        %598 = vst [vmem:[#allocation3 + $0x100] sm:$0xff] %v580
        %599 = vst [vmem:[#allocation3 + $0x108] sm:$0xff] %v581
        %600 = vst [vmem:[#allocation3 + $0x110] sm:$0xff] %v582
        %601 = vst [vmem:[#allocation3 + $0x118] sm:$0xff] %v583
        %v602 = vld [vmem:[#allocation2] sm:$0xff]
        %v603 = vld [vmem:[#allocation2 + $0x8] sm:$0xff]
        %v604 = vld [vmem:[#allocation2 + $0x10] sm:$0xff]
        %v605 = vld [vmem:[#allocation2 + $0x18] sm:$0xff]
        %v606 = vld [vmem:[#allocation2 + $0x20] sm:$0xff]
        %v607 = vld [vmem:[#allocation2 + $0x28] sm:$0xff]
        %v608 = vld [vmem:[#allocation2 + $0x30] sm:$0xff]
        %v609 = vld [vmem:[#allocation2 + $0x38] sm:$0xff]
        %v610 = vld [vmem:[#allocation2 + $0x40] sm:$0xff]
        %v611 = vld [vmem:[#allocation2 + $0x48] sm:$0xff]
        %622 = vrot.lane.b32.xlu0 %v602, 83
        %v623 = vpop.permute.xlu0 %622
        %624 = vrot.lane.b32.xlu0 %v603, 83
        %v625 = vpop.permute.xlu0 %624
        %626 = vrot.lane.b32.xlu0 %v604, 83
        %v627 = vpop.permute.xlu0 %626
        %628 = vrot.lane.b32.xlu0 %v605, 83
        %v629 = vpop.permute.xlu0 %628
        %630 = vrot.lane.b32.xlu0 %v606, 83
        %v631 = vpop.permute.xlu0 %630
        %632 = vrot.lane.b32.xlu0 %v607, 83
        %v633 = vpop.permute.xlu0 %632
        %634 = vrot.lane.b32.xlu0 %v608, 83
        %v635 = vpop.permute.xlu0 %634
        %636 = vrot.lane.b32.xlu0 %v609, 83
        %v637 = vpop.permute.xlu0 %636
        %638 = vrot.lane.b32.xlu0 %v610, 83
        %v639 = vpop.permute.xlu0 %638
        %640 = vrot.lane.b32.xlu0 %v611, 83
        %v641 = vpop.permute.xlu0 %640
        %vm642 = vcmask 678912
        %v643 = vsel %vm642, %v623, %v625
        %v644 = vsel %vm642, %v625, %v627
        %v645 = vsel %vm642, %v627, %v629
        %v646 = vsel %vm642, %v629, %v631
        %v647 = vsel %vm642, %v631, %v633
        %v648 = vsel %vm642, %v633, %v635
        %v649 = vsel %vm642, %v635, %v637
        %v650 = vsel %vm642, %v637, %v639
        %v651 = vsel %vm642, %v639, %v641
        %661 = vst [vmem:[#allocation3 + $0x120] sm:$0xff] %v643
        %662 = vst [vmem:[#allocation3 + $0x128] sm:$0xff] %v644
        %663 = vst [vmem:[#allocation3 + $0x130] sm:$0xff] %v645
        %664 = vst [vmem:[#allocation3 + $0x138] sm:$0xff] %v646
        %665 = vst [vmem:[#allocation3 + $0x140] sm:$0xff] %v647
        %666 = vst [vmem:[#allocation3 + $0x148] sm:$0xff] %v648
        %667 = vst [vmem:[#allocation3 + $0x150] sm:$0xff] %v649
        %668 = vst [vmem:[#allocation3 + $0x158] sm:$0xff] %v650
        %669 = vst [vmem:[#allocation3 + $0x160] sm:$0xff] %v651
        %v670 = vld [vmem:[#allocation2] sm:$0xff]
        %v671 = vld [vmem:[#allocation2 + $0x8] sm:$0xff]
        %v672 = vld [vmem:[#allocation2 + $0x10] sm:$0xff]
        %v673 = vld [vmem:[#allocation2 + $0x18] sm:$0xff]
        %v674 = vld [vmem:[#allocation2 + $0x20] sm:$0xff]
        %v675 = vld [vmem:[#allocation2 + $0x28] sm:$0xff]
        %v676 = vld [vmem:[#allocation2 + $0x30] sm:$0xff]
        %v677 = vld [vmem:[#allocation2 + $0x38] sm:$0xff]
        %v678 = vld [vmem:[#allocation2 + $0x40] sm:$0xff]
        %v679 = vld [vmem:[#allocation2 + $0x48] sm:$0xff]
        %690 = vrot.lane.b32.xlu0 %v670, 82
        %v691 = vpop.permute.xlu0 %690
        %692 = vrot.lane.b32.xlu0 %v671, 82
        %v693 = vpop.permute.xlu0 %692
        %694 = vrot.lane.b32.xlu0 %v672, 82
        %v695 = vpop.permute.xlu0 %694
        %696 = vrot.lane.b32.xlu0 %v673, 82
        %v697 = vpop.permute.xlu0 %696
        %698 = vrot.lane.b32.xlu0 %v674, 82
        %v699 = vpop.permute.xlu0 %698
        %700 = vrot.lane.b32.xlu0 %v675, 82
        %v701 = vpop.permute.xlu0 %700
        %702 = vrot.lane.b32.xlu0 %v676, 82
        %v703 = vpop.permute.xlu0 %702
        %704 = vrot.lane.b32.xlu0 %v677, 82
        %v705 = vpop.permute.xlu0 %704
        %706 = vrot.lane.b32.xlu0 %v678, 82
        %v707 = vpop.permute.xlu0 %706
        %708 = vrot.lane.b32.xlu0 %v679, 82
        %v709 = vpop.permute.xlu0 %708
        %vm710 = vcmask 670720
        %v711 = vsel %vm710, %v691, %v693
        %v712 = vsel %vm710, %v693, %v695
        %v713 = vsel %vm710, %v695, %v697
        %v714 = vsel %vm710, %v697, %v699
        %v715 = vsel %vm710, %v699, %v701
        %v716 = vsel %vm710, %v701, %v703
        %v717 = vsel %vm710, %v703, %v705
        %v718 = vsel %vm710, %v705, %v707
        %v719 = vsel %vm710, %v707, %v709
        %729 = vst [vmem:[#allocation3 + $0x168] sm:$0xff] %v711
        %730 = vst [vmem:[#allocation3 + $0x170] sm:$0xff] %v712
        %731 = vst [vmem:[#allocation3 + $0x178] sm:$0xff] %v713
        %732 = vst [vmem:[#allocation3 + $0x180] sm:$0xff] %v714
        %733 = vst [vmem:[#allocation3 + $0x188] sm:$0xff] %v715
        %734 = vst [vmem:[#allocation3 + $0x190] sm:$0xff] %v716
        %735 = vst [vmem:[#allocation3 + $0x198] sm:$0xff] %v717
        %736 = vst [vmem:[#allocation3 + $0x1a0] sm:$0xff] %v718
        %737 = vst [vmem:[#allocation3 + $0x1a8] sm:$0xff] %v719
        %v738 = vld [vmem:[#allocation2] sm:$0xff]
        %v739 = vld [vmem:[#allocation2 + $0x8] sm:$0xff]
        %v740 = vld [vmem:[#allocation2 + $0x10] sm:$0xff]
        %v741 = vld [vmem:[#allocation2 + $0x18] sm:$0xff]
        %v742 = vld [vmem:[#allocation2 + $0x20] sm:$0xff]
        %v743 = vld [vmem:[#allocation2 + $0x28] sm:$0xff]
        %v744 = vld [vmem:[#allocation2 + $0x30] sm:$0xff]
        %v745 = vld [vmem:[#allocation2 + $0x38] sm:$0xff]
        %v746 = vld [vmem:[#allocation2 + $0x40] sm:$0xff]
        %v747 = vld [vmem:[#allocation2 + $0x48] sm:$0xff]
        %758 = vrot.lane.b32.xlu0 %v738, 74
        %v759 = vpop.permute.xlu0 %758
        %760 = vrot.lane.b32.xlu0 %v739, 74
        %v761 = vpop.permute.xlu0 %760
        %762 = vrot.lane.b32.xlu0 %v740, 74
        %v763 = vpop.permute.xlu0 %762
        %764 = vrot.lane.b32.xlu0 %v741, 74
        %v765 = vpop.permute.xlu0 %764
        %766 = vrot.lane.b32.xlu0 %v742, 74
        %v767 = vpop.permute.xlu0 %766
        %768 = vrot.lane.b32.xlu0 %v743, 74
        %v769 = vpop.permute.xlu0 %768
        %770 = vrot.lane.b32.xlu0 %v744, 74
        %v771 = vpop.permute.xlu0 %770
        %772 = vrot.lane.b32.xlu0 %v745, 74
        %v773 = vpop.permute.xlu0 %772
        %774 = vrot.lane.b32.xlu0 %v746, 74
        %v775 = vpop.permute.xlu0 %774
        %776 = vrot.lane.b32.xlu0 %v747, 74
        %v777 = vpop.permute.xlu0 %776
        %vm778 = vcmask 605184
        %v779 = vsel %vm778, %v759, %v761
        %v780 = vsel %vm778, %v761, %v763
        %v781 = vsel %vm778, %v763, %v765
        %v782 = vsel %vm778, %v765, %v767
        %v783 = vsel %vm778, %v767, %v769
        %v784 = vsel %vm778, %v769, %v771
        %v785 = vsel %vm778, %v771, %v773
        %v786 = vsel %vm778, %v773, %v775
        %v787 = vsel %vm778, %v775, %v777
        %797 = vst [vmem:[#allocation3 + $0x1b0] sm:$0xff] %v779
        %798 = vst [vmem:[#allocation3 + $0x1b8] sm:$0xff] %v780
        %799 = vst [vmem:[#allocation3 + $0x1c0] sm:$0xff] %v781
        %800 = vst [vmem:[#allocation3 + $0x1c8] sm:$0xff] %v782
        %801 = vst [vmem:[#allocation3 + $0x1d0] sm:$0xff] %v783
        %802 = vst [vmem:[#allocation3 + $0x1d8] sm:$0xff] %v784
        %803 = vst [vmem:[#allocation3 + $0x1e0] sm:$0xff] %v785
        %804 = vst [vmem:[#allocation3 + $0x1e8] sm:$0xff] %v786
        %805 = vst [vmem:[#allocation3 + $0x1f0] sm:$0xff] %v787
        %v806 = vld [vmem:[#allocation2] sm:$0xff]
        %v807 = vld [vmem:[#allocation2 + $0x8] sm:$0xff]
        %v808 = vld [vmem:[#allocation2 + $0x10] sm:$0xff]
        %v809 = vld [vmem:[#allocation2 + $0x18] sm:$0xff]
        %v810 = vld [vmem:[#allocation2 + $0x20] sm:$0xff]
        %v811 = vld [vmem:[#allocation2 + $0x28] sm:$0xff]
        %v812 = vld [vmem:[#allocation2 + $0x30] sm:$0xff]
        %v813 = vld [vmem:[#allocation2 + $0x38] sm:$0xff]
        %v814 = vld [vmem:[#allocation2 + $0x40] sm:$0xff]
        %v815 = vld [vmem:[#allocation2 + $0x48] sm:$0xff]
        %826 = vrot.lane.b32.xlu0 %v806, 73
        %v827 = vpop.permute.xlu0 %826
        %828 = vrot.lane.b32.xlu0 %v807, 73
        %v829 = vpop.permute.xlu0 %828
        %830 = vrot.lane.b32.xlu0 %v808, 73
        %v831 = vpop.permute.xlu0 %830
        %832 = vrot.lane.b32.xlu0 %v809, 73
        %v833 = vpop.permute.xlu0 %832
        %834 = vrot.lane.b32.xlu0 %v810, 73
        %v835 = vpop.permute.xlu0 %834
        %836 = vrot.lane.b32.xlu0 %v811, 73
        %v837 = vpop.permute.xlu0 %836
        %838 = vrot.lane.b32.xlu0 %v812, 73
        %v839 = vpop.permute.xlu0 %838
        %840 = vrot.lane.b32.xlu0 %v813, 73
        %v841 = vpop.permute.xlu0 %840
        %842 = vrot.lane.b32.xlu0 %v814, 73
        %v843 = vpop.permute.xlu0 %842
        %844 = vrot.lane.b32.xlu0 %v815, 73
        %v845 = vpop.permute.xlu0 %844
        %vm846 = vcmask 596992
        %v847 = vsel %vm846, %v827, %v829
        %v848 = vsel %vm846, %v829, %v831
        %v849 = vsel %vm846, %v831, %v833
        %v850 = vsel %vm846, %v833, %v835
        %v851 = vsel %vm846, %v835, %v837
        %v852 = vsel %vm846, %v837, %v839
        %v853 = vsel %vm846, %v839, %v841
        %v854 = vsel %vm846, %v841, %v843
        %v855 = vsel %vm846, %v843, %v845
        %865 = vst [vmem:[#allocation3 + $0x1f8] sm:$0xff] %v847
        %866 = vst [vmem:[#allocation3 + $0x200] sm:$0xff] %v848
        %867 = vst [vmem:[#allocation3 + $0x208] sm:$0xff] %v849
        %868 = vst [vmem:[#allocation3 + $0x210] sm:$0xff] %v850
        %869 = vst [vmem:[#allocation3 + $0x218] sm:$0xff] %v851
        %870 = vst [vmem:[#allocation3 + $0x220] sm:$0xff] %v852
        %871 = vst [vmem:[#allocation3 + $0x228] sm:$0xff] %v853
        %872 = vst [vmem:[#allocation3 + $0x230] sm:$0xff] %v854
        %873 = vst [vmem:[#allocation3 + $0x238] sm:$0xff] %v855
        %v874 = vld [vmem:[#allocation2] sm:$0xff]
        %v875 = vld [vmem:[#allocation2 + $0x8] sm:$0xff]
        %v876 = vld [vmem:[#allocation2 + $0x10] sm:$0xff]
        %v877 = vld [vmem:[#allocation2 + $0x18] sm:$0xff]
        %v878 = vld [vmem:[#allocation2 + $0x20] sm:$0xff]
        %v879 = vld [vmem:[#allocation2 + $0x28] sm:$0xff]
        %v880 = vld [vmem:[#allocation2 + $0x30] sm:$0xff]
        %v881 = vld [vmem:[#allocation2 + $0x38] sm:$0xff]
        %v882 = vld [vmem:[#allocation2 + $0x40] sm:$0xff]
        %v883 = vld [vmem:[#allocation2 + $0x48] sm:$0xff]
        %894 = vrot.lane.b32.xlu0 %v874, 72
        %v895 = vpop.permute.xlu0 %894
        %896 = vrot.lane.b32.xlu0 %v875, 72
        %v897 = vpop.permute.xlu0 %896
        %898 = vrot.lane.b32.xlu0 %v876, 72
        %v899 = vpop.permute.xlu0 %898
        %900 = vrot.lane.b32.xlu0 %v877, 72
        %v901 = vpop.permute.xlu0 %900
        %902 = vrot.lane.b32.xlu0 %v878, 72
        %v903 = vpop.permute.xlu0 %902
        %904 = vrot.lane.b32.xlu0 %v879, 72
        %v905 = vpop.permute.xlu0 %904
        %906 = vrot.lane.b32.xlu0 %v880, 72
        %v907 = vpop.permute.xlu0 %906
        %908 = vrot.lane.b32.xlu0 %v881, 72
        %v909 = vpop.permute.xlu0 %908
        %910 = vrot.lane.b32.xlu0 %v882, 72
        %v911 = vpop.permute.xlu0 %910
        %912 = vrot.lane.b32.xlu0 %v883, 72
        %v913 = vpop.permute.xlu0 %912
        %vm914 = vcmask 588800
        %v915 = vsel %vm914, %v895, %v897
        %v916 = vsel %vm914, %v897, %v899
        %v917 = vsel %vm914, %v899, %v901
        %v918 = vsel %vm914, %v901, %v903
        %v919 = vsel %vm914, %v903, %v905
        %v920 = vsel %vm914, %v905, %v907
        %v921 = vsel %vm914, %v907, %v909
        %v922 = vsel %vm914, %v909, %v911
        %v923 = vsel %vm914, %v911, %v913
        %933 = vst [vmem:[#allocation3 + $0x240] sm:$0xff] %v915
        %934 = vst [vmem:[#allocation3 + $0x248] sm:$0xff] %v916
        %935 = vst [vmem:[#allocation3 + $0x250] sm:$0xff] %v917
        %936 = vst [vmem:[#allocation3 + $0x258] sm:$0xff] %v918
        %937 = vst [vmem:[#allocation3 + $0x260] sm:$0xff] %v919
        %938 = vst [vmem:[#allocation3 + $0x268] sm:$0xff] %v920
        %939 = vst [vmem:[#allocation3 + $0x270] sm:$0xff] %v921
        %940 = vst [vmem:[#allocation3 + $0x278] sm:$0xff] %v922
        %941 = vst [vmem:[#allocation3 + $0x280] sm:$0xff] %v923
        %v942 = vld [vmem:[#allocation2 + $0x8] sm:$0xff]
        %v943 = vld [vmem:[#allocation2 + $0x10] sm:$0xff]
        %v944 = vld [vmem:[#allocation2 + $0x18] sm:$0xff]
        %v945 = vld [vmem:[#allocation2 + $0x20] sm:$0xff]
        %v946 = vld [vmem:[#allocation2 + $0x28] sm:$0xff]
        %v947 = vld [vmem:[#allocation2 + $0x30] sm:$0xff]
        %v948 = vld [vmem:[#allocation2 + $0x38] sm:$0xff]
        %v949 = vld [vmem:[#allocation2 + $0x40] sm:$0xff]
        %v950 = vld [vmem:[#allocation2 + $0x48] sm:$0xff]
        %v951 = vld [vmem:[#allocation2 + $0x50] sm:$0xff]
        %962 = vrot.lane.b32.xlu0 %v942, 122
        %v963 = vpop.permute.xlu0 %962
        %964 = vrot.lane.b32.xlu0 %v943, 122
        %v965 = vpop.permute.xlu0 %964
        %966 = vrot.lane.b32.xlu0 %v944, 122
        %v967 = vpop.permute.xlu0 %966
        %968 = vrot.lane.b32.xlu0 %v945, 122
        %v969 = vpop.permute.xlu0 %968
        %970 = vrot.lane.b32.xlu0 %v946, 122
        %v971 = vpop.permute.xlu0 %970
        %972 = vrot.lane.b32.xlu0 %v947, 122
        %v973 = vpop.permute.xlu0 %972
        %974 = vrot.lane.b32.xlu0 %v948, 122
        %v975 = vpop.permute.xlu0 %974
        %976 = vrot.lane.b32.xlu0 %v949, 122
        %v977 = vpop.permute.xlu0 %976
        %978 = vrot.lane.b32.xlu0 %v950, 122
        %v979 = vpop.permute.xlu0 %978
        %980 = vrot.lane.b32.xlu0 %v951, 122
        %v981 = vpop.permute.xlu0 %980
        %vm982 = vcmask 998400
        %v983 = vsel %vm982, %v963, %v965
        %v984 = vsel %vm982, %v965, %v967
        %v985 = vsel %vm982, %v967, %v969
        %v986 = vsel %vm982, %v969, %v971
        %v987 = vsel %vm982, %v971, %v973
        %v988 = vsel %vm982, %v973, %v975
        %v989 = vsel %vm982, %v975, %v977
        %v990 = vsel %vm982, %v977, %v979
        %v991 = vsel %vm982, %v979, %v981
        %1001 = vst [vmem:[#allocation3 + $0x288] sm:$0xff] %v983
        %1002 = vst [vmem:[#allocation3 + $0x290] sm:$0xff] %v984
        %1003 = vst [vmem:[#allocation3 + $0x298] sm:$0xff] %v985
        %1004 = vst [vmem:[#allocation3 + $0x2a0] sm:$0xff] %v986
        %1005 = vst [vmem:[#allocation3 + $0x2a8] sm:$0xff] %v987
        %1006 = vst [vmem:[#allocation3 + $0x2b0] sm:$0xff] %v988
        %1007 = vst [vmem:[#allocation3 + $0x2b8] sm:$0xff] %v989
        %1008 = vst [vmem:[#allocation3 + $0x2c0] sm:$0xff] %v990
        %1009 = vst [vmem:[#allocation3 + $0x2c8] sm:$0xff] %v991
        %v1010 = vld [vmem:[#allocation2 + $0x8] sm:$0xff]
        %v1011 = vld [vmem:[#allocation2 + $0x10] sm:$0xff]
        %v1012 = vld [vmem:[#allocation2 + $0x18] sm:$0xff]
        %v1013 = vld [vmem:[#allocation2 + $0x20] sm:$0xff]
        %v1014 = vld [vmem:[#allocation2 + $0x28] sm:$0xff]
        %v1015 = vld [vmem:[#allocation2 + $0x30] sm:$0xff]
        %v1016 = vld [vmem:[#allocation2 + $0x38] sm:$0xff]
        %v1017 = vld [vmem:[#allocation2 + $0x40] sm:$0xff]
        %v1018 = vld [vmem:[#allocation2 + $0x48] sm:$0xff]
        %v1019 = vld [vmem:[#allocation2 + $0x50] sm:$0xff]
        %1030 = vrot.lane.b32.xlu0 %v1010, 121
        %v1031 = vpop.permute.xlu0 %1030
        %1032 = vrot.lane.b32.xlu0 %v1011, 121
        %v1033 = vpop.permute.xlu0 %1032
        %1034 = vrot.lane.b32.xlu0 %v1012, 121
        %v1035 = vpop.permute.xlu0 %1034
        %1036 = vrot.lane.b32.xlu0 %v1013, 121
        %v1037 = vpop.permute.xlu0 %1036
        %1038 = vrot.lane.b32.xlu0 %v1014, 121
        %v1039 = vpop.permute.xlu0 %1038
        %1040 = vrot.lane.b32.xlu0 %v1015, 121
        %v1041 = vpop.permute.xlu0 %1040
        %1042 = vrot.lane.b32.xlu0 %v1016, 121
        %v1043 = vpop.permute.xlu0 %1042
        %1044 = vrot.lane.b32.xlu0 %v1017, 121
        %v1045 = vpop.permute.xlu0 %1044
        %1046 = vrot.lane.b32.xlu0 %v1018, 121
        %v1047 = vpop.permute.xlu0 %1046
        %1048 = vrot.lane.b32.xlu0 %v1019, 121
        %v1049 = vpop.permute.xlu0 %1048
        %vm1050 = vcmask 990208
        %v1051 = vsel %vm1050, %v1031, %v1033
        %v1052 = vsel %vm1050, %v1033, %v1035
        %v1053 = vsel %vm1050, %v1035, %v1037
        %v1054 = vsel %vm1050, %v1037, %v1039
        %v1055 = vsel %vm1050, %v1039, %v1041
        %v1056 = vsel %vm1050, %v1041, %v1043
        %v1057 = vsel %vm1050, %v1043, %v1045
        %v1058 = vsel %vm1050, %v1045, %v1047
        %v1059 = vsel %vm1050, %v1047, %v1049
        %1069 = vst [vmem:[#allocation3 + $0x2d0] sm:$0xff] %v1051
        %1070 = vst [vmem:[#allocation3 + $0x2d8] sm:$0xff] %v1052
        %1071 = vst [vmem:[#allocation3 + $0x2e0] sm:$0xff] %v1053
        %1072 = vst [vmem:[#allocation3 + $0x2e8] sm:$0xff] %v1054
        %1073 = vst [vmem:[#allocation3 + $0x2f0] sm:$0xff] %v1055
        %1074 = vst [vmem:[#allocation3 + $0x2f8] sm:$0xff] %v1056
        %1075 = vst [vmem:[#allocation3 + $0x300] sm:$0xff] %v1057
        %1076 = vst [vmem:[#allocation3 + $0x308] sm:$0xff] %v1058
        %1077 = vst [vmem:[#allocation3 + $0x310] sm:$0xff] %v1059
        %v1078 = vld [vmem:[#allocation2 + $0x8] sm:$0xff]
        %v1079 = vld [vmem:[#allocation2 + $0x10] sm:$0xff]
        %v1080 = vld [vmem:[#allocation2 + $0x18] sm:$0xff]
        %v1081 = vld [vmem:[#allocation2 + $0x20] sm:$0xff]
        %v1082 = vld [vmem:[#allocation2 + $0x28] sm:$0xff]
        %v1083 = vld [vmem:[#allocation2 + $0x30] sm:$0xff]
        %v1084 = vld [vmem:[#allocation2 + $0x38] sm:$0xff]
        %v1085 = vld [vmem:[#allocation2 + $0x40] sm:$0xff]
        %v1086 = vld [vmem:[#allocation2 + $0x48] sm:$0xff]
        %v1087 = vld [vmem:[#allocation2 + $0x50] sm:$0xff]
        %1098 = vrot.lane.b32.xlu0 %v1078, 120
        %v1099 = vpop.permute.xlu0 %1098
        %1100 = vrot.lane.b32.xlu0 %v1079, 120
        %v1101 = vpop.permute.xlu0 %1100
        %1102 = vrot.lane.b32.xlu0 %v1080, 120
        %v1103 = vpop.permute.xlu0 %1102
        %1104 = vrot.lane.b32.xlu0 %v1081, 120
        %v1105 = vpop.permute.xlu0 %1104
        %1106 = vrot.lane.b32.xlu0 %v1082, 120
        %v1107 = vpop.permute.xlu0 %1106
        %1108 = vrot.lane.b32.xlu0 %v1083, 120
        %v1109 = vpop.permute.xlu0 %1108
        %1110 = vrot.lane.b32.xlu0 %v1084, 120
        %v1111 = vpop.permute.xlu0 %1110
        %1112 = vrot.lane.b32.xlu0 %v1085, 120
        %v1113 = vpop.permute.xlu0 %1112
        %1114 = vrot.lane.b32.xlu0 %v1086, 120
        %v1115 = vpop.permute.xlu0 %1114
        %1116 = vrot.lane.b32.xlu0 %v1087, 120
        %v1117 = vpop.permute.xlu0 %1116
        %vm1118 = vcmask 982016
        %v1119 = vsel %vm1118, %v1099, %v1101
        %v1120 = vsel %vm1118, %v1101, %v1103
        %v1121 = vsel %vm1118, %v1103, %v1105
        %v1122 = vsel %vm1118, %v1105, %v1107
        %v1123 = vsel %vm1118, %v1107, %v1109
        %v1124 = vsel %vm1118, %v1109, %v1111
        %v1125 = vsel %vm1118, %v1111, %v1113
        %v1126 = vsel %vm1118, %v1113, %v1115
        %v1127 = vsel %vm1118, %v1115, %v1117
        %1137 = vst [vmem:[#allocation3 + $0x318] sm:$0xff] %v1119
        %1138 = vst [vmem:[#allocation3 + $0x320] sm:$0xff] %v1120
        %1139 = vst [vmem:[#allocation3 + $0x328] sm:$0xff] %v1121
        %1140 = vst [vmem:[#allocation3 + $0x330] sm:$0xff] %v1122
        %1141 = vst [vmem:[#allocation3 + $0x338] sm:$0xff] %v1123
        %1142 = vst [vmem:[#allocation3 + $0x340] sm:$0xff] %v1124
        %1143 = vst [vmem:[#allocation3 + $0x348] sm:$0xff] %v1125
        %1144 = vst [vmem:[#allocation3 + $0x350] sm:$0xff] %v1126
        %1145 = vst [vmem:[#allocation3 + $0x358] sm:$0xff] %v1127
        %v1146 = vld [vmem:[#allocation2 + $0x8] sm:$0xff]
        %v1147 = vld [vmem:[#allocation2 + $0x10] sm:$0xff]
        %v1148 = vld [vmem:[#allocation2 + $0x18] sm:$0xff]
        %v1149 = vld [vmem:[#allocation2 + $0x20] sm:$0xff]
        %v1150 = vld [vmem:[#allocation2 + $0x28] sm:$0xff]
        %v1151 = vld [vmem:[#allocation2 + $0x30] sm:$0xff]
        %v1152 = vld [vmem:[#allocation2 + $0x38] sm:$0xff]
        %v1153 = vld [vmem:[#allocation2 + $0x40] sm:$0xff]
        %v1154 = vld [vmem:[#allocation2 + $0x48] sm:$0xff]
        %v1155 = vld [vmem:[#allocation2 + $0x50] sm:$0xff]
        %1166 = vrot.lane.b32.xlu0 %v1146, 112
        %v1167 = vpop.permute.xlu0 %1166
        %1168 = vrot.lane.b32.xlu0 %v1147, 112
        %v1169 = vpop.permute.xlu0 %1168
        %1170 = vrot.lane.b32.xlu0 %v1148, 112
        %v1171 = vpop.permute.xlu0 %1170
        %1172 = vrot.lane.b32.xlu0 %v1149, 112
        %v1173 = vpop.permute.xlu0 %1172
        %1174 = vrot.lane.b32.xlu0 %v1150, 112
        %v1175 = vpop.permute.xlu0 %1174
        %1176 = vrot.lane.b32.xlu0 %v1151, 112
        %v1177 = vpop.permute.xlu0 %1176
        %1178 = vrot.lane.b32.xlu0 %v1152, 112
        %v1179 = vpop.permute.xlu0 %1178
        %1180 = vrot.lane.b32.xlu0 %v1153, 112
        %v1181 = vpop.permute.xlu0 %1180
        %1182 = vrot.lane.b32.xlu0 %v1154, 112
        %v1183 = vpop.permute.xlu0 %1182
        %1184 = vrot.lane.b32.xlu0 %v1155, 112
        %v1185 = vpop.permute.xlu0 %1184
        %vm1186 = vcmask 916480
        %v1187 = vsel %vm1186, %v1167, %v1169
        %v1188 = vsel %vm1186, %v1169, %v1171
        %v1189 = vsel %vm1186, %v1171, %v1173
        %v1190 = vsel %vm1186, %v1173, %v1175
        %v1191 = vsel %vm1186, %v1175, %v1177
        %v1192 = vsel %vm1186, %v1177, %v1179
        %v1193 = vsel %vm1186, %v1179, %v1181
        %v1194 = vsel %vm1186, %v1181, %v1183
        %v1195 = vsel %vm1186, %v1183, %v1185
        %1205 = vst [vmem:[#allocation3 + $0x360] sm:$0xff] %v1187
        %1206 = vst [vmem:[#allocation3 + $0x368] sm:$0xff] %v1188
        %1207 = vst [vmem:[#allocation3 + $0x370] sm:$0xff] %v1189
        %1208 = vst [vmem:[#allocation3 + $0x378] sm:$0xff] %v1190
        %1209 = vst [vmem:[#allocation3 + $0x380] sm:$0xff] %v1191
        %1210 = vst [vmem:[#allocation3 + $0x388] sm:$0xff] %v1192
        %1211 = vst [vmem:[#allocation3 + $0x390] sm:$0xff] %v1193
        %1212 = vst [vmem:[#allocation3 + $0x398] sm:$0xff] %v1194
        %1213 = vst [vmem:[#allocation3 + $0x3a0] sm:$0xff] %v1195
        %v1214 = vld [vmem:[#allocation2 + $0x8] sm:$0xff]
        %v1215 = vld [vmem:[#allocation2 + $0x10] sm:$0xff]
        %v1216 = vld [vmem:[#allocation2 + $0x18] sm:$0xff]
        %v1217 = vld [vmem:[#allocation2 + $0x20] sm:$0xff]
        %v1218 = vld [vmem:[#allocation2 + $0x28] sm:$0xff]
        %v1219 = vld [vmem:[#allocation2 + $0x30] sm:$0xff]
        %v1220 = vld [vmem:[#allocation2 + $0x38] sm:$0xff]
        %v1221 = vld [vmem:[#allocation2 + $0x40] sm:$0xff]
        %v1222 = vld [vmem:[#allocation2 + $0x48] sm:$0xff]
        %v1223 = vld [vmem:[#allocation2 + $0x50] sm:$0xff]
        %1234 = vrot.lane.b32.xlu0 %v1214, 111
        %v1235 = vpop.permute.xlu0 %1234
        %1236 = vrot.lane.b32.xlu0 %v1215, 111
        %v1237 = vpop.permute.xlu0 %1236
        %1238 = vrot.lane.b32.xlu0 %v1216, 111
        %v1239 = vpop.permute.xlu0 %1238
        %1240 = vrot.lane.b32.xlu0 %v1217, 111
        %v1241 = vpop.permute.xlu0 %1240
        %1242 = vrot.lane.b32.xlu0 %v1218, 111
        %v1243 = vpop.permute.xlu0 %1242
        %1244 = vrot.lane.b32.xlu0 %v1219, 111
        %v1245 = vpop.permute.xlu0 %1244
        %1246 = vrot.lane.b32.xlu0 %v1220, 111
        %v1247 = vpop.permute.xlu0 %1246
        %1248 = vrot.lane.b32.xlu0 %v1221, 111
        %v1249 = vpop.permute.xlu0 %1248
        %1250 = vrot.lane.b32.xlu0 %v1222, 111
        %v1251 = vpop.permute.xlu0 %1250
        %1252 = vrot.lane.b32.xlu0 %v1223, 111
        %v1253 = vpop.permute.xlu0 %1252
        %vm1254 = vcmask 908288
        %v1255 = vsel %vm1254, %v1235, %v1237
        %v1256 = vsel %vm1254, %v1237, %v1239
        %v1257 = vsel %vm1254, %v1239, %v1241
        %v1258 = vsel %vm1254, %v1241, %v1243
        %v1259 = vsel %vm1254, %v1243, %v1245
        %v1260 = vsel %vm1254, %v1245, %v1247
        %v1261 = vsel %vm1254, %v1247, %v1249
        %v1262 = vsel %vm1254, %v1249, %v1251
        %v1263 = vsel %vm1254, %v1251, %v1253
        %1273 = vst [vmem:[#allocation3 + $0x3a8] sm:$0xff] %v1255
        %1274 = vst [vmem:[#allocation3 + $0x3b0] sm:$0xff] %v1256
        %1275 = vst [vmem:[#allocation3 + $0x3b8] sm:$0xff] %v1257
        %1276 = vst [vmem:[#allocation3 + $0x3c0] sm:$0xff] %v1258
        %1277 = vst [vmem:[#allocation3 + $0x3c8] sm:$0xff] %v1259
        %1278 = vst [vmem:[#allocation3 + $0x3d0] sm:$0xff] %v1260
        %1279 = vst [vmem:[#allocation3 + $0x3d8] sm:$0xff] %v1261
        %1280 = vst [vmem:[#allocation3 + $0x3e0] sm:$0xff] %v1262
        %1281 = vst [vmem:[#allocation3 + $0x3e8] sm:$0xff] %v1263
        %v1282 = vld [vmem:[#allocation2 + $0x8] sm:$0xff]
        %v1283 = vld [vmem:[#allocation2 + $0x10] sm:$0xff]
        %v1284 = vld [vmem:[#allocation2 + $0x18] sm:$0xff]
        %v1285 = vld [vmem:[#allocation2 + $0x20] sm:$0xff]
        %v1286 = vld [vmem:[#allocation2 + $0x28] sm:$0xff]
        %v1287 = vld [vmem:[#allocation2 + $0x30] sm:$0xff]
        %v1288 = vld [vmem:[#allocation2 + $0x38] sm:$0xff]
        %v1289 = vld [vmem:[#allocation2 + $0x40] sm:$0xff]
        %v1290 = vld [vmem:[#allocation2 + $0x48] sm:$0xff]
        %v1291 = vld [vmem:[#allocation2 + $0x50] sm:$0xff]
        %1302 = vrot.lane.b32.xlu0 %v1282, 110
        %v1303 = vpop.permute.xlu0 %1302
        %1304 = vrot.lane.b32.xlu0 %v1283, 110
        %v1305 = vpop.permute.xlu0 %1304
        %1306 = vrot.lane.b32.xlu0 %v1284, 110
        %v1307 = vpop.permute.xlu0 %1306
        %1308 = vrot.lane.b32.xlu0 %v1285, 110
        %v1309 = vpop.permute.xlu0 %1308
        %1310 = vrot.lane.b32.xlu0 %v1286, 110
        %v1311 = vpop.permute.xlu0 %1310
        %1312 = vrot.lane.b32.xlu0 %v1287, 110
        %v1313 = vpop.permute.xlu0 %1312
        %1314 = vrot.lane.b32.xlu0 %v1288, 110
        %v1315 = vpop.permute.xlu0 %1314
        %1316 = vrot.lane.b32.xlu0 %v1289, 110
        %v1317 = vpop.permute.xlu0 %1316
        %1318 = vrot.lane.b32.xlu0 %v1290, 110
        %v1319 = vpop.permute.xlu0 %1318
        %1320 = vrot.lane.b32.xlu0 %v1291, 110
        %v1321 = vpop.permute.xlu0 %1320
        %vm1322 = vcmask 900096
        %v1323 = vsel %vm1322, %v1303, %v1305
        %v1324 = vsel %vm1322, %v1305, %v1307
        %v1325 = vsel %vm1322, %v1307, %v1309
        %v1326 = vsel %vm1322, %v1309, %v1311
        %v1327 = vsel %vm1322, %v1311, %v1313
        %v1328 = vsel %vm1322, %v1313, %v1315
        %v1329 = vsel %vm1322, %v1315, %v1317
        %v1330 = vsel %vm1322, %v1317, %v1319
        %v1331 = vsel %vm1322, %v1319, %v1321
        %1341 = vst [vmem:[#allocation3 + $0x3f0] sm:$0xff] %v1323
        %1342 = vst [vmem:[#allocation3 + $0x3f8] sm:$0xff] %v1324
        %1343 = vst [vmem:[#allocation3 + $0x400] sm:$0xff] %v1325
        %1344 = vst [vmem:[#allocation3 + $0x408] sm:$0xff] %v1326
        %1345 = vst [vmem:[#allocation3 + $0x410] sm:$0xff] %v1327
        %1346 = vst [vmem:[#allocation3 + $0x418] sm:$0xff] %v1328
        %1347 = vst [vmem:[#allocation3 + $0x420] sm:$0xff] %v1329
        %1348 = vst [vmem:[#allocation3 + $0x428] sm:$0xff] %v1330
        %1349 = vst [vmem:[#allocation3 + $0x430] sm:$0xff] %v1331
        %v1350 = vld [vmem:[#allocation2 + $0x8] sm:$0xff]
        %v1351 = vld [vmem:[#allocation2 + $0x10] sm:$0xff]
        %v1352 = vld [vmem:[#allocation2 + $0x18] sm:$0xff]
        %v1353 = vld [vmem:[#allocation2 + $0x20] sm:$0xff]
        %v1354 = vld [vmem:[#allocation2 + $0x28] sm:$0xff]
        %v1355 = vld [vmem:[#allocation2 + $0x30] sm:$0xff]
        %v1356 = vld [vmem:[#allocation2 + $0x38] sm:$0xff]
        %v1357 = vld [vmem:[#allocation2 + $0x40] sm:$0xff]
        %v1358 = vld [vmem:[#allocation2 + $0x48] sm:$0xff]
        %v1359 = vld [vmem:[#allocation2 + $0x50] sm:$0xff]
        %1370 = vrot.lane.b32.xlu0 %v1350, 102
        %v1371 = vpop.permute.xlu0 %1370
        %1372 = vrot.lane.b32.xlu0 %v1351, 102
        %v1373 = vpop.permute.xlu0 %1372
        %1374 = vrot.lane.b32.xlu0 %v1352, 102
        %v1375 = vpop.permute.xlu0 %1374
        %1376 = vrot.lane.b32.xlu0 %v1353, 102
        %v1377 = vpop.permute.xlu0 %1376
        %1378 = vrot.lane.b32.xlu0 %v1354, 102
        %v1379 = vpop.permute.xlu0 %1378
        %1380 = vrot.lane.b32.xlu0 %v1355, 102
        %v1381 = vpop.permute.xlu0 %1380
        %1382 = vrot.lane.b32.xlu0 %v1356, 102
        %v1383 = vpop.permute.xlu0 %1382
        %1384 = vrot.lane.b32.xlu0 %v1357, 102
        %v1385 = vpop.permute.xlu0 %1384
        %1386 = vrot.lane.b32.xlu0 %v1358, 102
        %v1387 = vpop.permute.xlu0 %1386
        %1388 = vrot.lane.b32.xlu0 %v1359, 102
        %v1389 = vpop.permute.xlu0 %1388
        %vm1390 = vcmask 834560
        %v1391 = vsel %vm1390, %v1371, %v1373
        %v1392 = vsel %vm1390, %v1373, %v1375
        %v1393 = vsel %vm1390, %v1375, %v1377
        %v1394 = vsel %vm1390, %v1377, %v1379
        %v1395 = vsel %vm1390, %v1379, %v1381
        %v1396 = vsel %vm1390, %v1381, %v1383
        %v1397 = vsel %vm1390, %v1383, %v1385
        %v1398 = vsel %vm1390, %v1385, %v1387
        %v1399 = vsel %vm1390, %v1387, %v1389
        %1409 = vst [vmem:[#allocation3 + $0x438] sm:$0xff] %v1391
        %1410 = vst [vmem:[#allocation3 + $0x440] sm:$0xff] %v1392
        %1411 = vst [vmem:[#allocation3 + $0x448] sm:$0xff] %v1393
        %1412 = vst [vmem:[#allocation3 + $0x450] sm:$0xff] %v1394
        %1413 = vst [vmem:[#allocation3 + $0x458] sm:$0xff] %v1395
        %1414 = vst [vmem:[#allocation3 + $0x460] sm:$0xff] %v1396
        %1415 = vst [vmem:[#allocation3 + $0x468] sm:$0xff] %v1397
        %1416 = vst [vmem:[#allocation3 + $0x470] sm:$0xff] %v1398
        %1417 = vst [vmem:[#allocation3 + $0x478] sm:$0xff] %v1399
        %v1418 = vld [vmem:[#allocation2 + $0x8] sm:$0xff]
        %v1419 = vld [vmem:[#allocation2 + $0x10] sm:$0xff]
        %v1420 = vld [vmem:[#allocation2 + $0x18] sm:$0xff]
        %v1421 = vld [vmem:[#allocation2 + $0x20] sm:$0xff]
        %v1422 = vld [vmem:[#allocation2 + $0x28] sm:$0xff]
        %v1423 = vld [vmem:[#allocation2 + $0x30] sm:$0xff]
        %v1424 = vld [vmem:[#allocation2 + $0x38] sm:$0xff]
        %v1425 = vld [vmem:[#allocation2 + $0x40] sm:$0xff]
        %v1426 = vld [vmem:[#allocation2 + $0x48] sm:$0xff]
        %v1427 = vld [vmem:[#allocation2 + $0x50] sm:$0xff]
        %1438 = vrot.lane.b32.xlu0 %v1418, 101
        %v1439 = vpop.permute.xlu0 %1438
        %1440 = vrot.lane.b32.xlu0 %v1419, 101
        %v1441 = vpop.permute.xlu0 %1440
        %1442 = vrot.lane.b32.xlu0 %v1420, 101
        %v1443 = vpop.permute.xlu0 %1442
        %1444 = vrot.lane.b32.xlu0 %v1421, 101
        %v1445 = vpop.permute.xlu0 %1444
        %1446 = vrot.lane.b32.xlu0 %v1422, 101
        %v1447 = vpop.permute.xlu0 %1446
        %1448 = vrot.lane.b32.xlu0 %v1423, 101
        %v1449 = vpop.permute.xlu0 %1448
        %1450 = vrot.lane.b32.xlu0 %v1424, 101
        %v1451 = vpop.permute.xlu0 %1450
        %1452 = vrot.lane.b32.xlu0 %v1425, 101
        %v1453 = vpop.permute.xlu0 %1452
        %1454 = vrot.lane.b32.xlu0 %v1426, 101
        %v1455 = vpop.permute.xlu0 %1454
        %1456 = vrot.lane.b32.xlu0 %v1427, 101
        %v1457 = vpop.permute.xlu0 %1456
        %vm1458 = vcmask 826368
        %v1459 = vsel %vm1458, %v1439, %v1441
        %v1460 = vsel %vm1458, %v1441, %v1443
        %v1461 = vsel %vm1458, %v1443, %v1445
        %v1462 = vsel %vm1458, %v1445, %v1447
        %v1463 = vsel %vm1458, %v1447, %v1449
        %v1464 = vsel %vm1458, %v1449, %v1451
        %v1465 = vsel %vm1458, %v1451, %v1453
        %v1466 = vsel %vm1458, %v1453, %v1455
        %v1467 = vsel %vm1458, %v1455, %v1457
        %1477 = vst [vmem:[#allocation3 + $0x480] sm:$0xff] %v1459
        %1478 = vst [vmem:[#allocation3 + $0x488] sm:$0xff] %v1460
        %1479 = vst [vmem:[#allocation3 + $0x490] sm:$0xff] %v1461
        %1480 = vst [vmem:[#allocation3 + $0x498] sm:$0xff] %v1462
        %1481 = vst [vmem:[#allocation3 + $0x4a0] sm:$0xff] %v1463
        %1482 = vst [vmem:[#allocation3 + $0x4a8] sm:$0xff] %v1464
        %1483 = vst [vmem:[#allocation3 + $0x4b0] sm:$0xff] %v1465
        %1484 = vst [vmem:[#allocation3 + $0x4b8] sm:$0xff] %v1466
        %1485 = vst [vmem:[#allocation3 + $0x4c0] sm:$0xff] %v1467
        %v1486 = vld [vmem:[#allocation2 + $0x8] sm:$0xff]
        %v1487 = vld [vmem:[#allocation2 + $0x10] sm:$0xff]
        %v1488 = vld [vmem:[#allocation2 + $0x18] sm:$0xff]
        %v1489 = vld [vmem:[#allocation2 + $0x20] sm:$0xff]
        %v1490 = vld [vmem:[#allocation2 + $0x28] sm:$0xff]
        %v1491 = vld [vmem:[#allocation2 + $0x30] sm:$0xff]
        %v1492 = vld [vmem:[#allocation2 + $0x38] sm:$0xff]
        %v1493 = vld [vmem:[#allocation2 + $0x40] sm:$0xff]
        %v1494 = vld [vmem:[#allocation2 + $0x48] sm:$0xff]
        %v1495 = vld [vmem:[#allocation2 + $0x50] sm:$0xff]
        %1506 = vrot.lane.b32.xlu0 %v1486, 100
        %v1507 = vpop.permute.xlu0 %1506
        %1508 = vrot.lane.b32.xlu0 %v1487, 100
        %v1509 = vpop.permute.xlu0 %1508
        %1510 = vrot.lane.b32.xlu0 %v1488, 100
        %v1511 = vpop.permute.xlu0 %1510
        %1512 = vrot.lane.b32.xlu0 %v1489, 100
        %v1513 = vpop.permute.xlu0 %1512
        %1514 = vrot.lane.b32.xlu0 %v1490, 100
        %v1515 = vpop.permute.xlu0 %1514
        %1516 = vrot.lane.b32.xlu0 %v1491, 100
        %v1517 = vpop.permute.xlu0 %1516
        %1518 = vrot.lane.b32.xlu0 %v1492, 100
        %v1519 = vpop.permute.xlu0 %1518
        %1520 = vrot.lane.b32.xlu0 %v1493, 100
        %v1521 = vpop.permute.xlu0 %1520
        %1522 = vrot.lane.b32.xlu0 %v1494, 100
        %v1523 = vpop.permute.xlu0 %1522
        %1524 = vrot.lane.b32.xlu0 %v1495, 100
        %v1525 = vpop.permute.xlu0 %1524
        %vm1526 = vcmask 818176
        %v1527 = vsel %vm1526, %v1507, %v1509
        %v1528 = vsel %vm1526, %v1509, %v1511
        %v1529 = vsel %vm1526, %v1511, %v1513
        %v1530 = vsel %vm1526, %v1513, %v1515
        %v1531 = vsel %vm1526, %v1515, %v1517
        %v1532 = vsel %vm1526, %v1517, %v1519
        %v1533 = vsel %vm1526, %v1519, %v1521
        %v1534 = vsel %vm1526, %v1521, %v1523
        %v1535 = vsel %vm1526, %v1523, %v1525
        %1545 = vst [vmem:[#allocation3 + $0x4c8] sm:$0xff] %v1527
        %1546 = vst [vmem:[#allocation3 + $0x4d0] sm:$0xff] %v1528
        %1547 = vst [vmem:[#allocation3 + $0x4d8] sm:$0xff] %v1529
        %1548 = vst [vmem:[#allocation3 + $0x4e0] sm:$0xff] %v1530
        %1549 = vst [vmem:[#allocation3 + $0x4e8] sm:$0xff] %v1531
        %1550 = vst [vmem:[#allocation3 + $0x4f0] sm:$0xff] %v1532
        %1551 = vst [vmem:[#allocation3 + $0x4f8] sm:$0xff] %v1533
        %1552 = vst [vmem:[#allocation3 + $0x500] sm:$0xff] %v1534
        %1553 = vst [vmem:[#allocation3 + $0x508] sm:$0xff] %v1535
        %v1554 = vld [vmem:[#allocation2 + $0x8] sm:$0xff]
        %v1555 = vld [vmem:[#allocation2 + $0x10] sm:$0xff]
        %v1556 = vld [vmem:[#allocation2 + $0x18] sm:$0xff]
        %v1557 = vld [vmem:[#allocation2 + $0x20] sm:$0xff]
        %v1558 = vld [vmem:[#allocation2 + $0x28] sm:$0xff]
        %v1559 = vld [vmem:[#allocation2 + $0x30] sm:$0xff]
        %v1560 = vld [vmem:[#allocation2 + $0x38] sm:$0xff]
        %v1561 = vld [vmem:[#allocation2 + $0x40] sm:$0xff]
        %v1562 = vld [vmem:[#allocation2 + $0x48] sm:$0xff]
        %v1563 = vld [vmem:[#allocation2 + $0x50] sm:$0xff]
        %1574 = vrot.lane.b32.xlu0 %v1554, 22
        %v1575 = vpop.permute.xlu0 %1574
        %1576 = vrot.lane.b32.xlu0 %v1555, 22
        %v1577 = vpop.permute.xlu0 %1576
        %1578 = vrot.lane.b32.xlu0 %v1556, 22
        %v1579 = vpop.permute.xlu0 %1578
        %1580 = vrot.lane.b32.xlu0 %v1557, 22
        %v1581 = vpop.permute.xlu0 %1580
        %1582 = vrot.lane.b32.xlu0 %v1558, 22
        %v1583 = vpop.permute.xlu0 %1582
        %1584 = vrot.lane.b32.xlu0 %v1559, 22
        %v1585 = vpop.permute.xlu0 %1584
        %1586 = vrot.lane.b32.xlu0 %v1560, 22
        %v1587 = vpop.permute.xlu0 %1586
        %1588 = vrot.lane.b32.xlu0 %v1561, 22
        %v1589 = vpop.permute.xlu0 %1588
        %1590 = vrot.lane.b32.xlu0 %v1562, 22
        %v1591 = vpop.permute.xlu0 %1590
        %1592 = vrot.lane.b32.xlu0 %v1563, 22
        %v1593 = vpop.permute.xlu0 %1592
        %vm1594 = vcmask 179200
        %v1595 = vsel %vm1594, %v1575, %v1577
        %v1596 = vsel %vm1594, %v1577, %v1579
        %v1597 = vsel %vm1594, %v1579, %v1581
        %v1598 = vsel %vm1594, %v1581, %v1583
        %v1599 = vsel %vm1594, %v1583, %v1585
        %v1600 = vsel %vm1594, %v1585, %v1587
        %v1601 = vsel %vm1594, %v1587, %v1589
        %v1602 = vsel %vm1594, %v1589, %v1591
        %v1603 = vsel %vm1594, %v1591, %v1593
        %1613 = vst [vmem:[#allocation3 + $0x510] sm:$0xff] %v1595
        %1614 = vst [vmem:[#allocation3 + $0x518] sm:$0xff] %v1596
        %1615 = vst [vmem:[#allocation3 + $0x520] sm:$0xff] %v1597
        %1616 = vst [vmem:[#allocation3 + $0x528] sm:$0xff] %v1598
        %1617 = vst [vmem:[#allocation3 + $0x530] sm:$0xff] %v1599
        %1618 = vst [vmem:[#allocation3 + $0x538] sm:$0xff] %v1600
        %1619 = vst [vmem:[#allocation3 + $0x540] sm:$0xff] %v1601
        %1620 = vst [vmem:[#allocation3 + $0x548] sm:$0xff] %v1602
        %1621 = vst [vmem:[#allocation3 + $0x550] sm:$0xff] %v1603
        %v1622 = vld [vmem:[#allocation2 + $0x8] sm:$0xff]
        %v1623 = vld [vmem:[#allocation2 + $0x10] sm:$0xff]
        %v1624 = vld [vmem:[#allocation2 + $0x18] sm:$0xff]
        %v1625 = vld [vmem:[#allocation2 + $0x20] sm:$0xff]
        %v1626 = vld [vmem:[#allocation2 + $0x28] sm:$0xff]
        %v1627 = vld [vmem:[#allocation2 + $0x30] sm:$0xff]
        %v1628 = vld [vmem:[#allocation2 + $0x38] sm:$0xff]
        %v1629 = vld [vmem:[#allocation2 + $0x40] sm:$0xff]
        %v1630 = vld [vmem:[#allocation2 + $0x48] sm:$0xff]
        %v1631 = vld [vmem:[#allocation2 + $0x50] sm:$0xff]
        %1642 = vrot.lane.b32.xlu0 %v1622, 21
        %v1643 = vpop.permute.xlu0 %1642
        %1644 = vrot.lane.b32.xlu0 %v1623, 21
        %v1645 = vpop.permute.xlu0 %1644
        %1646 = vrot.lane.b32.xlu0 %v1624, 21
        %v1647 = vpop.permute.xlu0 %1646
        %1648 = vrot.lane.b32.xlu0 %v1625, 21
        %v1649 = vpop.permute.xlu0 %1648
        %1650 = vrot.lane.b32.xlu0 %v1626, 21
        %v1651 = vpop.permute.xlu0 %1650
        %1652 = vrot.lane.b32.xlu0 %v1627, 21
        %v1653 = vpop.permute.xlu0 %1652
        %1654 = vrot.lane.b32.xlu0 %v1628, 21
        %v1655 = vpop.permute.xlu0 %1654
        %1656 = vrot.lane.b32.xlu0 %v1629, 21
        %v1657 = vpop.permute.xlu0 %1656
        %1658 = vrot.lane.b32.xlu0 %v1630, 21
        %v1659 = vpop.permute.xlu0 %1658
        %1660 = vrot.lane.b32.xlu0 %v1631, 21
        %v1661 = vpop.permute.xlu0 %1660
        %vm1662 = vcmask 171008
        %v1663 = vsel %vm1662, %v1643, %v1645
        %v1664 = vsel %vm1662, %v1645, %v1647
        %v1665 = vsel %vm1662, %v1647, %v1649
        %v1666 = vsel %vm1662, %v1649, %v1651
        %v1667 = vsel %vm1662, %v1651, %v1653
        %v1668 = vsel %vm1662, %v1653, %v1655
        %v1669 = vsel %vm1662, %v1655, %v1657
        %v1670 = vsel %vm1662, %v1657, %v1659
        %v1671 = vsel %vm1662, %v1659, %v1661
        %1681 = vst [vmem:[#allocation3 + $0x558] sm:$0xff] %v1663
        %1682 = vst [vmem:[#allocation3 + $0x560] sm:$0xff] %v1664
        %1683 = vst [vmem:[#allocation3 + $0x568] sm:$0xff] %v1665
        %1684 = vst [vmem:[#allocation3 + $0x570] sm:$0xff] %v1666
        %1685 = vst [vmem:[#allocation3 + $0x578] sm:$0xff] %v1667
        %1686 = vst [vmem:[#allocation3 + $0x580] sm:$0xff] %v1668
        %1687 = vst [vmem:[#allocation3 + $0x588] sm:$0xff] %v1669
        %1688 = vst [vmem:[#allocation3 + $0x590] sm:$0xff] %v1670
        %1689 = vst [vmem:[#allocation3 + $0x598] sm:$0xff] %v1671
        %v1690 = vld [vmem:[#allocation2 + $0x8] sm:$0xff]
        %v1691 = vld [vmem:[#allocation2 + $0x10] sm:$0xff]
        %v1692 = vld [vmem:[#allocation2 + $0x18] sm:$0xff]
        %v1693 = vld [vmem:[#allocation2 + $0x20] sm:$0xff]
        %v1694 = vld [vmem:[#allocation2 + $0x28] sm:$0xff]
        %v1695 = vld [vmem:[#allocation2 + $0x30] sm:$0xff]
        %v1696 = vld [vmem:[#allocation2 + $0x38] sm:$0xff]
        %v1697 = vld [vmem:[#allocation2 + $0x40] sm:$0xff]
        %v1698 = vld [vmem:[#allocation2 + $0x48] sm:$0xff]
        %v1699 = vld [vmem:[#allocation2 + $0x50] sm:$0xff]
        %1710 = vrot.lane.b32.xlu0 %v1690, 20
        %v1711 = vpop.permute.xlu0 %1710
        %1712 = vrot.lane.b32.xlu0 %v1691, 20
        %v1713 = vpop.permute.xlu0 %1712
        %1714 = vrot.lane.b32.xlu0 %v1692, 20
        %v1715 = vpop.permute.xlu0 %1714
        %1716 = vrot.lane.b32.xlu0 %v1693, 20
        %v1717 = vpop.permute.xlu0 %1716
        %1718 = vrot.lane.b32.xlu0 %v1694, 20
        %v1719 = vpop.permute.xlu0 %1718
        %1720 = vrot.lane.b32.xlu0 %v1695, 20
        %v1721 = vpop.permute.xlu0 %1720
        %1722 = vrot.lane.b32.xlu0 %v1696, 20
        %v1723 = vpop.permute.xlu0 %1722
        %1724 = vrot.lane.b32.xlu0 %v1697, 20
        %v1725 = vpop.permute.xlu0 %1724
        %1726 = vrot.lane.b32.xlu0 %v1698, 20
        %v1727 = vpop.permute.xlu0 %1726
        %1728 = vrot.lane.b32.xlu0 %v1699, 20
        %v1729 = vpop.permute.xlu0 %1728
        %vm1730 = vcmask 162816
        %v1731 = vsel %vm1730, %v1711, %v1713
        %v1732 = vsel %vm1730, %v1713, %v1715
        %v1733 = vsel %vm1730, %v1715, %v1717
        %v1734 = vsel %vm1730, %v1717, %v1719
        %v1735 = vsel %vm1730, %v1719, %v1721
        %v1736 = vsel %vm1730, %v1721, %v1723
        %v1737 = vsel %vm1730, %v1723, %v1725
        %v1738 = vsel %vm1730, %v1725, %v1727
        %v1739 = vsel %vm1730, %v1727, %v1729
        %1749 = vst [vmem:[#allocation3 + $0x5a0] sm:$0xff] %v1731
        %1750 = vst [vmem:[#allocation3 + $0x5a8] sm:$0xff] %v1732
        %1751 = vst [vmem:[#allocation3 + $0x5b0] sm:$0xff] %v1733
        %1752 = vst [vmem:[#allocation3 + $0x5b8] sm:$0xff] %v1734
        %1753 = vst [vmem:[#allocation3 + $0x5c0] sm:$0xff] %v1735
        %1754 = vst [vmem:[#allocation3 + $0x5c8] sm:$0xff] %v1736
        %1755 = vst [vmem:[#allocation3 + $0x5d0] sm:$0xff] %v1737
        %1756 = vst [vmem:[#allocation3 + $0x5d8] sm:$0xff] %v1738
        %1757 = vst [vmem:[#allocation3 + $0x5e0] sm:$0xff] %v1739
        %v1758 = vld [vmem:[#allocation2 + $0x8] sm:$0xff]
        %v1759 = vld [vmem:[#allocation2 + $0x10] sm:$0xff]
        %v1760 = vld [vmem:[#allocation2 + $0x18] sm:$0xff]
        %v1761 = vld [vmem:[#allocation2 + $0x20] sm:$0xff]
        %v1762 = vld [vmem:[#allocation2 + $0x28] sm:$0xff]
        %v1763 = vld [vmem:[#allocation2 + $0x30] sm:$0xff]
        %v1764 = vld [vmem:[#allocation2 + $0x38] sm:$0xff]
        %v1765 = vld [vmem:[#allocation2 + $0x40] sm:$0xff]
        %v1766 = vld [vmem:[#allocation2 + $0x48] sm:$0xff]
        %v1767 = vld [vmem:[#allocation2 + $0x50] sm:$0xff]
        %1778 = vrot.lane.b32.xlu0 %v1758, 12
        %v1779 = vpop.permute.xlu0 %1778
        %1780 = vrot.lane.b32.xlu0 %v1759, 12
        %v1781 = vpop.permute.xlu0 %1780
        %1782 = vrot.lane.b32.xlu0 %v1760, 12
        %v1783 = vpop.permute.xlu0 %1782
        %1784 = vrot.lane.b32.xlu0 %v1761, 12
        %v1785 = vpop.permute.xlu0 %1784
        %1786 = vrot.lane.b32.xlu0 %v1762, 12
        %v1787 = vpop.permute.xlu0 %1786
        %1788 = vrot.lane.b32.xlu0 %v1763, 12
        %v1789 = vpop.permute.xlu0 %1788
        %1790 = vrot.lane.b32.xlu0 %v1764, 12
        %v1791 = vpop.permute.xlu0 %1790
        %1792 = vrot.lane.b32.xlu0 %v1765, 12
        %v1793 = vpop.permute.xlu0 %1792
        %1794 = vrot.lane.b32.xlu0 %v1766, 12
        %v1795 = vpop.permute.xlu0 %1794
        %1796 = vrot.lane.b32.xlu0 %v1767, 12
        %v1797 = vpop.permute.xlu0 %1796
        %vm1798 = vcmask 97280
        %v1799 = vsel %vm1798, %v1779, %v1781
        %v1800 = vsel %vm1798, %v1781, %v1783
        %v1801 = vsel %vm1798, %v1783, %v1785
        %v1802 = vsel %vm1798, %v1785, %v1787
        %v1803 = vsel %vm1798, %v1787, %v1789
        %v1804 = vsel %vm1798, %v1789, %v1791
        %v1805 = vsel %vm1798, %v1791, %v1793
        %v1806 = vsel %vm1798, %v1793, %v1795
        %v1807 = vsel %vm1798, %v1795, %v1797
        %1817 = vst [vmem:[#allocation3 + $0x5e8] sm:$0xff] %v1799
        %1818 = vst [vmem:[#allocation3 + $0x5f0] sm:$0xff] %v1800
        %1819 = vst [vmem:[#allocation3 + $0x5f8] sm:$0xff] %v1801
        %1820 = vst [vmem:[#allocation3 + $0x600] sm:$0xff] %v1802
        %1821 = vst [vmem:[#allocation3 + $0x608] sm:$0xff] %v1803
        %1822 = vst [vmem:[#allocation3 + $0x610] sm:$0xff] %v1804
        %1823 = vst [vmem:[#allocation3 + $0x618] sm:$0xff] %v1805
        %1824 = vst [vmem:[#allocation3 + $0x620] sm:$0xff] %v1806
        %1825 = vst [vmem:[#allocation3 + $0x628] sm:$0xff] %v1807
        %v1826 = vld [vmem:[#allocation2 + $0x8] sm:$0xff]
        %v1827 = vld [vmem:[#allocation2 + $0x10] sm:$0xff]
        %v1828 = vld [vmem:[#allocation2 + $0x18] sm:$0xff]
        %v1829 = vld [vmem:[#allocation2 + $0x20] sm:$0xff]
        %v1830 = vld [vmem:[#allocation2 + $0x28] sm:$0xff]
        %v1831 = vld [vmem:[#allocation2 + $0x30] sm:$0xff]
        %v1832 = vld [vmem:[#allocation2 + $0x38] sm:$0xff]
        %v1833 = vld [vmem:[#allocation2 + $0x40] sm:$0xff]
        %v1834 = vld [vmem:[#allocation2 + $0x48] sm:$0xff]
        %v1835 = vld [vmem:[#allocation2 + $0x50] sm:$0xff]
        %1846 = vrot.lane.b32.xlu0 %v1826, 11
        %v1847 = vpop.permute.xlu0 %1846
        %1848 = vrot.lane.b32.xlu0 %v1827, 11
        %v1849 = vpop.permute.xlu0 %1848
        %1850 = vrot.lane.b32.xlu0 %v1828, 11
        %v1851 = vpop.permute.xlu0 %1850
        %1852 = vrot.lane.b32.xlu0 %v1829, 11
        %v1853 = vpop.permute.xlu0 %1852
        %1854 = vrot.lane.b32.xlu0 %v1830, 11
        %v1855 = vpop.permute.xlu0 %1854
        %1856 = vrot.lane.b32.xlu0 %v1831, 11
        %v1857 = vpop.permute.xlu0 %1856
        %1858 = vrot.lane.b32.xlu0 %v1832, 11
        %v1859 = vpop.permute.xlu0 %1858
        %1860 = vrot.lane.b32.xlu0 %v1833, 11
        %v1861 = vpop.permute.xlu0 %1860
        %1862 = vrot.lane.b32.xlu0 %v1834, 11
        %v1863 = vpop.permute.xlu0 %1862
        %1864 = vrot.lane.b32.xlu0 %v1835, 11
        %v1865 = vpop.permute.xlu0 %1864
        %vm1866 = vcmask 89088
        %v1867 = vsel %vm1866, %v1847, %v1849
        %v1868 = vsel %vm1866, %v1849, %v1851
        %v1869 = vsel %vm1866, %v1851, %v1853
        %v1870 = vsel %vm1866, %v1853, %v1855
        %v1871 = vsel %vm1866, %v1855, %v1857
        %v1872 = vsel %vm1866, %v1857, %v1859
        %v1873 = vsel %vm1866, %v1859, %v1861
        %v1874 = vsel %vm1866, %v1861, %v1863
        %v1875 = vsel %vm1866, %v1863, %v1865
        %1885 = vst [vmem:[#allocation3 + $0x630] sm:$0xff] %v1867
        %1886 = vst [vmem:[#allocation3 + $0x638] sm:$0xff] %v1868
        %1887 = vst [vmem:[#allocation3 + $0x640] sm:$0xff] %v1869
        %1888 = vst [vmem:[#allocation3 + $0x648] sm:$0xff] %v1870
        %1889 = vst [vmem:[#allocation3 + $0x650] sm:$0xff] %v1871
        %1890 = vst [vmem:[#allocation3 + $0x658] sm:$0xff] %v1872
        %1891 = vst [vmem:[#allocation3 + $0x660] sm:$0xff] %v1873
        %1892 = vst [vmem:[#allocation3 + $0x668] sm:$0xff] %v1874
        %1893 = vst [vmem:[#allocation3 + $0x670] sm:$0xff] %v1875
        %v1894 = vld [vmem:[#allocation2 + $0x8] sm:$0xff]
        %v1895 = vld [vmem:[#allocation2 + $0x10] sm:$0xff]
        %v1896 = vld [vmem:[#allocation2 + $0x18] sm:$0xff]
        %v1897 = vld [vmem:[#allocation2 + $0x20] sm:$0xff]
        %v1898 = vld [vmem:[#allocation2 + $0x28] sm:$0xff]
        %v1899 = vld [vmem:[#allocation2 + $0x30] sm:$0xff]
        %v1900 = vld [vmem:[#allocation2 + $0x38] sm:$0xff]
        %v1901 = vld [vmem:[#allocation2 + $0x40] sm:$0xff]
        %v1902 = vld [vmem:[#allocation2 + $0x48] sm:$0xff]
        %v1903 = vld [vmem:[#allocation2 + $0x50] sm:$0xff]
        %1914 = vrot.lane.b32.xlu0 %v1894, 10
        %v1915 = vpop.permute.xlu0 %1914
        %1916 = vrot.lane.b32.xlu0 %v1895, 10
        %v1917 = vpop.permute.xlu0 %1916
        %1918 = vrot.lane.b32.xlu0 %v1896, 10
        %v1919 = vpop.permute.xlu0 %1918
        %1920 = vrot.lane.b32.xlu0 %v1897, 10
        %v1921 = vpop.permute.xlu0 %1920
        %1922 = vrot.lane.b32.xlu0 %v1898, 10
        %v1923 = vpop.permute.xlu0 %1922
        %1924 = vrot.lane.b32.xlu0 %v1899, 10
        %v1925 = vpop.permute.xlu0 %1924
        %1926 = vrot.lane.b32.xlu0 %v1900, 10
        %v1927 = vpop.permute.xlu0 %1926
        %1928 = vrot.lane.b32.xlu0 %v1901, 10
        %v1929 = vpop.permute.xlu0 %1928
        %1930 = vrot.lane.b32.xlu0 %v1902, 10
        %v1931 = vpop.permute.xlu0 %1930
        %1932 = vrot.lane.b32.xlu0 %v1903, 10
        %v1933 = vpop.permute.xlu0 %1932
        %vm1934 = vcmask 80896
        %v1935 = vsel %vm1934, %v1915, %v1917
        %v1936 = vsel %vm1934, %v1917, %v1919
        %v1937 = vsel %vm1934, %v1919, %v1921
        %v1938 = vsel %vm1934, %v1921, %v1923
        %v1939 = vsel %vm1934, %v1923, %v1925
        %v1940 = vsel %vm1934, %v1925, %v1927
        %v1941 = vsel %vm1934, %v1927, %v1929
        %v1942 = vsel %vm1934, %v1929, %v1931
        %v1943 = vsel %vm1934, %v1931, %v1933
        %1953 = vst [vmem:[#allocation3 + $0x678] sm:$0xff] %v1935
        %1954 = vst [vmem:[#allocation3 + $0x680] sm:$0xff] %v1936
        %1955 = vst [vmem:[#allocation3 + $0x688] sm:$0xff] %v1937
        %1956 = vst [vmem:[#allocation3 + $0x690] sm:$0xff] %v1938
        %1957 = vst [vmem:[#allocation3 + $0x698] sm:$0xff] %v1939
        %1958 = vst [vmem:[#allocation3 + $0x6a0] sm:$0xff] %v1940
        %1959 = vst [vmem:[#allocation3 + $0x6a8] sm:$0xff] %v1941
        %1960 = vst [vmem:[#allocation3 + $0x6b0] sm:$0xff] %v1942
        %1961 = vst [vmem:[#allocation3 + $0x6b8] sm:$0xff] %v1943
        %v1962 = vld [vmem:[#allocation2 + $0x8] sm:$0xff]
        %v1963 = vld [vmem:[#allocation2 + $0x10] sm:$0xff]
        %v1964 = vld [vmem:[#allocation2 + $0x18] sm:$0xff]
        %v1965 = vld [vmem:[#allocation2 + $0x20] sm:$0xff]
        %v1966 = vld [vmem:[#allocation2 + $0x28] sm:$0xff]
        %v1967 = vld [vmem:[#allocation2 + $0x30] sm:$0xff]
        %v1968 = vld [vmem:[#allocation2 + $0x38] sm:$0xff]
        %v1969 = vld [vmem:[#allocation2 + $0x40] sm:$0xff]
        %v1970 = vld [vmem:[#allocation2 + $0x48] sm:$0xff]
        %v1971 = vld [vmem:[#allocation2 + $0x50] sm:$0xff]
        %1982 = vrot.lane.b32.xlu0 %v1962, 2
        %v1983 = vpop.permute.xlu0 %1982
        %1984 = vrot.lane.b32.xlu0 %v1963, 2
        %v1985 = vpop.permute.xlu0 %1984
        %1986 = vrot.lane.b32.xlu0 %v1964, 2
        %v1987 = vpop.permute.xlu0 %1986
        %1988 = vrot.lane.b32.xlu0 %v1965, 2
        %v1989 = vpop.permute.xlu0 %1988
        %1990 = vrot.lane.b32.xlu0 %v1966, 2
        %v1991 = vpop.permute.xlu0 %1990
        %1992 = vrot.lane.b32.xlu0 %v1967, 2
        %v1993 = vpop.permute.xlu0 %1992
        %1994 = vrot.lane.b32.xlu0 %v1968, 2
        %v1995 = vpop.permute.xlu0 %1994
        %1996 = vrot.lane.b32.xlu0 %v1969, 2
        %v1997 = vpop.permute.xlu0 %1996
        %1998 = vrot.lane.b32.xlu0 %v1970, 2
        %v1999 = vpop.permute.xlu0 %1998
        %2000 = vrot.lane.b32.xlu0 %v1971, 2
        %v2001 = vpop.permute.xlu0 %2000
        %vm2002 = vcmask 15360
        %v2003 = vsel %vm2002, %v1983, %v1985
        %v2004 = vsel %vm2002, %v1985, %v1987
        %v2005 = vsel %vm2002, %v1987, %v1989
        %v2006 = vsel %vm2002, %v1989, %v1991
        %v2007 = vsel %vm2002, %v1991, %v1993
        %v2008 = vsel %vm2002, %v1993, %v1995
        %v2009 = vsel %vm2002, %v1995, %v1997
        %v2010 = vsel %vm2002, %v1997, %v1999
        %v2011 = vsel %vm2002, %v1999, %v2001
        %2021 = vst [vmem:[#allocation3 + $0x6c0] sm:$0xff] %v2003
        %2022 = vst [vmem:[#allocation3 + $0x6c8] sm:$0xff] %v2004
        %2023 = vst [vmem:[#allocation3 + $0x6d0] sm:$0xff] %v2005
        %2024 = vst [vmem:[#allocation3 + $0x6d8] sm:$0xff] %v2006
        %2025 = vst [vmem:[#allocation3 + $0x6e0] sm:$0xff] %v2007
        %2026 = vst [vmem:[#allocation3 + $0x6e8] sm:$0xff] %v2008
        %2027 = vst [vmem:[#allocation3 + $0x6f0] sm:$0xff] %v2009
        %2028 = vst [vmem:[#allocation3 + $0x6f8] sm:$0xff] %v2010
        %2029 = vst [vmem:[#allocation3 + $0x700] sm:$0xff] %v2011
        %v2030 = vld [vmem:[#allocation2 + $0x8] sm:$0xff]
        %v2031 = vld [vmem:[#allocation2 + $0x10] sm:$0xff]
        %v2032 = vld [vmem:[#allocation2 + $0x18] sm:$0xff]
        %v2033 = vld [vmem:[#allocation2 + $0x20] sm:$0xff]
        %v2034 = vld [vmem:[#allocation2 + $0x28] sm:$0xff]
        %v2035 = vld [vmem:[#allocation2 + $0x30] sm:$0xff]
        %v2036 = vld [vmem:[#allocation2 + $0x38] sm:$0xff]
        %v2037 = vld [vmem:[#allocation2 + $0x40] sm:$0xff]
        %v2038 = vld [vmem:[#allocation2 + $0x48] sm:$0xff]
        %v2039 = vld [vmem:[#allocation2 + $0x50] sm:$0xff]
        %2050 = vrot.lane.b32.xlu0 %v2030, 1
        %v2051 = vpop.permute.xlu0 %2050
        %2052 = vrot.lane.b32.xlu0 %v2031, 1
        %v2053 = vpop.permute.xlu0 %2052
        %2054 = vrot.lane.b32.xlu0 %v2032, 1
        %v2055 = vpop.permute.xlu0 %2054
        %2056 = vrot.lane.b32.xlu0 %v2033, 1
        %v2057 = vpop.permute.xlu0 %2056
        %2058 = vrot.lane.b32.xlu0 %v2034, 1
        %v2059 = vpop.permute.xlu0 %2058
        %2060 = vrot.lane.b32.xlu0 %v2035, 1
        %v2061 = vpop.permute.xlu0 %2060
        %2062 = vrot.lane.b32.xlu0 %v2036, 1
        %v2063 = vpop.permute.xlu0 %2062
        %2064 = vrot.lane.b32.xlu0 %v2037, 1
        %v2065 = vpop.permute.xlu0 %2064
        %2066 = vrot.lane.b32.xlu0 %v2038, 1
        %v2067 = vpop.permute.xlu0 %2066
        %2068 = vrot.lane.b32.xlu0 %v2039, 1
        %v2069 = vpop.permute.xlu0 %2068
        %vm2070 = vcmask 7168
        %v2071 = vsel %vm2070, %v2051, %v2053
        %v2072 = vsel %vm2070, %v2053, %v2055
        %v2073 = vsel %vm2070, %v2055, %v2057
        %v2074 = vsel %vm2070, %v2057, %v2059
        %v2075 = vsel %vm2070, %v2059, %v2061
        %v2076 = vsel %vm2070, %v2061, %v2063
        %v2077 = vsel %vm2070, %v2063, %v2065
        %v2078 = vsel %vm2070, %v2065, %v2067
        %v2079 = vsel %vm2070, %v2067, %v2069
        %2089 = vst [vmem:[#allocation3 + $0x708] sm:$0xff] %v2071
        %2090 = vst [vmem:[#allocation3 + $0x710] sm:$0xff] %v2072
        %2091 = vst [vmem:[#allocation3 + $0x718] sm:$0xff] %v2073
        %2092 = vst [vmem:[#allocation3 + $0x720] sm:$0xff] %v2074
        %2093 = vst [vmem:[#allocation3 + $0x728] sm:$0xff] %v2075
        %2094 = vst [vmem:[#allocation3 + $0x730] sm:$0xff] %v2076
        %2095 = vst [vmem:[#allocation3 + $0x738] sm:$0xff] %v2077
        %2096 = vst [vmem:[#allocation3 + $0x740] sm:$0xff] %v2078
        %2097 = vst [vmem:[#allocation3 + $0x748] sm:$0xff] %v2079
        %v2098 = vld [vmem:[#allocation2 + $0x10] sm:$0xff]
        %v2099 = vld [vmem:[#allocation2 + $0x18] sm:$0xff]
        %v2100 = vld [vmem:[#allocation2 + $0x20] sm:$0xff]
        %v2101 = vld [vmem:[#allocation2 + $0x28] sm:$0xff]
        %v2102 = vld [vmem:[#allocation2 + $0x30] sm:$0xff]
        %v2103 = vld [vmem:[#allocation2 + $0x38] sm:$0xff]
        %v2104 = vld [vmem:[#allocation2 + $0x40] sm:$0xff]
        %v2105 = vld [vmem:[#allocation2 + $0x48] sm:$0xff]
        %v2106 = vld [vmem:[#allocation2 + $0x50] sm:$0xff]
        %2107 = vst [vmem:[#allocation3 + $0x750] sm:$0xff] %v2098
        %2108 = vst [vmem:[#allocation3 + $0x758] sm:$0xff] %v2099
        %2109 = vst [vmem:[#allocation3 + $0x760] sm:$0xff] %v2100
        %2110 = vst [vmem:[#allocation3 + $0x768] sm:$0xff] %v2101
        %2111 = vst [vmem:[#allocation3 + $0x770] sm:$0xff] %v2102
        %2112 = vst [vmem:[#allocation3 + $0x778] sm:$0xff] %v2103
        %2113 = vst [vmem:[#allocation3 + $0x780] sm:$0xff] %v2104
        %2114 = vst [vmem:[#allocation3 + $0x788] sm:$0xff] %v2105
        %2115 = vst [vmem:[#allocation3 + $0x790] sm:$0xff] %v2106
        %v2116 = vld [vmem:[#allocation8] sm:$0xff]
        %v2117 = vld [vmem:[#allocation8 + $0x8] sm:$0xff]
        %v2118 = vld [vmem:[#allocation8 + $0x10] sm:$0xff]
        %v2119 = vld [vmem:[#allocation8 + $0x18] sm:$0xff]
        %v2120 = vld [vmem:[#allocation3] sm:$0xff]
        %v2121 = vld [vmem:[#allocation3 + $0x8] sm:$0xff]
        %v2122 = vld [vmem:[#allocation3 + $0x10] sm:$0xff]
        %v2123 = vld [vmem:[#allocation3 + $0x18] sm:$0xff]
        %v2124 = vld [vmem:[#allocation3 + $0x20] sm:$0xff]
        %v2125 = vld [vmem:[#allocation3 + $0x28] sm:$0xff]
        %v2126 = vld [vmem:[#allocation3 + $0x30] sm:$0xff]
        %v2127 = vld [vmem:[#allocation3 + $0x38] sm:$0xff]
        %v2128 = vld [vmem:[#allocation3 + $0x40] sm:$0xff]
        %v2129 = vld [vmem:[#allocation3 + $0x48] sm:$0xff]
        %v2130 = vld [vmem:[#allocation3 + $0x50] sm:$0xff]
        %v2131 = vld [vmem:[#allocation3 + $0x58] sm:$0xff]
        %v2132 = vld [vmem:[#allocation3 + $0x60] sm:$0xff]
        %v2133 = vld [vmem:[#allocation3 + $0x68] sm:$0xff]
        %v2134 = vld [vmem:[#allocation3 + $0x70] sm:$0xff]
        %v2135 = vld [vmem:[#allocation3 + $0x78] sm:$0xff]
        %v2136 = vld [vmem:[#allocation3 + $0x80] sm:$0xff]
        %v2137 = vld [vmem:[#allocation3 + $0x88] sm:$0xff]
        %v2138 = vld [vmem:[#allocation3 + $0x90] sm:$0xff]
        %v2139 = vld [vmem:[#allocation3 + $0x98] sm:$0xff]
        %v2140 = vld [vmem:[#allocation3 + $0xa0] sm:$0xff]
        %v2141 = vld [vmem:[#allocation3 + $0xa8] sm:$0xff]
        %v2142 = vld [vmem:[#allocation3 + $0xb0] sm:$0xff]
        %v2143 = vld [vmem:[#allocation3 + $0xb8] sm:$0xff]
        %v2144 = vld [vmem:[#allocation3 + $0xc0] sm:$0xff]
        %v2145 = vld [vmem:[#allocation3 + $0xc8] sm:$0xff]
        %v2146 = vld [vmem:[#allocation3 + $0xd0] sm:$0xff]
        %v2147 = vld [vmem:[#allocation3 + $0xd8] sm:$0xff]
        %v2148 = vld [vmem:[#allocation3 + $0xe0] sm:$0xff]
        %v2149 = vld [vmem:[#allocation3 + $0xe8] sm:$0xff]
        %v2150 = vld [vmem:[#allocation3 + $0xf0] sm:$0xff]
        %v2151 = vld [vmem:[#allocation3 + $0xf8] sm:$0xff]
        %v2152 = vld [vmem:[#allocation3 + $0x100] sm:$0xff]
        %v2153 = vld [vmem:[#allocation3 + $0x108] sm:$0xff]
        %v2154 = vld [vmem:[#allocation3 + $0x110] sm:$0xff]
        %v2155 = vld [vmem:[#allocation3 + $0x118] sm:$0xff]
        %v2156 = vld [vmem:[#allocation3 + $0x120] sm:$0xff]
        %v2157 = vld [vmem:[#allocation3 + $0x128] sm:$0xff]
        %v2158 = vld [vmem:[#allocation3 + $0x130] sm:$0xff]
        %v2159 = vld [vmem:[#allocation3 + $0x138] sm:$0xff]
        %v2160 = vld [vmem:[#allocation3 + $0x140] sm:$0xff]
        %v2161 = vld [vmem:[#allocation3 + $0x148] sm:$0xff]
        %v2162 = vld [vmem:[#allocation3 + $0x150] sm:$0xff]
        %v2163 = vld [vmem:[#allocation3 + $0x158] sm:$0xff]
        %v2164 = vld [vmem:[#allocation3 + $0x160] sm:$0xff]
        %v2165 = vld [vmem:[#allocation3 + $0x168] sm:$0xff]
        %v2166 = vld [vmem:[#allocation3 + $0x170] sm:$0xff]
        %v2167 = vld [vmem:[#allocation3 + $0x178] sm:$0xff]
        %v2168 = vld [vmem:[#allocation3 + $0x180] sm:$0xff]
        %v2169 = vld [vmem:[#allocation3 + $0x188] sm:$0xff]
        %v2170 = vld [vmem:[#allocation3 + $0x190] sm:$0xff]
        %v2171 = vld [vmem:[#allocation3 + $0x198] sm:$0xff]
        %v2172 = vld [vmem:[#allocation3 + $0x1a0] sm:$0xff]
        %v2173 = vld [vmem:[#allocation3 + $0x1a8] sm:$0xff]
        %v2174 = vld [vmem:[#allocation3 + $0x1b0] sm:$0xff]
        %v2175 = vld [vmem:[#allocation3 + $0x1b8] sm:$0xff]
        %v2176 = vld [vmem:[#allocation3 + $0x1c0] sm:$0xff]
        %v2177 = vld [vmem:[#allocation3 + $0x1c8] sm:$0xff]
        %v2178 = vld [vmem:[#allocation3 + $0x1d0] sm:$0xff]
        %v2179 = vld [vmem:[#allocation3 + $0x1d8] sm:$0xff]
        %v2180 = vld [vmem:[#allocation3 + $0x1e0] sm:$0xff]
        %v2181 = vld [vmem:[#allocation3 + $0x1e8] sm:$0xff]
        %v2182 = vld [vmem:[#allocation3 + $0x1f0] sm:$0xff]
        %v2183 = vld [vmem:[#allocation3 + $0x1f8] sm:$0xff]
        %v2184 = vld [vmem:[#allocation3 + $0x200] sm:$0xff]
        %v2185 = vld [vmem:[#allocation3 + $0x208] sm:$0xff]
        %v2186 = vld [vmem:[#allocation3 + $0x210] sm:$0xff]
        %v2187 = vld [vmem:[#allocation3 + $0x218] sm:$0xff]
        %v2188 = vld [vmem:[#allocation3 + $0x220] sm:$0xff]
        %v2189 = vld [vmem:[#allocation3 + $0x228] sm:$0xff]
        %v2190 = vld [vmem:[#allocation3 + $0x230] sm:$0xff]
        %v2191 = vld [vmem:[#allocation3 + $0x238] sm:$0xff]
        %v2192 = vld [vmem:[#allocation3 + $0x240] sm:$0xff]
        %v2193 = vld [vmem:[#allocation3 + $0x248] sm:$0xff]
        %v2194 = vld [vmem:[#allocation3 + $0x250] sm:$0xff]
        %v2195 = vld [vmem:[#allocation3 + $0x258] sm:$0xff]
        %v2196 = vld [vmem:[#allocation3 + $0x260] sm:$0xff]
        %v2197 = vld [vmem:[#allocation3 + $0x268] sm:$0xff]
        %v2198 = vld [vmem:[#allocation3 + $0x270] sm:$0xff]
        %v2199 = vld [vmem:[#allocation3 + $0x278] sm:$0xff]
        %v2200 = vld [vmem:[#allocation3 + $0x280] sm:$0xff]
        %v2201 = vld [vmem:[#allocation3 + $0x288] sm:$0xff]
        %v2202 = vld [vmem:[#allocation3 + $0x290] sm:$0xff]
        %v2203 = vld [vmem:[#allocation3 + $0x298] sm:$0xff]
        %v2204 = vld [vmem:[#allocation3 + $0x2a0] sm:$0xff]
        %v2205 = vld [vmem:[#allocation3 + $0x2a8] sm:$0xff]
        %v2206 = vld [vmem:[#allocation3 + $0x2b0] sm:$0xff]
        %v2207 = vld [vmem:[#allocation3 + $0x2b8] sm:$0xff]
        %v2208 = vld [vmem:[#allocation3 + $0x2c0] sm:$0xff]
        %v2209 = vld [vmem:[#allocation3 + $0x2c8] sm:$0xff]
        %v2210 = vld [vmem:[#allocation3 + $0x2d0] sm:$0xff]
        %v2211 = vld [vmem:[#allocation3 + $0x2d8] sm:$0xff]
        %v2212 = vld [vmem:[#allocation3 + $0x2e0] sm:$0xff]
        %v2213 = vld [vmem:[#allocation3 + $0x2e8] sm:$0xff]
        %v2214 = vld [vmem:[#allocation3 + $0x2f0] sm:$0xff]
        %v2215 = vld [vmem:[#allocation3 + $0x2f8] sm:$0xff]
        %v2216 = vld [vmem:[#allocation3 + $0x300] sm:$0xff]
        %v2217 = vld [vmem:[#allocation3 + $0x308] sm:$0xff]
        %v2218 = vld [vmem:[#allocation3 + $0x310] sm:$0xff]
        %v2219 = vld [vmem:[#allocation3 + $0x318] sm:$0xff]
        %v2220 = vld [vmem:[#allocation3 + $0x320] sm:$0xff]
        %v2221 = vld [vmem:[#allocation3 + $0x328] sm:$0xff]
        %v2222 = vld [vmem:[#allocation3 + $0x330] sm:$0xff]
        %v2223 = vld [vmem:[#allocation3 + $0x338] sm:$0xff]
        %v2224 = vld [vmem:[#allocation3 + $0x340] sm:$0xff]
        %v2225 = vld [vmem:[#allocation3 + $0x348] sm:$0xff]
        %v2226 = vld [vmem:[#allocation3 + $0x350] sm:$0xff]
        %v2227 = vld [vmem:[#allocation3 + $0x358] sm:$0xff]
        %v2228 = vld [vmem:[#allocation3 + $0x360] sm:$0xff]
        %v2229 = vld [vmem:[#allocation3 + $0x368] sm:$0xff]
        %v2230 = vld [vmem:[#allocation3 + $0x370] sm:$0xff]
        %v2231 = vld [vmem:[#allocation3 + $0x378] sm:$0xff]
        %v2232 = vld [vmem:[#allocation3 + $0x380] sm:$0xff]
        %v2233 = vld [vmem:[#allocation3 + $0x388] sm:$0xff]
        %v2234 = vld [vmem:[#allocation3 + $0x390] sm:$0xff]
        %v2235 = vld [vmem:[#allocation3 + $0x398] sm:$0xff]
        %v2236 = vld [vmem:[#allocation3 + $0x3a0] sm:$0xff]
        %v2237 = vld [vmem:[#allocation3 + $0x3a8] sm:$0xff]
        %v2238 = vld [vmem:[#allocation3 + $0x3b0] sm:$0xff]
        %v2239 = vld [vmem:[#allocation3 + $0x3b8] sm:$0xff]
        %v2240 = vld [vmem:[#allocation3 + $0x3c0] sm:$0xff]
        %v2241 = vld [vmem:[#allocation3 + $0x3c8] sm:$0xff]
        %v2242 = vld [vmem:[#allocation3 + $0x3d0] sm:$0xff]
        %v2243 = vld [vmem:[#allocation3 + $0x3d8] sm:$0xff]
        %v2244 = vld [vmem:[#allocation3 + $0x3e0] sm:$0xff]
        %v2245 = vld [vmem:[#allocation3 + $0x3e8] sm:$0xff]
        %v2246 = vld [vmem:[#allocation3 + $0x3f0] sm:$0xff]
        %v2247 = vld [vmem:[#allocation3 + $0x3f8] sm:$0xff]
        %v2248 = vld [vmem:[#allocation3 + $0x400] sm:$0xff]
        %v2249 = vld [vmem:[#allocation3 + $0x408] sm:$0xff]
        %v2250 = vld [vmem:[#allocation3 + $0x410] sm:$0xff]
        %v2251 = vld [vmem:[#allocation3 + $0x418] sm:$0xff]
        %v2252 = vld [vmem:[#allocation3 + $0x420] sm:$0xff]
        %v2253 = vld [vmem:[#allocation3 + $0x428] sm:$0xff]
        %v2254 = vld [vmem:[#allocation3 + $0x430] sm:$0xff]
        %v2255 = vld [vmem:[#allocation3 + $0x438] sm:$0xff]
        %v2256 = vld [vmem:[#allocation3 + $0x440] sm:$0xff]
        %v2257 = vld [vmem:[#allocation3 + $0x448] sm:$0xff]
        %v2258 = vld [vmem:[#allocation3 + $0x450] sm:$0xff]
        %v2259 = vld [vmem:[#allocation3 + $0x458] sm:$0xff]
        %v2260 = vld [vmem:[#allocation3 + $0x460] sm:$0xff]
        %v2261 = vld [vmem:[#allocation3 + $0x468] sm:$0xff]
        %v2262 = vld [vmem:[#allocation3 + $0x470] sm:$0xff]
        %v2263 = vld [vmem:[#allocation3 + $0x478] sm:$0xff]
        %v2264 = vld [vmem:[#allocation3 + $0x480] sm:$0xff]
        %v2265 = vld [vmem:[#allocation3 + $0x488] sm:$0xff]
        %v2266 = vld [vmem:[#allocation3 + $0x490] sm:$0xff]
        %v2267 = vld [vmem:[#allocation3 + $0x498] sm:$0xff]
        %v2268 = vld [vmem:[#allocation3 + $0x4a0] sm:$0xff]
        %v2269 = vld [vmem:[#allocation3 + $0x4a8] sm:$0xff]
        %v2270 = vld [vmem:[#allocation3 + $0x4b0] sm:$0xff]
        %v2271 = vld [vmem:[#allocation3 + $0x4b8] sm:$0xff]
        %v2272 = vld [vmem:[#allocation3 + $0x4c0] sm:$0xff]
        %v2273 = vld [vmem:[#allocation3 + $0x4c8] sm:$0xff]
        %v2274 = vld [vmem:[#allocation3 + $0x4d0] sm:$0xff]
        %v2275 = vld [vmem:[#allocation3 + $0x4d8] sm:$0xff]
        %v2276 = vld [vmem:[#allocation3 + $0x4e0] sm:$0xff]
        %v2277 = vld [vmem:[#allocation3 + $0x4e8] sm:$0xff]
        %v2278 = vld [vmem:[#allocation3 + $0x4f0] sm:$0xff]
        %v2279 = vld [vmem:[#allocation3 + $0x4f8] sm:$0xff]
        %v2280 = vld [vmem:[#allocation3 + $0x500] sm:$0xff]
        %v2281 = vld [vmem:[#allocation3 + $0x508] sm:$0xff]
        %v2282 = vld [vmem:[#allocation3 + $0x510] sm:$0xff]
        %v2283 = vld [vmem:[#allocation3 + $0x518] sm:$0xff]
        %v2284 = vld [vmem:[#allocation3 + $0x520] sm:$0xff]
        %v2285 = vld [vmem:[#allocation3 + $0x528] sm:$0xff]
        %v2286 = vld [vmem:[#allocation3 + $0x530] sm:$0xff]
        %v2287 = vld [vmem:[#allocation3 + $0x538] sm:$0xff]
        %v2288 = vld [vmem:[#allocation3 + $0x540] sm:$0xff]
        %v2289 = vld [vmem:[#allocation3 + $0x548] sm:$0xff]
        %v2290 = vld [vmem:[#allocation3 + $0x550] sm:$0xff]
        %v2291 = vld [vmem:[#allocation3 + $0x558] sm:$0xff]
        %v2292 = vld [vmem:[#allocation3 + $0x560] sm:$0xff]
        %v2293 = vld [vmem:[#allocation3 + $0x568] sm:$0xff]
        %v2294 = vld [vmem:[#allocation3 + $0x570] sm:$0xff]
        %v2295 = vld [vmem:[#allocation3 + $0x578] sm:$0xff]
        %v2296 = vld [vmem:[#allocation3 + $0x580] sm:$0xff]
        %v2297 = vld [vmem:[#allocation3 + $0x588] sm:$0xff]
        %v2298 = vld [vmem:[#allocation3 + $0x590] sm:$0xff]
        %v2299 = vld [vmem:[#allocation3 + $0x598] sm:$0xff]
        %v2300 = vld [vmem:[#allocation3 + $0x5a0] sm:$0xff]
        %v2301 = vld [vmem:[#allocation3 + $0x5a8] sm:$0xff]
        %v2302 = vld [vmem:[#allocation3 + $0x5b0] sm:$0xff]
        %v2303 = vld [vmem:[#allocation3 + $0x5b8] sm:$0xff]
        %v2304 = vld [vmem:[#allocation3 + $0x5c0] sm:$0xff]
        %v2305 = vld [vmem:[#allocation3 + $0x5c8] sm:$0xff]
        %v2306 = vld [vmem:[#allocation3 + $0x5d0] sm:$0xff]
        %v2307 = vld [vmem:[#allocation3 + $0x5d8] sm:$0xff]
        %v2308 = vld [vmem:[#allocation3 + $0x5e0] sm:$0xff]
        %v2309 = vld [vmem:[#allocation3 + $0x5e8] sm:$0xff]
        %v2310 = vld [vmem:[#allocation3 + $0x5f0] sm:$0xff]
        %v2311 = vld [vmem:[#allocation3 + $0x5f8] sm:$0xff]
        %v2312 = vld [vmem:[#allocation3 + $0x600] sm:$0xff]
        %v2313 = vld [vmem:[#allocation3 + $0x608] sm:$0xff]
        %v2314 = vld [vmem:[#allocation3 + $0x610] sm:$0xff]
        %v2315 = vld [vmem:[#allocation3 + $0x618] sm:$0xff]
        %v2316 = vld [vmem:[#allocation3 + $0x620] sm:$0xff]
        %v2317 = vld [vmem:[#allocation3 + $0x628] sm:$0xff]
        %v2318 = vld [vmem:[#allocation3 + $0x630] sm:$0xff]
        %v2319 = vld [vmem:[#allocation3 + $0x638] sm:$0xff]
        %v2320 = vld [vmem:[#allocation3 + $0x640] sm:$0xff]
        %v2321 = vld [vmem:[#allocation3 + $0x648] sm:$0xff]
        %v2322 = vld [vmem:[#allocation3 + $0x650] sm:$0xff]
        %v2323 = vld [vmem:[#allocation3 + $0x658] sm:$0xff]
        %v2324 = vld [vmem:[#allocation3 + $0x660] sm:$0xff]
        %v2325 = vld [vmem:[#allocation3 + $0x668] sm:$0xff]
        %v2326 = vld [vmem:[#allocation3 + $0x670] sm:$0xff]
        %v2327 = vld [vmem:[#allocation3 + $0x678] sm:$0xff]
        %v2328 = vld [vmem:[#allocation3 + $0x680] sm:$0xff]
        %v2329 = vld [vmem:[#allocation3 + $0x688] sm:$0xff]
        %v2330 = vld [vmem:[#allocation3 + $0x690] sm:$0xff]
        %v2331 = vld [vmem:[#allocation3 + $0x698] sm:$0xff]
        %v2332 = vld [vmem:[#allocation3 + $0x6a0] sm:$0xff]
        %v2333 = vld [vmem:[#allocation3 + $0x6a8] sm:$0xff]
        %v2334 = vld [vmem:[#allocation3 + $0x6b0] sm:$0xff]
        %v2335 = vld [vmem:[#allocation3 + $0x6b8] sm:$0xff]
        %v2336 = vld [vmem:[#allocation3 + $0x6c0] sm:$0xff]
        %v2337 = vld [vmem:[#allocation3 + $0x6c8] sm:$0xff]
        %v2338 = vld [vmem:[#allocation3 + $0x6d0] sm:$0xff]
        %v2339 = vld [vmem:[#allocation3 + $0x6d8] sm:$0xff]
        %v2340 = vld [vmem:[#allocation3 + $0x6e0] sm:$0xff]
        %v2341 = vld [vmem:[#allocation3 + $0x6e8] sm:$0xff]
        %v2342 = vld [vmem:[#allocation3 + $0x6f0] sm:$0xff]
        %v2343 = vld [vmem:[#allocation3 + $0x6f8] sm:$0xff]
        %v2344 = vld [vmem:[#allocation3 + $0x700] sm:$0xff]
        %v2345 = vld [vmem:[#allocation3 + $0x708] sm:$0xff]
        %v2346 = vld [vmem:[#allocation3 + $0x710] sm:$0xff]
        %v2347 = vld [vmem:[#allocation3 + $0x718] sm:$0xff]
        %v2348 = vld [vmem:[#allocation3 + $0x720] sm:$0xff]
        %v2349 = vld [vmem:[#allocation3 + $0x728] sm:$0xff]
        %v2350 = vld [vmem:[#allocation3 + $0x730] sm:$0xff]
        %v2351 = vld [vmem:[#allocation3 + $0x738] sm:$0xff]
        %v2352 = vld [vmem:[#allocation3 + $0x740] sm:$0xff]
        %v2353 = vld [vmem:[#allocation3 + $0x748] sm:$0xff]
        %v2354 = vld [vmem:[#allocation3 + $0x750] sm:$0xff]
        %v2355 = vld [vmem:[#allocation3 + $0x758] sm:$0xff]
        %v2356 = vld [vmem:[#allocation3 + $0x760] sm:$0xff]
        %v2357 = vld [vmem:[#allocation3 + $0x768] sm:$0xff]
        %v2358 = vld [vmem:[#allocation3 + $0x770] sm:$0xff]
        %v2359 = vld [vmem:[#allocation3 + $0x778] sm:$0xff]
        %v2360 = vld [vmem:[#allocation3 + $0x780] sm:$0xff]
        %v2361 = vld [vmem:[#allocation3 + $0x788] sm:$0xff]
        %v2362 = vld [vmem:[#allocation3 + $0x790] sm:$0xff]
        %v2363 = vld [vmem:[%s2] sm:$0xff]
        %v2364 = vld [vmem:[%s2 + $0x8] sm:$0xff]
        %2366 = vset.pattern.permute.xlu0 0
        %2367 = vperm.xlu0 %2366, %v2363
        %v2368 = vpop.permute.xlu0 %2367
        %2371 = vset.pattern.permute.xlu0 0
        %2372 = vperm.xlu0 %2371, %v2364
        %v2373 = vpop.permute.xlu0 %2372
        %v2379 = vunpack.c.l.b16 %v2116
        %v2380 = vunpack.c.h.b16 %v2116
        %v2381 = vunpack.c.l.b16 %v2117
        %v2382 = vunpack.c.h.b16 %v2117
        %v2383 = vunpack.c.l.b16 %v2118
        %v2384 = vunpack.c.h.b16 %v2118
        %v2385 = vunpack.c.l.b16 %v2119
        %v2386 = vunpack.c.h.b16 %v2119
        %v2387 = vpack.c.b16 %v2383, %v2379
        %v2388 = vpack.c.b16 %v2384, %v2380
        %v2389 = vpack.c.b16 %v2385, %v2381
        %v2390 = vpack.c.b16 %v2386, %v2382
        %vm2394 = vcmask 392192
        %v2396 = vsel %vm2394, %v2390, 0
        %2398 = vmatprep.subr.bf16.mxu0 %v2121
        %2399 = vmatpush1.bf16.msra.mxu0 %v2120
        %2400 = vmatprep.subr.bf16.mxu0 %v2130
        %2401 = vmatpush1.bf16.msra.mxu0 %v2129
        %2402 = vmatprep.subr.bf16.mxu0 %v2139
        %2403 = vmatpush1.bf16.msra.mxu0 %v2138
        %2404 = vmatprep.subr.bf16.mxu0 %v2148
        %2405 = vmatpush1.bf16.msra.mxu0 %v2147
        %2406 = vmatprep.subr.bf16.mxu0 %v2157
        %2407 = vmatpush1.bf16.msra.mxu0 %v2156
        %2408 = vmatprep.subr.bf16.mxu0 %v2166
        %2409 = vmatpush1.bf16.msra.mxu0 %v2165
        %2410 = vmatprep.subr.bf16.mxu0 %v2175
        %2411 = vmatpush1.bf16.msra.mxu0 %v2174
        %2412 = vmatprep.subr.bf16.mxu0 %v2184
        %2413 = vmatpush1.bf16.msra.mxu0 %v2183
        %2414 = vmatprep.subr.bf16.mxu0 %v2193
        %2415 = vmatpush1.bf16.msra.mxu0 %v2192
        %2416 = vmatprep.subr.bf16.mxu0 %v2202
        %2417 = vmatpush1.bf16.msra.mxu0 %v2201
        %2418 = vmatprep.subr.bf16.mxu0 %v2211
        %2419 = vmatpush1.bf16.msra.mxu0 %v2210
        %2420 = vmatprep.subr.bf16.mxu0 %v2220
        %2421 = vmatpush1.bf16.msra.mxu0 %v2219
        %2422 = vmatprep.subr.bf16.mxu0 %v2229
        %2423 = vmatpush1.bf16.msra.mxu0 %v2228
        %2424 = vmatprep.subr.bf16.mxu0 %v2238
        %2425 = vmatpush1.bf16.msra.mxu0 %v2237
        %2426 = vmatprep.subr.bf16.mxu0 %v2247
        %2427 = vmatpush1.bf16.msra.mxu0 %v2246
        %2428 = vmatprep.subr.bf16.mxu0 %v2256
        %2429 = vmatpush1.bf16.msra.mxu0 %v2255
        %2430 = vmatprep.mubr.bf16.mxu0 %v2388
        %2431 = vmatmul.mubr.bf16.gmra.mrb[0].mxu0 %v2387
        %v2432 = vpop.f32.mrb[0].mxu0
        %v2433 = vadd.f32 %v2368, %v2432
        %v2434 = vpop.f32.mrb[0].mxu0
        %v2435 = vadd.f32 %v2368, %v2434
        %v2436 = vpop.f32.mrb[0].mxu0
        %v2437 = vadd.f32 %v2373, %v2436
        %v2438 = vpop.f32.mrb[0].mxu0
        %v2439 = vadd.f32 %v2373, %v2438
        %2440 = vdwg.mxu0
        %2441 = vmatprep.subr.bf16.mxu0 %v2265
        %2442 = vmatpush1.bf16.msra.mxu0 %v2264
        %2443 = vmatprep.subr.bf16.mxu0 %v2274
        %2444 = vmatpush1.bf16.msra.mxu0 %v2273
        %2445 = vmatprep.subr.bf16.mxu0 %v2283
        %2446 = vmatpush1.bf16.msra.mxu0 %v2282
        %2447 = vmatprep.subr.bf16.mxu0 %v2292
        %2448 = vmatpush1.bf16.msra.mxu0 %v2291
        %2449 = vmatprep.subr.bf16.mxu0 %v2301
        %2450 = vmatpush1.bf16.msra.mxu0 %v2300
        %2451 = vmatprep.subr.bf16.mxu0 %v2310
        %2452 = vmatpush1.bf16.msra.mxu0 %v2309
        %2453 = vmatprep.subr.bf16.mxu0 %v2319
        %2454 = vmatpush1.bf16.msra.mxu0 %v2318
        %2455 = vmatprep.subr.bf16.mxu0 %v2328
        %2456 = vmatpush1.bf16.msra.mxu0 %v2327
        %2457 = vmatprep.subr.bf16.mxu0 %v2337
        %2458 = vmatpush1.bf16.msra.mxu0 %v2336
        %2459 = vmatprep.subr.bf16.mxu0 %v2346
        %2460 = vmatpush1.bf16.msra.mxu0 %v2345
        %2461 = vmatprep.subr.bf16.mxu0 %v2355
        %2462 = vmatpush1.bf16.msra.mxu0 %v2354
        %2463 = vmatprep.subr.bf16.mxu0 0
        %2464 = vmatpush1.bf16.msra.mxu0 0
        %2465 = vmatprep.subr.bf16.mxu0 0
        %2466 = vmatpush1.bf16.msra.mxu0 0
        %2467 = vmatprep.subr.bf16.mxu0 0
        %2468 = vmatpush1.bf16.msra.mxu0 0
        %2469 = vmatprep.subr.bf16.mxu0 0
        %2470 = vmatpush1.bf16.msra.mxu0 0
        %2471 = vmatprep.subr.bf16.mxu0 0
        %2472 = vmatpush1.bf16.msra.mxu0 0
        %2473 = vmatprep.mubr.bf16.mxu0 %v2396
        %2474 = vmatmul.mubr.bf16.gmra.mrb[0].mxu0 %v2389
        %v2475 = vpop.f32.mrb[0].mxu0
        %v2476 = vadd.f32 %v2433, %v2475
        %v2477 = vpop.f32.mrb[0].mxu0
        %v2478 = vadd.f32 %v2435, %v2477
        %v2479 = vpop.f32.mrb[0].mxu0
        %v2480 = vadd.f32 %v2437, %v2479
        %v2481 = vpop.f32.mrb[0].mxu0
        %v2482 = vadd.f32 %v2439, %v2481
        %2483 = vdwg.mxu0
        %2484 = vmatprep.subr.bf16.mxu0 %v2123
        %2485 = vmatpush1.bf16.msra.mxu0 %v2122
        %2486 = vmatprep.subr.bf16.mxu0 %v2132
        %2487 = vmatpush1.bf16.msra.mxu0 %v2131
        %2488 = vmatprep.subr.bf16.mxu0 %v2141
        %2489 = vmatpush1.bf16.msra.mxu0 %v2140
        %2490 = vmatprep.subr.bf16.mxu0 %v2150
        %2491 = vmatpush1.bf16.msra.mxu0 %v2149
        %2492 = vmatprep.subr.bf16.mxu0 %v2159
        %2493 = vmatpush1.bf16.msra.mxu0 %v2158
        %2494 = vmatprep.subr.bf16.mxu0 %v2168
        %2495 = vmatpush1.bf16.msra.mxu0 %v2167
        %2496 = vmatprep.subr.bf16.mxu0 %v2177
        %2497 = vmatpush1.bf16.msra.mxu0 %v2176
        %2498 = vmatprep.subr.bf16.mxu0 %v2186
        %2499 = vmatpush1.bf16.msra.mxu0 %v2185
        %2500 = vmatprep.subr.bf16.mxu0 %v2195
        %2501 = vmatpush1.bf16.msra.mxu0 %v2194
        %2502 = vmatprep.subr.bf16.mxu0 %v2204
        %2503 = vmatpush1.bf16.msra.mxu0 %v2203
        %2504 = vmatprep.subr.bf16.mxu0 %v2213
        %2505 = vmatpush1.bf16.msra.mxu0 %v2212
        %2506 = vmatprep.subr.bf16.mxu0 %v2222
        %2507 = vmatpush1.bf16.msra.mxu0 %v2221
        %2508 = vmatprep.subr.bf16.mxu0 %v2231
        %2509 = vmatpush1.bf16.msra.mxu0 %v2230
        %2510 = vmatprep.subr.bf16.mxu0 %v2240
        %2511 = vmatpush1.bf16.msra.mxu0 %v2239
        %2512 = vmatprep.subr.bf16.mxu0 %v2249
        %2513 = vmatpush1.bf16.msra.mxu0 %v2248
        %2514 = vmatprep.subr.bf16.mxu0 %v2258
        %2515 = vmatpush1.bf16.msra.mxu0 %v2257
        %2516 = vmatprep.mubr.bf16.mxu0 %v2388
        %2517 = vmatmul.mubr.bf16.gmra.mrb[0].mxu0 %v2387
        %v2518 = vpop.f32.mrb[0].mxu0
        %v2519 = vadd.f32 %v2368, %v2518
        %v2520 = vpop.f32.mrb[0].mxu0
        %v2521 = vadd.f32 %v2368, %v2520
        %v2522 = vpop.f32.mrb[0].mxu0
        %v2523 = vadd.f32 %v2373, %v2522
        %v2524 = vpop.f32.mrb[0].mxu0
        %v2525 = vadd.f32 %v2373, %v2524
        %2526 = vdwg.mxu0
        %2527 = vmatprep.subr.bf16.mxu0 %v2267
        %2528 = vmatpush1.bf16.msra.mxu0 %v2266
        %2529 = vmatprep.subr.bf16.mxu0 %v2276
        %2530 = vmatpush1.bf16.msra.mxu0 %v2275
        %2531 = vmatprep.subr.bf16.mxu0 %v2285
        %2532 = vmatpush1.bf16.msra.mxu0 %v2284
        %2533 = vmatprep.subr.bf16.mxu0 %v2294
        %2534 = vmatpush1.bf16.msra.mxu0 %v2293
        %2535 = vmatprep.subr.bf16.mxu0 %v2303
        %2536 = vmatpush1.bf16.msra.mxu0 %v2302
        %2537 = vmatprep.subr.bf16.mxu0 %v2312
        %2538 = vmatpush1.bf16.msra.mxu0 %v2311
        %2539 = vmatprep.subr.bf16.mxu0 %v2321
        %2540 = vmatpush1.bf16.msra.mxu0 %v2320
        %2541 = vmatprep.subr.bf16.mxu0 %v2330
        %2542 = vmatpush1.bf16.msra.mxu0 %v2329
        %2543 = vmatprep.subr.bf16.mxu0 %v2339
        %2544 = vmatpush1.bf16.msra.mxu0 %v2338
        %2545 = vmatprep.subr.bf16.mxu0 %v2348
        %2546 = vmatpush1.bf16.msra.mxu0 %v2347
        %2547 = vmatprep.subr.bf16.mxu0 %v2357
        %2548 = vmatpush1.bf16.msra.mxu0 %v2356
        %2549 = vmatprep.subr.bf16.mxu0 0
        %2550 = vmatpush1.bf16.msra.mxu0 0
        %2551 = vmatprep.subr.bf16.mxu0 0
        %2552 = vmatpush1.bf16.msra.mxu0 0
        %2553 = vmatprep.subr.bf16.mxu0 0
        %2554 = vmatpush1.bf16.msra.mxu0 0
        %2555 = vmatprep.subr.bf16.mxu0 0
        %2556 = vmatpush1.bf16.msra.mxu0 0
        %2557 = vmatprep.subr.bf16.mxu0 0
        %2558 = vmatpush1.bf16.msra.mxu0 0
        %2559 = vmatprep.mubr.bf16.mxu0 %v2396
        %2560 = vmatmul.mubr.bf16.gmra.mrb[0].mxu0 %v2389
        %v2561 = vpop.f32.mrb[0].mxu0
        %v2562 = vadd.f32 %v2519, %v2561
        %v2563 = vpop.f32.mrb[0].mxu0
        %v2564 = vadd.f32 %v2521, %v2563
        %v2565 = vpop.f32.mrb[0].mxu0
        %v2566 = vadd.f32 %v2523, %v2565
        %v2567 = vpop.f32.mrb[0].mxu0
        %v2568 = vadd.f32 %v2525, %v2567
        %2569 = vdwg.mxu0
        %2570 = vmatprep.subr.bf16.mxu0 %v2125
        %2571 = vmatpush1.bf16.msra.mxu0 %v2124
        %2572 = vmatprep.subr.bf16.mxu0 %v2134
        %2573 = vmatpush1.bf16.msra.mxu0 %v2133
        %2574 = vmatprep.subr.bf16.mxu0 %v2143
        %2575 = vmatpush1.bf16.msra.mxu0 %v2142
        %2576 = vmatprep.subr.bf16.mxu0 %v2152
        %2577 = vmatpush1.bf16.msra.mxu0 %v2151
        %2578 = vmatprep.subr.bf16.mxu0 %v2161
        %2579 = vmatpush1.bf16.msra.mxu0 %v2160
        %2580 = vmatprep.subr.bf16.mxu0 %v2170
        %2581 = vmatpush1.bf16.msra.mxu0 %v2169
        %2582 = vmatprep.subr.bf16.mxu0 %v2179
        %2583 = vmatpush1.bf16.msra.mxu0 %v2178
        %2584 = vmatprep.subr.bf16.mxu0 %v2188
        %2585 = vmatpush1.bf16.msra.mxu0 %v2187
        %2586 = vmatprep.subr.bf16.mxu0 %v2197
        %2587 = vmatpush1.bf16.msra.mxu0 %v2196
        %2588 = vmatprep.subr.bf16.mxu0 %v2206
        %2589 = vmatpush1.bf16.msra.mxu0 %v2205
        %2590 = vmatprep.subr.bf16.mxu0 %v2215
        %2591 = vmatpush1.bf16.msra.mxu0 %v2214
        %2592 = vmatprep.subr.bf16.mxu0 %v2224
        %2593 = vmatpush1.bf16.msra.mxu0 %v2223
        %2594 = vmatprep.subr.bf16.mxu0 %v2233
        %2595 = vmatpush1.bf16.msra.mxu0 %v2232
        %2596 = vmatprep.subr.bf16.mxu0 %v2242
        %2597 = vmatpush1.bf16.msra.mxu0 %v2241
        %2598 = vmatprep.subr.bf16.mxu0 %v2251
        %2599 = vmatpush1.bf16.msra.mxu0 %v2250
        %2600 = vmatprep.subr.bf16.mxu0 %v2260
        %2601 = vmatpush1.bf16.msra.mxu0 %v2259
        %2602 = vmatprep.mubr.bf16.mxu0 %v2388
        %2603 = vmatmul.mubr.bf16.gmra.mrb[0].mxu0 %v2387
        %v2604 = vpop.f32.mrb[0].mxu0
        %v2605 = vadd.f32 %v2368, %v2604
        %v2606 = vpop.f32.mrb[0].mxu0
        %v2607 = vadd.f32 %v2368, %v2606
        %v2608 = vpop.f32.mrb[0].mxu0
        %v2609 = vadd.f32 %v2373, %v2608
        %v2610 = vpop.f32.mrb[0].mxu0
        %v2611 = vadd.f32 %v2373, %v2610
        %2612 = vdwg.mxu0
        %2613 = vmatprep.subr.bf16.mxu0 %v2269
        %2614 = vmatpush1.bf16.msra.mxu0 %v2268
        %2615 = vmatprep.subr.bf16.mxu0 %v2278
        %2616 = vmatpush1.bf16.msra.mxu0 %v2277
        %2617 = vmatprep.subr.bf16.mxu0 %v2287
        %2618 = vmatpush1.bf16.msra.mxu0 %v2286
        %2619 = vmatprep.subr.bf16.mxu0 %v2296
        %2620 = vmatpush1.bf16.msra.mxu0 %v2295
        %2621 = vmatprep.subr.bf16.mxu0 %v2305
        %2622 = vmatpush1.bf16.msra.mxu0 %v2304
        %2623 = vmatprep.subr.bf16.mxu0 %v2314
        %2624 = vmatpush1.bf16.msra.mxu0 %v2313
        %2625 = vmatprep.subr.bf16.mxu0 %v2323
        %2626 = vmatpush1.bf16.msra.mxu0 %v2322
        %2627 = vmatprep.subr.bf16.mxu0 %v2332
        %2628 = vmatpush1.bf16.msra.mxu0 %v2331
        %2629 = vmatprep.subr.bf16.mxu0 %v2341
        %2630 = vmatpush1.bf16.msra.mxu0 %v2340
        %2631 = vmatprep.subr.bf16.mxu0 %v2350
        %2632 = vmatpush1.bf16.msra.mxu0 %v2349
        %2633 = vmatprep.subr.bf16.mxu0 %v2359
        %2634 = vmatpush1.bf16.msra.mxu0 %v2358
        %2635 = vmatprep.subr.bf16.mxu0 0
        %2636 = vmatpush1.bf16.msra.mxu0 0
        %2637 = vmatprep.subr.bf16.mxu0 0
        %2638 = vmatpush1.bf16.msra.mxu0 0
        %2639 = vmatprep.subr.bf16.mxu0 0
        %2640 = vmatpush1.bf16.msra.mxu0 0
        %2641 = vmatprep.subr.bf16.mxu0 0
        %2642 = vmatpush1.bf16.msra.mxu0 0
        %2643 = vmatprep.subr.bf16.mxu0 0
        %2644 = vmatpush1.bf16.msra.mxu0 0
        %2645 = vmatprep.mubr.bf16.mxu0 %v2396
        %2646 = vmatmul.mubr.bf16.gmra.mrb[0].mxu0 %v2389
        %v2647 = vpop.f32.mrb[0].mxu0
        %v2648 = vadd.f32 %v2605, %v2647
        %v2649 = vpop.f32.mrb[0].mxu0
        %v2650 = vadd.f32 %v2607, %v2649
        %v2651 = vpop.f32.mrb[0].mxu0
        %v2652 = vadd.f32 %v2609, %v2651
        %v2653 = vpop.f32.mrb[0].mxu0
        %v2654 = vadd.f32 %v2611, %v2653
        %2655 = vdwg.mxu0
        %2656 = vmatprep.subr.bf16.mxu0 %v2127
        %2657 = vmatpush1.bf16.msra.mxu0 %v2126
        %2658 = vmatprep.subr.bf16.mxu0 %v2136
        %2659 = vmatpush1.bf16.msra.mxu0 %v2135
        %2660 = vmatprep.subr.bf16.mxu0 %v2145
        %2661 = vmatpush1.bf16.msra.mxu0 %v2144
        %2662 = vmatprep.subr.bf16.mxu0 %v2154
        %2663 = vmatpush1.bf16.msra.mxu0 %v2153
        %2664 = vmatprep.subr.bf16.mxu0 %v2163
        %2665 = vmatpush1.bf16.msra.mxu0 %v2162
        %2666 = vmatprep.subr.bf16.mxu0 %v2172
        %2667 = vmatpush1.bf16.msra.mxu0 %v2171
        %2668 = vmatprep.subr.bf16.mxu0 %v2181
        %2669 = vmatpush1.bf16.msra.mxu0 %v2180
        %2670 = vmatprep.subr.bf16.mxu0 %v2190
        %2671 = vmatpush1.bf16.msra.mxu0 %v2189
        %2672 = vmatprep.subr.bf16.mxu0 %v2199
        %2673 = vmatpush1.bf16.msra.mxu0 %v2198
        %2674 = vmatprep.subr.bf16.mxu0 %v2208
        %2675 = vmatpush1.bf16.msra.mxu0 %v2207
        %2676 = vmatprep.subr.bf16.mxu0 %v2217
        %2677 = vmatpush1.bf16.msra.mxu0 %v2216
        %2678 = vmatprep.subr.bf16.mxu0 %v2226
        %2679 = vmatpush1.bf16.msra.mxu0 %v2225
        %2680 = vmatprep.subr.bf16.mxu0 %v2235
        %2681 = vmatpush1.bf16.msra.mxu0 %v2234
        %2682 = vmatprep.subr.bf16.mxu0 %v2244
        %2683 = vmatpush1.bf16.msra.mxu0 %v2243
        %2684 = vmatprep.subr.bf16.mxu0 %v2253
        %2685 = vmatpush1.bf16.msra.mxu0 %v2252
        %2686 = vmatprep.subr.bf16.mxu0 %v2262
        %2687 = vmatpush1.bf16.msra.mxu0 %v2261
        %2688 = vmatprep.mubr.bf16.mxu0 %v2388
        %2689 = vmatmul.mubr.bf16.gmra.mrb[0].mxu0 %v2387
        %v2690 = vpop.f32.mrb[0].mxu0
        %v2691 = vadd.f32 %v2368, %v2690
        %v2692 = vpop.f32.mrb[0].mxu0
        %v2693 = vadd.f32 %v2368, %v2692
        %v2694 = vpop.f32.mrb[0].mxu0
        %v2695 = vadd.f32 %v2373, %v2694
        %v2696 = vpop.f32.mrb[0].mxu0
        %v2697 = vadd.f32 %v2373, %v2696
        %2698 = vdwg.mxu0
        %2699 = vmatprep.subr.bf16.mxu0 %v2271
        %2700 = vmatpush1.bf16.msra.mxu0 %v2270
        %2701 = vmatprep.subr.bf16.mxu0 %v2280
        %2702 = vmatpush1.bf16.msra.mxu0 %v2279
        %2703 = vmatprep.subr.bf16.mxu0 %v2289
        %2704 = vmatpush1.bf16.msra.mxu0 %v2288
        %2705 = vmatprep.subr.bf16.mxu0 %v2298
        %2706 = vmatpush1.bf16.msra.mxu0 %v2297
        %2707 = vmatprep.subr.bf16.mxu0 %v2307
        %2708 = vmatpush1.bf16.msra.mxu0 %v2306
        %2709 = vmatprep.subr.bf16.mxu0 %v2316
        %2710 = vmatpush1.bf16.msra.mxu0 %v2315
        %2711 = vmatprep.subr.bf16.mxu0 %v2325
        %2712 = vmatpush1.bf16.msra.mxu0 %v2324
        %2713 = vmatprep.subr.bf16.mxu0 %v2334
        %2714 = vmatpush1.bf16.msra.mxu0 %v2333
        %2715 = vmatprep.subr.bf16.mxu0 %v2343
        %2716 = vmatpush1.bf16.msra.mxu0 %v2342
        %2717 = vmatprep.subr.bf16.mxu0 %v2352
        %2718 = vmatpush1.bf16.msra.mxu0 %v2351
        %2719 = vmatprep.subr.bf16.mxu0 %v2361
        %2720 = vmatpush1.bf16.msra.mxu0 %v2360
        %2721 = vmatprep.subr.bf16.mxu0 0
        %2722 = vmatpush1.bf16.msra.mxu0 0
        %2723 = vmatprep.subr.bf16.mxu0 0
        %2724 = vmatpush1.bf16.msra.mxu0 0
        %2725 = vmatprep.subr.bf16.mxu0 0
        %2726 = vmatpush1.bf16.msra.mxu0 0
        %2727 = vmatprep.subr.bf16.mxu0 0
        %2728 = vmatpush1.bf16.msra.mxu0 0
        %2729 = vmatprep.subr.bf16.mxu0 0
        %2730 = vmatpush1.bf16.msra.mxu0 0
        %2731 = vmatprep.mubr.bf16.mxu0 %v2396
        %2732 = vmatmul.mubr.bf16.gmra.mrb[0].mxu0 %v2389
        %v2733 = vpop.f32.mrb[0].mxu0
        %v2734 = vadd.f32 %v2691, %v2733
        %v2735 = vpop.f32.mrb[0].mxu0
        %v2736 = vadd.f32 %v2693, %v2735
        %v2737 = vpop.f32.mrb[0].mxu0
        %v2738 = vadd.f32 %v2695, %v2737
        %v2739 = vpop.f32.mrb[0].mxu0
        %v2740 = vadd.f32 %v2697, %v2739
        %2741 = vdwg.mxu0
        %2742 = vmatprep.subr.bf16.mxu0 0
        %2743 = vmatpush1.bf16.msra.mxu0 %v2128
        %2744 = vmatprep.subr.bf16.mxu0 0
        %2745 = vmatpush1.bf16.msra.mxu0 %v2137
        %2746 = vmatprep.subr.bf16.mxu0 0
        %2747 = vmatpush1.bf16.msra.mxu0 %v2146
        %2748 = vmatprep.subr.bf16.mxu0 0
        %2749 = vmatpush1.bf16.msra.mxu0 %v2155
        %2750 = vmatprep.subr.bf16.mxu0 0
        %2751 = vmatpush1.bf16.msra.mxu0 %v2164
        %2752 = vmatprep.subr.bf16.mxu0 0
        %2753 = vmatpush1.bf16.msra.mxu0 %v2173
        %2754 = vmatprep.subr.bf16.mxu0 0
        %2755 = vmatpush1.bf16.msra.mxu0 %v2182
        %2756 = vmatprep.subr.bf16.mxu0 0
        %2757 = vmatpush1.bf16.msra.mxu0 %v2191
        %2758 = vmatprep.subr.bf16.mxu0 0
        %2759 = vmatpush1.bf16.msra.mxu0 %v2200
        %2760 = vmatprep.subr.bf16.mxu0 0
        %2761 = vmatpush1.bf16.msra.mxu0 %v2209
        %2762 = vmatprep.subr.bf16.mxu0 0
        %2763 = vmatpush1.bf16.msra.mxu0 %v2218
        %2764 = vmatprep.subr.bf16.mxu0 0
        %2765 = vmatpush1.bf16.msra.mxu0 %v2227
        %2766 = vmatprep.subr.bf16.mxu0 0
        %2767 = vmatpush1.bf16.msra.mxu0 %v2236
        %2768 = vmatprep.subr.bf16.mxu0 0
        %2769 = vmatpush1.bf16.msra.mxu0 %v2245
        %2770 = vmatprep.subr.bf16.mxu0 0
        %2771 = vmatpush1.bf16.msra.mxu0 %v2254
        %2772 = vmatprep.subr.bf16.mxu0 0
        %2773 = vmatpush1.bf16.msra.mxu0 %v2263
        %2774 = vmatprep.mubr.bf16.mxu0 %v2388
        %2775 = vmatmul.mubr.bf16.gmra.mrb[0].mxu0 %v2387
        %v2776 = vpop.f32.mrb[0].mxu0
        %v2777 = vadd.f32 %v2368, %v2776
        %v2778 = vpop.f32.mrb[0].mxu0
        %v2779 = vpop.f32.mrb[0].mxu0
        %v2780 = vadd.f32 %v2373, %v2779
        %v2781 = vpop.f32.mrb[0].mxu0
        %2782 = vdwg.mxu0
        %2783 = vmatprep.subr.bf16.mxu0 0
        %2784 = vmatpush1.bf16.msra.mxu0 %v2272
        %2785 = vmatprep.subr.bf16.mxu0 0
        %2786 = vmatpush1.bf16.msra.mxu0 %v2281
        %2787 = vmatprep.subr.bf16.mxu0 0
        %2788 = vmatpush1.bf16.msra.mxu0 %v2290
        %2789 = vmatprep.subr.bf16.mxu0 0
        %2790 = vmatpush1.bf16.msra.mxu0 %v2299
        %2791 = vmatprep.subr.bf16.mxu0 0
        %2792 = vmatpush1.bf16.msra.mxu0 %v2308
        %2793 = vmatprep.subr.bf16.mxu0 0
        %2794 = vmatpush1.bf16.msra.mxu0 %v2317
        %2795 = vmatprep.subr.bf16.mxu0 0
        %2796 = vmatpush1.bf16.msra.mxu0 %v2326
        %2797 = vmatprep.subr.bf16.mxu0 0
        %2798 = vmatpush1.bf16.msra.mxu0 %v2335
        %2799 = vmatprep.subr.bf16.mxu0 0
        %2800 = vmatpush1.bf16.msra.mxu0 %v2344
        %2801 = vmatprep.subr.bf16.mxu0 0
        %2802 = vmatpush1.bf16.msra.mxu0 %v2353
        %2803 = vmatprep.subr.bf16.mxu0 0
        %2804 = vmatpush1.bf16.msra.mxu0 %v2362
        %2805 = vmatprep.subr.bf16.mxu0 0
        %2806 = vmatpush1.bf16.msra.mxu0 0
        %2807 = vmatprep.subr.bf16.mxu0 0
        %2808 = vmatpush1.bf16.msra.mxu0 0
        %2809 = vmatprep.subr.bf16.mxu0 0
        %2810 = vmatpush1.bf16.msra.mxu0 0
        %2811 = vmatprep.subr.bf16.mxu0 0
        %2812 = vmatpush1.bf16.msra.mxu0 0
        %2813 = vmatprep.subr.bf16.mxu0 0
        %2814 = vmatpush1.bf16.msra.mxu0 0
        %2815 = vmatprep.mubr.bf16.mxu0 %v2396
        %2816 = vmatmul.mubr.bf16.gmra.mrb[0].mxu0 %v2389
        %v2817 = vpop.f32.mrb[0].mxu0
        %v2818 = vadd.f32 %v2777, %v2817
        %v2819 = vpop.f32.mrb[0].mxu0
        %v2820 = vpop.f32.mrb[0].mxu0
        %v2821 = vadd.f32 %v2780, %v2820
        %v2822 = vpop.f32.mrb[0].mxu0
        %2823 = vdwg.mxu0
        %v2824 = vmax.f32 %v2476, 0.0
        %v2825 = vmax.f32 %v2478, 0.0
        %v2826 = vmax.f32 %v2562, 0.0
        %v2827 = vmax.f32 %v2564, 0.0
        %v2828 = vmax.f32 %v2648, 0.0
        %v2829 = vmax.f32 %v2650, 0.0
        %v2830 = vmax.f32 %v2734, 0.0
        %v2831 = vmax.f32 %v2736, 0.0
        %v2832 = vmax.f32 %v2818, 0.0
        %v2833 = vmax.f32 %v2480, 0.0
        %v2834 = vmax.f32 %v2482, 0.0
        %v2835 = vmax.f32 %v2566, 0.0
        %v2836 = vmax.f32 %v2568, 0.0
        %v2837 = vmax.f32 %v2652, 0.0
        %v2838 = vmax.f32 %v2654, 0.0
        %v2839 = vmax.f32 %v2738, 0.0
        %v2840 = vmax.f32 %v2740, 0.0
        %v2841 = vmax.f32 %v2821, 0.0
        %v2842 = vld [vmem:[%s5] sm:$0xff]
        %v2843 = vld [vmem:[%s5 + $0x8] sm:$0x1]
        %v2846 = vlaneseq
        %v2847 = vshrl.u32 %v2846, 7
        %v2848 = vsub.s32 0, %v2847
        %v2849 = vrot.slane %v2842, %v2848
        %v2850 = vlaneseq
        %v2851 = vshrl.u32 %v2850, 7
        %v2852 = vsub.s32 1, %v2851
        %v2853 = vrot.slane %v2842, %v2852
        %v2854 = vlaneseq
        %v2855 = vshrl.u32 %v2854, 7
        %v2856 = vsub.s32 2, %v2855
        %v2857 = vrot.slane %v2842, %v2856
        %v2858 = vlaneseq
        %v2859 = vshrl.u32 %v2858, 7
        %v2860 = vsub.s32 3, %v2859
        %v2861 = vrot.slane %v2842, %v2860
        %v2862 = vlaneseq
        %v2863 = vshrl.u32 %v2862, 7
        %v2864 = vsub.s32 4, %v2863
        %v2865 = vrot.slane %v2842, %v2864
        %v2866 = vlaneseq
        %v2867 = vshrl.u32 %v2866, 7
        %v2868 = vsub.s32 5, %v2867
        %v2869 = vrot.slane %v2842, %v2868
        %v2870 = vlaneseq
        %v2871 = vshrl.u32 %v2870, 7
        %v2872 = vsub.s32 6, %v2871
        %v2873 = vrot.slane %v2842, %v2872
        %v2874 = vlaneseq
        %v2875 = vshrl.u32 %v2874, 7
        %v2876 = vsub.s32 7, %v2875
        %v2877 = vrot.slane %v2842, %v2876
        %v2878 = vlaneseq
        %v2879 = vshrl.u32 %v2878, 7
        %v2880 = vsub.s32 0, %v2879
        %v2881 = vrot.slane %v2843, %v2880
        %v2891 = vmul.f32 %v2824, %v2849
        %v2892 = vmul.f32 %v2825, %v2853
        %v2893 = vmul.f32 %v2826, %v2857
        %v2894 = vmul.f32 %v2827, %v2861
        %v2895 = vmul.f32 %v2828, %v2865
        %v2896 = vmul.f32 %v2829, %v2869
        %v2897 = vmul.f32 %v2830, %v2873
        %v2898 = vmul.f32 %v2831, %v2877
        %v2899 = vmul.f32 %v2832, %v2881
        %v2900 = vmul.f32 %v2833, %v2849
        %v2901 = vmul.f32 %v2834, %v2853
        %v2902 = vmul.f32 %v2835, %v2857
        %v2903 = vmul.f32 %v2836, %v2861
        %v2904 = vmul.f32 %v2837, %v2865
        %v2905 = vmul.f32 %v2838, %v2869
        %v2906 = vmul.f32 %v2839, %v2873
        %v2907 = vmul.f32 %v2840, %v2877
        %v2908 = vmul.f32 %v2841, %v2881
        %v2909 = vpack.c.bf16 %v2900, %v2891
        %v2910 = vpack.c.bf16 %v2901, %v2892
        %v2911 = vpack.c.bf16 %v2902, %v2893
        %v2912 = vpack.c.bf16 %v2903, %v2894
        %v2913 = vpack.c.bf16 %v2904, %v2895
        %v2914 = vpack.c.bf16 %v2905, %v2896
        %v2915 = vpack.c.bf16 %v2906, %v2897
        %v2916 = vpack.c.bf16 %v2907, %v2898
        %v2917 = vpack.c.bf16 %v2908, %v2899
        %2918 = vst [vmem:[#allocation4] sm:$0xff] %v2909
        %2919 = vst [vmem:[#allocation4 + $0x8] sm:$0xff] %v2910
        %2920 = vst [vmem:[#allocation4 + $0x10] sm:$0xff] %v2911
        %2921 = vst [vmem:[#allocation4 + $0x18] sm:$0xff] %v2912
        %2922 = vst [vmem:[#allocation4 + $0x20] sm:$0xff] %v2913
        %2923 = vst [vmem:[#allocation4 + $0x28] sm:$0xff] %v2914
        %2924 = vst [vmem:[#allocation4 + $0x30] sm:$0xff] %v2915
        %2925 = vst [vmem:[#allocation4 + $0x38] sm:$0xff] %v2916
        %2926 = vst [vmem:[#allocation4 + $0x40] sm:$0xff] %v2917
        %v2927 = vld [vmem:[#allocation4] sm:$0xff]
        %v2928 = vld [vmem:[#allocation4 + $0x8] sm:$0xff]
        %v2929 = vld [vmem:[#allocation4 + $0x10] sm:$0xff]
        %v2930 = vld [vmem:[#allocation4 + $0x18] sm:$0xff]
        %v2931 = vld [vmem:[#allocation4 + $0x20] sm:$0xff]
        %v2932 = vld [vmem:[#allocation4 + $0x28] sm:$0xff]
        %v2933 = vld [vmem:[#allocation4 + $0x30] sm:$0xff]
        %2934 = vst [vmem:[#allocation3] sm:$0xff] %v2927
        %2935 = vst [vmem:[#allocation3 + $0x8] sm:$0xff] %v2928
        %2936 = vst [vmem:[#allocation3 + $0x10] sm:$0xff] %v2929
        %2937 = vst [vmem:[#allocation3 + $0x18] sm:$0xff] %v2930
        %2938 = vst [vmem:[#allocation3 + $0x20] sm:$0xff] %v2931
        %2939 = vst [vmem:[#allocation3 + $0x28] sm:$0xff] %v2932
        %2940 = vst [vmem:[#allocation3 + $0x30] sm:$0xff] %v2933
        %v2941 = vld [vmem:[#allocation4] sm:$0xff]
        %v2942 = vld [vmem:[#allocation4 + $0x8] sm:$0xff]
        %v2943 = vld [vmem:[#allocation4 + $0x10] sm:$0xff]
        %v2944 = vld [vmem:[#allocation4 + $0x18] sm:$0xff]
        %v2945 = vld [vmem:[#allocation4 + $0x20] sm:$0xff]
        %v2946 = vld [vmem:[#allocation4 + $0x28] sm:$0xff]
        %v2947 = vld [vmem:[#allocation4 + $0x30] sm:$0xff]
        %v2948 = vld [vmem:[#allocation4 + $0x38] sm:$0xff]
        %2957 = vrot.lane.b32.xlu0 %v2941, 127
        %v2958 = vpop.permute.xlu0 %2957
        %2959 = vrot.lane.b32.xlu0 %v2942, 127
        %v2960 = vpop.permute.xlu0 %2959
        %2961 = vrot.lane.b32.xlu0 %v2943, 127
        %v2962 = vpop.permute.xlu0 %2961
        %2963 = vrot.lane.b32.xlu0 %v2944, 127
        %v2964 = vpop.permute.xlu0 %2963
        %2965 = vrot.lane.b32.xlu0 %v2945, 127
        %v2966 = vpop.permute.xlu0 %2965
        %2967 = vrot.lane.b32.xlu0 %v2946, 127
        %v2968 = vpop.permute.xlu0 %2967
        %2969 = vrot.lane.b32.xlu0 %v2947, 127
        %v2970 = vpop.permute.xlu0 %2969
        %2971 = vrot.lane.b32.xlu0 %v2948, 127
        %v2972 = vpop.permute.xlu0 %2971
        %vm2973 = vcmask 1039360
        %v2974 = vsel %vm2973, %v2958, %v2960
        %v2975 = vsel %vm2973, %v2960, %v2962
        %v2976 = vsel %vm2973, %v2962, %v2964
        %v2977 = vsel %vm2973, %v2964, %v2966
        %v2978 = vsel %vm2973, %v2966, %v2968
        %v2979 = vsel %vm2973, %v2968, %v2970
        %v2980 = vsel %vm2973, %v2970, %v2972
        %2988 = vst [vmem:[#allocation3 + $0x48] sm:$0xff] %v2974
        %2989 = vst [vmem:[#allocation3 + $0x50] sm:$0xff] %v2975
        %2990 = vst [vmem:[#allocation3 + $0x58] sm:$0xff] %v2976
        %2991 = vst [vmem:[#allocation3 + $0x60] sm:$0xff] %v2977
        %2992 = vst [vmem:[#allocation3 + $0x68] sm:$0xff] %v2978
        %2993 = vst [vmem:[#allocation3 + $0x70] sm:$0xff] %v2979
        %2994 = vst [vmem:[#allocation3 + $0x78] sm:$0xff] %v2980
        %v2995 = vld [vmem:[#allocation4] sm:$0xff]
        %v2996 = vld [vmem:[#allocation4 + $0x8] sm:$0xff]
        %v2997 = vld [vmem:[#allocation4 + $0x10] sm:$0xff]
        %v2998 = vld [vmem:[#allocation4 + $0x18] sm:$0xff]
        %v2999 = vld [vmem:[#allocation4 + $0x20] sm:$0xff]
        %v3000 = vld [vmem:[#allocation4 + $0x28] sm:$0xff]
        %v3001 = vld [vmem:[#allocation4 + $0x30] sm:$0xff]
        %v3002 = vld [vmem:[#allocation4 + $0x38] sm:$0xff]
        %3011 = vrot.lane.b32.xlu0 %v2995, 126
        %v3012 = vpop.permute.xlu0 %3011
        %3013 = vrot.lane.b32.xlu0 %v2996, 126
        %v3014 = vpop.permute.xlu0 %3013
        %3015 = vrot.lane.b32.xlu0 %v2997, 126
        %v3016 = vpop.permute.xlu0 %3015
        %3017 = vrot.lane.b32.xlu0 %v2998, 126
        %v3018 = vpop.permute.xlu0 %3017
        %3019 = vrot.lane.b32.xlu0 %v2999, 126
        %v3020 = vpop.permute.xlu0 %3019
        %3021 = vrot.lane.b32.xlu0 %v3000, 126
        %v3022 = vpop.permute.xlu0 %3021
        %3023 = vrot.lane.b32.xlu0 %v3001, 126
        %v3024 = vpop.permute.xlu0 %3023
        %3025 = vrot.lane.b32.xlu0 %v3002, 126
        %v3026 = vpop.permute.xlu0 %3025
        %vm3027 = vcmask 1031168
        %v3028 = vsel %vm3027, %v3012, %v3014
        %v3029 = vsel %vm3027, %v3014, %v3016
        %v3030 = vsel %vm3027, %v3016, %v3018
        %v3031 = vsel %vm3027, %v3018, %v3020
        %v3032 = vsel %vm3027, %v3020, %v3022
        %v3033 = vsel %vm3027, %v3022, %v3024
        %v3034 = vsel %vm3027, %v3024, %v3026
        %3042 = vst [vmem:[#allocation3 + $0x90] sm:$0xff] %v3028
        %3043 = vst [vmem:[#allocation3 + $0x98] sm:$0xff] %v3029
        %3044 = vst [vmem:[#allocation3 + $0xa0] sm:$0xff] %v3030
        %3045 = vst [vmem:[#allocation3 + $0xa8] sm:$0xff] %v3031
        %3046 = vst [vmem:[#allocation3 + $0xb0] sm:$0xff] %v3032
        %3047 = vst [vmem:[#allocation3 + $0xb8] sm:$0xff] %v3033
        %3048 = vst [vmem:[#allocation3 + $0xc0] sm:$0xff] %v3034
        %v3049 = vld [vmem:[#allocation4] sm:$0xff]
        %v3050 = vld [vmem:[#allocation4 + $0x8] sm:$0xff]
        %v3051 = vld [vmem:[#allocation4 + $0x10] sm:$0xff]
        %v3052 = vld [vmem:[#allocation4 + $0x18] sm:$0xff]
        %v3053 = vld [vmem:[#allocation4 + $0x20] sm:$0xff]
        %v3054 = vld [vmem:[#allocation4 + $0x28] sm:$0xff]
        %v3055 = vld [vmem:[#allocation4 + $0x30] sm:$0xff]
        %v3056 = vld [vmem:[#allocation4 + $0x38] sm:$0xff]
        %3065 = vrot.lane.b32.xlu0 %v3049, 118
        %v3066 = vpop.permute.xlu0 %3065
        %3067 = vrot.lane.b32.xlu0 %v3050, 118
        %v3068 = vpop.permute.xlu0 %3067
        %3069 = vrot.lane.b32.xlu0 %v3051, 118
        %v3070 = vpop.permute.xlu0 %3069
        %3071 = vrot.lane.b32.xlu0 %v3052, 118
        %v3072 = vpop.permute.xlu0 %3071
        %3073 = vrot.lane.b32.xlu0 %v3053, 118
        %v3074 = vpop.permute.xlu0 %3073
        %3075 = vrot.lane.b32.xlu0 %v3054, 118
        %v3076 = vpop.permute.xlu0 %3075
        %3077 = vrot.lane.b32.xlu0 %v3055, 118
        %v3078 = vpop.permute.xlu0 %3077
        %3079 = vrot.lane.b32.xlu0 %v3056, 118
        %v3080 = vpop.permute.xlu0 %3079
        %vm3081 = vcmask 965632
        %v3082 = vsel %vm3081, %v3066, %v3068
        %v3083 = vsel %vm3081, %v3068, %v3070
        %v3084 = vsel %vm3081, %v3070, %v3072
        %v3085 = vsel %vm3081, %v3072, %v3074
        %v3086 = vsel %vm3081, %v3074, %v3076
        %v3087 = vsel %vm3081, %v3076, %v3078
        %v3088 = vsel %vm3081, %v3078, %v3080
        %3096 = vst [vmem:[#allocation3 + $0xd8] sm:$0xff] %v3082
        %3097 = vst [vmem:[#allocation3 + $0xe0] sm:$0xff] %v3083
        %3098 = vst [vmem:[#allocation3 + $0xe8] sm:$0xff] %v3084
        %3099 = vst [vmem:[#allocation3 + $0xf0] sm:$0xff] %v3085
        %3100 = vst [vmem:[#allocation3 + $0xf8] sm:$0xff] %v3086
        %3101 = vst [vmem:[#allocation3 + $0x100] sm:$0xff] %v3087
        %3102 = vst [vmem:[#allocation3 + $0x108] sm:$0xff] %v3088
        %v3103 = vld [vmem:[#allocation4] sm:$0xff]
        %v3104 = vld [vmem:[#allocation4 + $0x8] sm:$0xff]
        %v3105 = vld [vmem:[#allocation4 + $0x10] sm:$0xff]
        %v3106 = vld [vmem:[#allocation4 + $0x18] sm:$0xff]
        %v3107 = vld [vmem:[#allocation4 + $0x20] sm:$0xff]
        %v3108 = vld [vmem:[#allocation4 + $0x28] sm:$0xff]
        %v3109 = vld [vmem:[#allocation4 + $0x30] sm:$0xff]
        %v3110 = vld [vmem:[#allocation4 + $0x38] sm:$0xff]
        %3119 = vrot.lane.b32.xlu0 %v3103, 117
        %v3120 = vpop.permute.xlu0 %3119
        %3121 = vrot.lane.b32.xlu0 %v3104, 117
        %v3122 = vpop.permute.xlu0 %3121
        %3123 = vrot.lane.b32.xlu0 %v3105, 117
        %v3124 = vpop.permute.xlu0 %3123
        %3125 = vrot.lane.b32.xlu0 %v3106, 117
        %v3126 = vpop.permute.xlu0 %3125
        %3127 = vrot.lane.b32.xlu0 %v3107, 117
        %v3128 = vpop.permute.xlu0 %3127
        %3129 = vrot.lane.b32.xlu0 %v3108, 117
        %v3130 = vpop.permute.xlu0 %3129
        %3131 = vrot.lane.b32.xlu0 %v3109, 117
        %v3132 = vpop.permute.xlu0 %3131
        %3133 = vrot.lane.b32.xlu0 %v3110, 117
        %v3134 = vpop.permute.xlu0 %3133
        %vm3135 = vcmask 957440
        %v3136 = vsel %vm3135, %v3120, %v3122
        %v3137 = vsel %vm3135, %v3122, %v3124
        %v3138 = vsel %vm3135, %v3124, %v3126
        %v3139 = vsel %vm3135, %v3126, %v3128
        %v3140 = vsel %vm3135, %v3128, %v3130
        %v3141 = vsel %vm3135, %v3130, %v3132
        %v3142 = vsel %vm3135, %v3132, %v3134
        %3150 = vst [vmem:[#allocation3 + $0x120] sm:$0xff] %v3136
        %3151 = vst [vmem:[#allocation3 + $0x128] sm:$0xff] %v3137
        %3152 = vst [vmem:[#allocation3 + $0x130] sm:$0xff] %v3138
        %3153 = vst [vmem:[#allocation3 + $0x138] sm:$0xff] %v3139
        %3154 = vst [vmem:[#allocation3 + $0x140] sm:$0xff] %v3140
        %3155 = vst [vmem:[#allocation3 + $0x148] sm:$0xff] %v3141
        %3156 = vst [vmem:[#allocation3 + $0x150] sm:$0xff] %v3142
        %v3157 = vld [vmem:[#allocation4] sm:$0xff]
        %v3158 = vld [vmem:[#allocation4 + $0x8] sm:$0xff]
        %v3159 = vld [vmem:[#allocation4 + $0x10] sm:$0xff]
        %v3160 = vld [vmem:[#allocation4 + $0x18] sm:$0xff]
        %v3161 = vld [vmem:[#allocation4 + $0x20] sm:$0xff]
        %v3162 = vld [vmem:[#allocation4 + $0x28] sm:$0xff]
        %v3163 = vld [vmem:[#allocation4 + $0x30] sm:$0xff]
        %v3164 = vld [vmem:[#allocation4 + $0x38] sm:$0xff]
        %3173 = vrot.lane.b32.xlu0 %v3157, 116
        %v3174 = vpop.permute.xlu0 %3173
        %3175 = vrot.lane.b32.xlu0 %v3158, 116
        %v3176 = vpop.permute.xlu0 %3175
        %3177 = vrot.lane.b32.xlu0 %v3159, 116
        %v3178 = vpop.permute.xlu0 %3177
        %3179 = vrot.lane.b32.xlu0 %v3160, 116
        %v3180 = vpop.permute.xlu0 %3179
        %3181 = vrot.lane.b32.xlu0 %v3161, 116
        %v3182 = vpop.permute.xlu0 %3181
        %3183 = vrot.lane.b32.xlu0 %v3162, 116
        %v3184 = vpop.permute.xlu0 %3183
        %3185 = vrot.lane.b32.xlu0 %v3163, 116
        %v3186 = vpop.permute.xlu0 %3185
        %3187 = vrot.lane.b32.xlu0 %v3164, 116
        %v3188 = vpop.permute.xlu0 %3187
        %vm3189 = vcmask 949248
        %v3190 = vsel %vm3189, %v3174, %v3176
        %v3191 = vsel %vm3189, %v3176, %v3178
        %v3192 = vsel %vm3189, %v3178, %v3180
        %v3193 = vsel %vm3189, %v3180, %v3182
        %v3194 = vsel %vm3189, %v3182, %v3184
        %v3195 = vsel %vm3189, %v3184, %v3186
        %v3196 = vsel %vm3189, %v3186, %v3188
        %3204 = vst [vmem:[#allocation3 + $0x168] sm:$0xff] %v3190
        %3205 = vst [vmem:[#allocation3 + $0x170] sm:$0xff] %v3191
        %3206 = vst [vmem:[#allocation3 + $0x178] sm:$0xff] %v3192
        %3207 = vst [vmem:[#allocation3 + $0x180] sm:$0xff] %v3193
        %3208 = vst [vmem:[#allocation3 + $0x188] sm:$0xff] %v3194
        %3209 = vst [vmem:[#allocation3 + $0x190] sm:$0xff] %v3195
        %3210 = vst [vmem:[#allocation3 + $0x198] sm:$0xff] %v3196
        %v3211 = vld [vmem:[#allocation4] sm:$0xff]
        %v3212 = vld [vmem:[#allocation4 + $0x8] sm:$0xff]
        %v3213 = vld [vmem:[#allocation4 + $0x10] sm:$0xff]
        %v3214 = vld [vmem:[#allocation4 + $0x18] sm:$0xff]
        %v3215 = vld [vmem:[#allocation4 + $0x20] sm:$0xff]
        %v3216 = vld [vmem:[#allocation4 + $0x28] sm:$0xff]
        %v3217 = vld [vmem:[#allocation4 + $0x30] sm:$0xff]
        %v3218 = vld [vmem:[#allocation4 + $0x38] sm:$0xff]
        %3227 = vrot.lane.b32.xlu0 %v3211, 108
        %v3228 = vpop.permute.xlu0 %3227
        %3229 = vrot.lane.b32.xlu0 %v3212, 108
        %v3230 = vpop.permute.xlu0 %3229
        %3231 = vrot.lane.b32.xlu0 %v3213, 108
        %v3232 = vpop.permute.xlu0 %3231
        %3233 = vrot.lane.b32.xlu0 %v3214, 108
        %v3234 = vpop.permute.xlu0 %3233
        %3235 = vrot.lane.b32.xlu0 %v3215, 108
        %v3236 = vpop.permute.xlu0 %3235
        %3237 = vrot.lane.b32.xlu0 %v3216, 108
        %v3238 = vpop.permute.xlu0 %3237
        %3239 = vrot.lane.b32.xlu0 %v3217, 108
        %v3240 = vpop.permute.xlu0 %3239
        %3241 = vrot.lane.b32.xlu0 %v3218, 108
        %v3242 = vpop.permute.xlu0 %3241
        %vm3243 = vcmask 883712
        %v3244 = vsel %vm3243, %v3228, %v3230
        %v3245 = vsel %vm3243, %v3230, %v3232
        %v3246 = vsel %vm3243, %v3232, %v3234
        %v3247 = vsel %vm3243, %v3234, %v3236
        %v3248 = vsel %vm3243, %v3236, %v3238
        %v3249 = vsel %vm3243, %v3238, %v3240
        %v3250 = vsel %vm3243, %v3240, %v3242
        %3258 = vst [vmem:[#allocation3 + $0x1b0] sm:$0xff] %v3244
        %3259 = vst [vmem:[#allocation3 + $0x1b8] sm:$0xff] %v3245
        %3260 = vst [vmem:[#allocation3 + $0x1c0] sm:$0xff] %v3246
        %3261 = vst [vmem:[#allocation3 + $0x1c8] sm:$0xff] %v3247
        %3262 = vst [vmem:[#allocation3 + $0x1d0] sm:$0xff] %v3248
        %3263 = vst [vmem:[#allocation3 + $0x1d8] sm:$0xff] %v3249
        %3264 = vst [vmem:[#allocation3 + $0x1e0] sm:$0xff] %v3250
        %v3265 = vld [vmem:[#allocation4] sm:$0xff]
        %v3266 = vld [vmem:[#allocation4 + $0x8] sm:$0xff]
        %v3267 = vld [vmem:[#allocation4 + $0x10] sm:$0xff]
        %v3268 = vld [vmem:[#allocation4 + $0x18] sm:$0xff]
        %v3269 = vld [vmem:[#allocation4 + $0x20] sm:$0xff]
        %v3270 = vld [vmem:[#allocation4 + $0x28] sm:$0xff]
        %v3271 = vld [vmem:[#allocation4 + $0x30] sm:$0xff]
        %v3272 = vld [vmem:[#allocation4 + $0x38] sm:$0xff]
        %3281 = vrot.lane.b32.xlu0 %v3265, 107
        %v3282 = vpop.permute.xlu0 %3281
        %3283 = vrot.lane.b32.xlu0 %v3266, 107
        %v3284 = vpop.permute.xlu0 %3283
        %3285 = vrot.lane.b32.xlu0 %v3267, 107
        %v3286 = vpop.permute.xlu0 %3285
        %3287 = vrot.lane.b32.xlu0 %v3268, 107
        %v3288 = vpop.permute.xlu0 %3287
        %3289 = vrot.lane.b32.xlu0 %v3269, 107
        %v3290 = vpop.permute.xlu0 %3289
        %3291 = vrot.lane.b32.xlu0 %v3270, 107
        %v3292 = vpop.permute.xlu0 %3291
        %3293 = vrot.lane.b32.xlu0 %v3271, 107
        %v3294 = vpop.permute.xlu0 %3293
        %3295 = vrot.lane.b32.xlu0 %v3272, 107
        %v3296 = vpop.permute.xlu0 %3295
        %vm3297 = vcmask 875520
        %v3298 = vsel %vm3297, %v3282, %v3284
        %v3299 = vsel %vm3297, %v3284, %v3286
        %v3300 = vsel %vm3297, %v3286, %v3288
        %v3301 = vsel %vm3297, %v3288, %v3290
        %v3302 = vsel %vm3297, %v3290, %v3292
        %v3303 = vsel %vm3297, %v3292, %v3294
        %v3304 = vsel %vm3297, %v3294, %v3296
        %3312 = vst [vmem:[#allocation3 + $0x1f8] sm:$0xff] %v3298
        %3313 = vst [vmem:[#allocation3 + $0x200] sm:$0xff] %v3299
        %3314 = vst [vmem:[#allocation3 + $0x208] sm:$0xff] %v3300
        %3315 = vst [vmem:[#allocation3 + $0x210] sm:$0xff] %v3301
        %3316 = vst [vmem:[#allocation3 + $0x218] sm:$0xff] %v3302
        %3317 = vst [vmem:[#allocation3 + $0x220] sm:$0xff] %v3303
        %3318 = vst [vmem:[#allocation3 + $0x228] sm:$0xff] %v3304
        %v3319 = vld [vmem:[#allocation4] sm:$0xff]
        %v3320 = vld [vmem:[#allocation4 + $0x8] sm:$0xff]
        %v3321 = vld [vmem:[#allocation4 + $0x10] sm:$0xff]
        %v3322 = vld [vmem:[#allocation4 + $0x18] sm:$0xff]
        %v3323 = vld [vmem:[#allocation4 + $0x20] sm:$0xff]
        %v3324 = vld [vmem:[#allocation4 + $0x28] sm:$0xff]
        %v3325 = vld [vmem:[#allocation4 + $0x30] sm:$0xff]
        %v3326 = vld [vmem:[#allocation4 + $0x38] sm:$0xff]
        %3335 = vrot.lane.b32.xlu0 %v3319, 106
        %v3336 = vpop.permute.xlu0 %3335
        %3337 = vrot.lane.b32.xlu0 %v3320, 106
        %v3338 = vpop.permute.xlu0 %3337
        %3339 = vrot.lane.b32.xlu0 %v3321, 106
        %v3340 = vpop.permute.xlu0 %3339
        %3341 = vrot.lane.b32.xlu0 %v3322, 106
        %v3342 = vpop.permute.xlu0 %3341
        %3343 = vrot.lane.b32.xlu0 %v3323, 106
        %v3344 = vpop.permute.xlu0 %3343
        %3345 = vrot.lane.b32.xlu0 %v3324, 106
        %v3346 = vpop.permute.xlu0 %3345
        %3347 = vrot.lane.b32.xlu0 %v3325, 106
        %v3348 = vpop.permute.xlu0 %3347
        %3349 = vrot.lane.b32.xlu0 %v3326, 106
        %v3350 = vpop.permute.xlu0 %3349
        %vm3351 = vcmask 867328
        %v3352 = vsel %vm3351, %v3336, %v3338
        %v3353 = vsel %vm3351, %v3338, %v3340
        %v3354 = vsel %vm3351, %v3340, %v3342
        %v3355 = vsel %vm3351, %v3342, %v3344
        %v3356 = vsel %vm3351, %v3344, %v3346
        %v3357 = vsel %vm3351, %v3346, %v3348
        %v3358 = vsel %vm3351, %v3348, %v3350
        %3366 = vst [vmem:[#allocation3 + $0x240] sm:$0xff] %v3352
        %3367 = vst [vmem:[#allocation3 + $0x248] sm:$0xff] %v3353
        %3368 = vst [vmem:[#allocation3 + $0x250] sm:$0xff] %v3354
        %3369 = vst [vmem:[#allocation3 + $0x258] sm:$0xff] %v3355
        %3370 = vst [vmem:[#allocation3 + $0x260] sm:$0xff] %v3356
        %3371 = vst [vmem:[#allocation3 + $0x268] sm:$0xff] %v3357
        %3372 = vst [vmem:[#allocation3 + $0x270] sm:$0xff] %v3358
        %v3373 = vld [vmem:[#allocation4] sm:$0xff]
        %v3374 = vld [vmem:[#allocation4 + $0x8] sm:$0xff]
        %v3375 = vld [vmem:[#allocation4 + $0x10] sm:$0xff]
        %v3376 = vld [vmem:[#allocation4 + $0x18] sm:$0xff]
        %v3377 = vld [vmem:[#allocation4 + $0x20] sm:$0xff]
        %v3378 = vld [vmem:[#allocation4 + $0x28] sm:$0xff]
        %v3379 = vld [vmem:[#allocation4 + $0x30] sm:$0xff]
        %v3380 = vld [vmem:[#allocation4 + $0x38] sm:$0xff]
        %3389 = vrot.lane.b32.xlu0 %v3373, 28
        %v3390 = vpop.permute.xlu0 %3389
        %3391 = vrot.lane.b32.xlu0 %v3374, 28
        %v3392 = vpop.permute.xlu0 %3391
        %3393 = vrot.lane.b32.xlu0 %v3375, 28
        %v3394 = vpop.permute.xlu0 %3393
        %3395 = vrot.lane.b32.xlu0 %v3376, 28
        %v3396 = vpop.permute.xlu0 %3395
        %3397 = vrot.lane.b32.xlu0 %v3377, 28
        %v3398 = vpop.permute.xlu0 %3397
        %3399 = vrot.lane.b32.xlu0 %v3378, 28
        %v3400 = vpop.permute.xlu0 %3399
        %3401 = vrot.lane.b32.xlu0 %v3379, 28
        %v3402 = vpop.permute.xlu0 %3401
        %3403 = vrot.lane.b32.xlu0 %v3380, 28
        %v3404 = vpop.permute.xlu0 %3403
        %vm3405 = vcmask 228352
        %v3406 = vsel %vm3405, %v3390, %v3392
        %v3407 = vsel %vm3405, %v3392, %v3394
        %v3408 = vsel %vm3405, %v3394, %v3396
        %v3409 = vsel %vm3405, %v3396, %v3398
        %v3410 = vsel %vm3405, %v3398, %v3400
        %v3411 = vsel %vm3405, %v3400, %v3402
        %v3412 = vsel %vm3405, %v3402, %v3404
        %3420 = vst [vmem:[#allocation3 + $0x288] sm:$0xff] %v3406
        %3421 = vst [vmem:[#allocation3 + $0x290] sm:$0xff] %v3407
        %3422 = vst [vmem:[#allocation3 + $0x298] sm:$0xff] %v3408
        %3423 = vst [vmem:[#allocation3 + $0x2a0] sm:$0xff] %v3409
        %3424 = vst [vmem:[#allocation3 + $0x2a8] sm:$0xff] %v3410
        %3425 = vst [vmem:[#allocation3 + $0x2b0] sm:$0xff] %v3411
        %3426 = vst [vmem:[#allocation3 + $0x2b8] sm:$0xff] %v3412
        %v3427 = vld [vmem:[#allocation4] sm:$0xff]
        %v3428 = vld [vmem:[#allocation4 + $0x8] sm:$0xff]
        %v3429 = vld [vmem:[#allocation4 + $0x10] sm:$0xff]
        %v3430 = vld [vmem:[#allocation4 + $0x18] sm:$0xff]
        %v3431 = vld [vmem:[#allocation4 + $0x20] sm:$0xff]
        %v3432 = vld [vmem:[#allocation4 + $0x28] sm:$0xff]
        %v3433 = vld [vmem:[#allocation4 + $0x30] sm:$0xff]
        %v3434 = vld [vmem:[#allocation4 + $0x38] sm:$0xff]
        %3443 = vrot.lane.b32.xlu0 %v3427, 27
        %v3444 = vpop.permute.xlu0 %3443
        %3445 = vrot.lane.b32.xlu0 %v3428, 27
        %v3446 = vpop.permute.xlu0 %3445
        %3447 = vrot.lane.b32.xlu0 %v3429, 27
        %v3448 = vpop.permute.xlu0 %3447
        %3449 = vrot.lane.b32.xlu0 %v3430, 27
        %v3450 = vpop.permute.xlu0 %3449
        %3451 = vrot.lane.b32.xlu0 %v3431, 27
        %v3452 = vpop.permute.xlu0 %3451
        %3453 = vrot.lane.b32.xlu0 %v3432, 27
        %v3454 = vpop.permute.xlu0 %3453
        %3455 = vrot.lane.b32.xlu0 %v3433, 27
        %v3456 = vpop.permute.xlu0 %3455
        %3457 = vrot.lane.b32.xlu0 %v3434, 27
        %v3458 = vpop.permute.xlu0 %3457
        %vm3459 = vcmask 220160
        %v3460 = vsel %vm3459, %v3444, %v3446
        %v3461 = vsel %vm3459, %v3446, %v3448
        %v3462 = vsel %vm3459, %v3448, %v3450
        %v3463 = vsel %vm3459, %v3450, %v3452
        %v3464 = vsel %vm3459, %v3452, %v3454
        %v3465 = vsel %vm3459, %v3454, %v3456
        %v3466 = vsel %vm3459, %v3456, %v3458
        %3474 = vst [vmem:[#allocation3 + $0x2d0] sm:$0xff] %v3460
        %3475 = vst [vmem:[#allocation3 + $0x2d8] sm:$0xff] %v3461
        %3476 = vst [vmem:[#allocation3 + $0x2e0] sm:$0xff] %v3462
        %3477 = vst [vmem:[#allocation3 + $0x2e8] sm:$0xff] %v3463
        %3478 = vst [vmem:[#allocation3 + $0x2f0] sm:$0xff] %v3464
        %3479 = vst [vmem:[#allocation3 + $0x2f8] sm:$0xff] %v3465
        %3480 = vst [vmem:[#allocation3 + $0x300] sm:$0xff] %v3466
        %v3481 = vld [vmem:[#allocation4] sm:$0xff]
        %v3482 = vld [vmem:[#allocation4 + $0x8] sm:$0xff]
        %v3483 = vld [vmem:[#allocation4 + $0x10] sm:$0xff]
        %v3484 = vld [vmem:[#allocation4 + $0x18] sm:$0xff]
        %v3485 = vld [vmem:[#allocation4 + $0x20] sm:$0xff]
        %v3486 = vld [vmem:[#allocation4 + $0x28] sm:$0xff]
        %v3487 = vld [vmem:[#allocation4 + $0x30] sm:$0xff]
        %v3488 = vld [vmem:[#allocation4 + $0x38] sm:$0xff]
        %3497 = vrot.lane.b32.xlu0 %v3481, 26
        %v3498 = vpop.permute.xlu0 %3497
        %3499 = vrot.lane.b32.xlu0 %v3482, 26
        %v3500 = vpop.permute.xlu0 %3499
        %3501 = vrot.lane.b32.xlu0 %v3483, 26
        %v3502 = vpop.permute.xlu0 %3501
        %3503 = vrot.lane.b32.xlu0 %v3484, 26
        %v3504 = vpop.permute.xlu0 %3503
        %3505 = vrot.lane.b32.xlu0 %v3485, 26
        %v3506 = vpop.permute.xlu0 %3505
        %3507 = vrot.lane.b32.xlu0 %v3486, 26
        %v3508 = vpop.permute.xlu0 %3507
        %3509 = vrot.lane.b32.xlu0 %v3487, 26
        %v3510 = vpop.permute.xlu0 %3509
        %3511 = vrot.lane.b32.xlu0 %v3488, 26
        %v3512 = vpop.permute.xlu0 %3511
        %vm3513 = vcmask 211968
        %v3514 = vsel %vm3513, %v3498, %v3500
        %v3515 = vsel %vm3513, %v3500, %v3502
        %v3516 = vsel %vm3513, %v3502, %v3504
        %v3517 = vsel %vm3513, %v3504, %v3506
        %v3518 = vsel %vm3513, %v3506, %v3508
        %v3519 = vsel %vm3513, %v3508, %v3510
        %v3520 = vsel %vm3513, %v3510, %v3512
        %3528 = vst [vmem:[#allocation3 + $0x318] sm:$0xff] %v3514
        %3529 = vst [vmem:[#allocation3 + $0x320] sm:$0xff] %v3515
        %3530 = vst [vmem:[#allocation3 + $0x328] sm:$0xff] %v3516
        %3531 = vst [vmem:[#allocation3 + $0x330] sm:$0xff] %v3517
        %3532 = vst [vmem:[#allocation3 + $0x338] sm:$0xff] %v3518
        %3533 = vst [vmem:[#allocation3 + $0x340] sm:$0xff] %v3519
        %3534 = vst [vmem:[#allocation3 + $0x348] sm:$0xff] %v3520
        %v3535 = vld [vmem:[#allocation4] sm:$0xff]
        %v3536 = vld [vmem:[#allocation4 + $0x8] sm:$0xff]
        %v3537 = vld [vmem:[#allocation4 + $0x10] sm:$0xff]
        %v3538 = vld [vmem:[#allocation4 + $0x18] sm:$0xff]
        %v3539 = vld [vmem:[#allocation4 + $0x20] sm:$0xff]
        %v3540 = vld [vmem:[#allocation4 + $0x28] sm:$0xff]
        %v3541 = vld [vmem:[#allocation4 + $0x30] sm:$0xff]
        %v3542 = vld [vmem:[#allocation4 + $0x38] sm:$0xff]
        %3551 = vrot.lane.b32.xlu0 %v3535, 18
        %v3552 = vpop.permute.xlu0 %3551
        %3553 = vrot.lane.b32.xlu0 %v3536, 18
        %v3554 = vpop.permute.xlu0 %3553
        %3555 = vrot.lane.b32.xlu0 %v3537, 18
        %v3556 = vpop.permute.xlu0 %3555
        %3557 = vrot.lane.b32.xlu0 %v3538, 18
        %v3558 = vpop.permute.xlu0 %3557
        %3559 = vrot.lane.b32.xlu0 %v3539, 18
        %v3560 = vpop.permute.xlu0 %3559
        %3561 = vrot.lane.b32.xlu0 %v3540, 18
        %v3562 = vpop.permute.xlu0 %3561
        %3563 = vrot.lane.b32.xlu0 %v3541, 18
        %v3564 = vpop.permute.xlu0 %3563
        %3565 = vrot.lane.b32.xlu0 %v3542, 18
        %v3566 = vpop.permute.xlu0 %3565
        %vm3567 = vcmask 146432
        %v3568 = vsel %vm3567, %v3552, %v3554
        %v3569 = vsel %vm3567, %v3554, %v3556
        %v3570 = vsel %vm3567, %v3556, %v3558
        %v3571 = vsel %vm3567, %v3558, %v3560
        %v3572 = vsel %vm3567, %v3560, %v3562
        %v3573 = vsel %vm3567, %v3562, %v3564
        %v3574 = vsel %vm3567, %v3564, %v3566
        %3582 = vst [vmem:[#allocation3 + $0x360] sm:$0xff] %v3568
        %3583 = vst [vmem:[#allocation3 + $0x368] sm:$0xff] %v3569
        %3584 = vst [vmem:[#allocation3 + $0x370] sm:$0xff] %v3570
        %3585 = vst [vmem:[#allocation3 + $0x378] sm:$0xff] %v3571
        %3586 = vst [vmem:[#allocation3 + $0x380] sm:$0xff] %v3572
        %3587 = vst [vmem:[#allocation3 + $0x388] sm:$0xff] %v3573
        %3588 = vst [vmem:[#allocation3 + $0x390] sm:$0xff] %v3574
        %v3589 = vld [vmem:[#allocation4] sm:$0xff]
        %v3590 = vld [vmem:[#allocation4 + $0x8] sm:$0xff]
        %v3591 = vld [vmem:[#allocation4 + $0x10] sm:$0xff]
        %v3592 = vld [vmem:[#allocation4 + $0x18] sm:$0xff]
        %v3593 = vld [vmem:[#allocation4 + $0x20] sm:$0xff]
        %v3594 = vld [vmem:[#allocation4 + $0x28] sm:$0xff]
        %v3595 = vld [vmem:[#allocation4 + $0x30] sm:$0xff]
        %v3596 = vld [vmem:[#allocation4 + $0x38] sm:$0xff]
        %3605 = vrot.lane.b32.xlu0 %v3589, 17
        %v3606 = vpop.permute.xlu0 %3605
        %3607 = vrot.lane.b32.xlu0 %v3590, 17
        %v3608 = vpop.permute.xlu0 %3607
        %3609 = vrot.lane.b32.xlu0 %v3591, 17
        %v3610 = vpop.permute.xlu0 %3609
        %3611 = vrot.lane.b32.xlu0 %v3592, 17
        %v3612 = vpop.permute.xlu0 %3611
        %3613 = vrot.lane.b32.xlu0 %v3593, 17
        %v3614 = vpop.permute.xlu0 %3613
        %3615 = vrot.lane.b32.xlu0 %v3594, 17
        %v3616 = vpop.permute.xlu0 %3615
        %3617 = vrot.lane.b32.xlu0 %v3595, 17
        %v3618 = vpop.permute.xlu0 %3617
        %3619 = vrot.lane.b32.xlu0 %v3596, 17
        %v3620 = vpop.permute.xlu0 %3619
        %vm3621 = vcmask 138240
        %v3622 = vsel %vm3621, %v3606, %v3608
        %v3623 = vsel %vm3621, %v3608, %v3610
        %v3624 = vsel %vm3621, %v3610, %v3612
        %v3625 = vsel %vm3621, %v3612, %v3614
        %v3626 = vsel %vm3621, %v3614, %v3616
        %v3627 = vsel %vm3621, %v3616, %v3618
        %v3628 = vsel %vm3621, %v3618, %v3620
        %3636 = vst [vmem:[#allocation3 + $0x3a8] sm:$0xff] %v3622
        %3637 = vst [vmem:[#allocation3 + $0x3b0] sm:$0xff] %v3623
        %3638 = vst [vmem:[#allocation3 + $0x3b8] sm:$0xff] %v3624
        %3639 = vst [vmem:[#allocation3 + $0x3c0] sm:$0xff] %v3625
        %3640 = vst [vmem:[#allocation3 + $0x3c8] sm:$0xff] %v3626
        %3641 = vst [vmem:[#allocation3 + $0x3d0] sm:$0xff] %v3627
        %3642 = vst [vmem:[#allocation3 + $0x3d8] sm:$0xff] %v3628
        %v3643 = vld [vmem:[#allocation4] sm:$0xff]
        %v3644 = vld [vmem:[#allocation4 + $0x8] sm:$0xff]
        %v3645 = vld [vmem:[#allocation4 + $0x10] sm:$0xff]
        %v3646 = vld [vmem:[#allocation4 + $0x18] sm:$0xff]
        %v3647 = vld [vmem:[#allocation4 + $0x20] sm:$0xff]
        %v3648 = vld [vmem:[#allocation4 + $0x28] sm:$0xff]
        %v3649 = vld [vmem:[#allocation4 + $0x30] sm:$0xff]
        %v3650 = vld [vmem:[#allocation4 + $0x38] sm:$0xff]
        %3659 = vrot.lane.b32.xlu0 %v3643, 16
        %v3660 = vpop.permute.xlu0 %3659
        %3661 = vrot.lane.b32.xlu0 %v3644, 16
        %v3662 = vpop.permute.xlu0 %3661
        %3663 = vrot.lane.b32.xlu0 %v3645, 16
        %v3664 = vpop.permute.xlu0 %3663
        %3665 = vrot.lane.b32.xlu0 %v3646, 16
        %v3666 = vpop.permute.xlu0 %3665
        %3667 = vrot.lane.b32.xlu0 %v3647, 16
        %v3668 = vpop.permute.xlu0 %3667
        %3669 = vrot.lane.b32.xlu0 %v3648, 16
        %v3670 = vpop.permute.xlu0 %3669
        %3671 = vrot.lane.b32.xlu0 %v3649, 16
        %v3672 = vpop.permute.xlu0 %3671
        %3673 = vrot.lane.b32.xlu0 %v3650, 16
        %v3674 = vpop.permute.xlu0 %3673
        %vm3675 = vcmask 130048
        %v3676 = vsel %vm3675, %v3660, %v3662
        %v3677 = vsel %vm3675, %v3662, %v3664
        %v3678 = vsel %vm3675, %v3664, %v3666
        %v3679 = vsel %vm3675, %v3666, %v3668
        %v3680 = vsel %vm3675, %v3668, %v3670
        %v3681 = vsel %vm3675, %v3670, %v3672
        %v3682 = vsel %vm3675, %v3672, %v3674
        %3690 = vst [vmem:[#allocation3 + $0x3f0] sm:$0xff] %v3676
        %3691 = vst [vmem:[#allocation3 + $0x3f8] sm:$0xff] %v3677
        %3692 = vst [vmem:[#allocation3 + $0x400] sm:$0xff] %v3678
        %3693 = vst [vmem:[#allocation3 + $0x408] sm:$0xff] %v3679
        %3694 = vst [vmem:[#allocation3 + $0x410] sm:$0xff] %v3680
        %3695 = vst [vmem:[#allocation3 + $0x418] sm:$0xff] %v3681
        %3696 = vst [vmem:[#allocation3 + $0x420] sm:$0xff] %v3682
        %v3697 = vld [vmem:[#allocation4] sm:$0xff]
        %v3698 = vld [vmem:[#allocation4 + $0x8] sm:$0xff]
        %v3699 = vld [vmem:[#allocation4 + $0x10] sm:$0xff]
        %v3700 = vld [vmem:[#allocation4 + $0x18] sm:$0xff]
        %v3701 = vld [vmem:[#allocation4 + $0x20] sm:$0xff]
        %v3702 = vld [vmem:[#allocation4 + $0x28] sm:$0xff]
        %v3703 = vld [vmem:[#allocation4 + $0x30] sm:$0xff]
        %v3704 = vld [vmem:[#allocation4 + $0x38] sm:$0xff]
        %3713 = vrot.lane.b32.xlu0 %v3697, 8
        %v3714 = vpop.permute.xlu0 %3713
        %3715 = vrot.lane.b32.xlu0 %v3698, 8
        %v3716 = vpop.permute.xlu0 %3715
        %3717 = vrot.lane.b32.xlu0 %v3699, 8
        %v3718 = vpop.permute.xlu0 %3717
        %3719 = vrot.lane.b32.xlu0 %v3700, 8
        %v3720 = vpop.permute.xlu0 %3719
        %3721 = vrot.lane.b32.xlu0 %v3701, 8
        %v3722 = vpop.permute.xlu0 %3721
        %3723 = vrot.lane.b32.xlu0 %v3702, 8
        %v3724 = vpop.permute.xlu0 %3723
        %3725 = vrot.lane.b32.xlu0 %v3703, 8
        %v3726 = vpop.permute.xlu0 %3725
        %3727 = vrot.lane.b32.xlu0 %v3704, 8
        %v3728 = vpop.permute.xlu0 %3727
        %vm3729 = vcmask 64512
        %v3730 = vsel %vm3729, %v3714, %v3716
        %v3731 = vsel %vm3729, %v3716, %v3718
        %v3732 = vsel %vm3729, %v3718, %v3720
        %v3733 = vsel %vm3729, %v3720, %v3722
        %v3734 = vsel %vm3729, %v3722, %v3724
        %v3735 = vsel %vm3729, %v3724, %v3726
        %v3736 = vsel %vm3729, %v3726, %v3728
        %3744 = vst [vmem:[#allocation3 + $0x438] sm:$0xff] %v3730
        %3745 = vst [vmem:[#allocation3 + $0x440] sm:$0xff] %v3731
        %3746 = vst [vmem:[#allocation3 + $0x448] sm:$0xff] %v3732
        %3747 = vst [vmem:[#allocation3 + $0x450] sm:$0xff] %v3733
        %3748 = vst [vmem:[#allocation3 + $0x458] sm:$0xff] %v3734
        %3749 = vst [vmem:[#allocation3 + $0x460] sm:$0xff] %v3735
        %3750 = vst [vmem:[#allocation3 + $0x468] sm:$0xff] %v3736
        %v3751 = vld [vmem:[#allocation4] sm:$0xff]
        %v3752 = vld [vmem:[#allocation4 + $0x8] sm:$0xff]
        %v3753 = vld [vmem:[#allocation4 + $0x10] sm:$0xff]
        %v3754 = vld [vmem:[#allocation4 + $0x18] sm:$0xff]
        %v3755 = vld [vmem:[#allocation4 + $0x20] sm:$0xff]
        %v3756 = vld [vmem:[#allocation4 + $0x28] sm:$0xff]
        %v3757 = vld [vmem:[#allocation4 + $0x30] sm:$0xff]
        %v3758 = vld [vmem:[#allocation4 + $0x38] sm:$0xff]
        %3767 = vrot.lane.b32.xlu0 %v3751, 7
        %v3768 = vpop.permute.xlu0 %3767
        %3769 = vrot.lane.b32.xlu0 %v3752, 7
        %v3770 = vpop.permute.xlu0 %3769
        %3771 = vrot.lane.b32.xlu0 %v3753, 7
        %v3772 = vpop.permute.xlu0 %3771
        %3773 = vrot.lane.b32.xlu0 %v3754, 7
        %v3774 = vpop.permute.xlu0 %3773
        %3775 = vrot.lane.b32.xlu0 %v3755, 7
        %v3776 = vpop.permute.xlu0 %3775
        %3777 = vrot.lane.b32.xlu0 %v3756, 7
        %v3778 = vpop.permute.xlu0 %3777
        %3779 = vrot.lane.b32.xlu0 %v3757, 7
        %v3780 = vpop.permute.xlu0 %3779
        %3781 = vrot.lane.b32.xlu0 %v3758, 7
        %v3782 = vpop.permute.xlu0 %3781
        %vm3783 = vcmask 56320
        %v3784 = vsel %vm3783, %v3768, %v3770
        %v3785 = vsel %vm3783, %v3770, %v3772
        %v3786 = vsel %vm3783, %v3772, %v3774
        %v3787 = vsel %vm3783, %v3774, %v3776
        %v3788 = vsel %vm3783, %v3776, %v3778
        %v3789 = vsel %vm3783, %v3778, %v3780
        %v3790 = vsel %vm3783, %v3780, %v3782
        %3798 = vst [vmem:[#allocation3 + $0x480] sm:$0xff] %v3784
        %3799 = vst [vmem:[#allocation3 + $0x488] sm:$0xff] %v3785
        %3800 = vst [vmem:[#allocation3 + $0x490] sm:$0xff] %v3786
        %3801 = vst [vmem:[#allocation3 + $0x498] sm:$0xff] %v3787
        %3802 = vst [vmem:[#allocation3 + $0x4a0] sm:$0xff] %v3788
        %3803 = vst [vmem:[#allocation3 + $0x4a8] sm:$0xff] %v3789
        %3804 = vst [vmem:[#allocation3 + $0x4b0] sm:$0xff] %v3790
        %v3805 = vld [vmem:[#allocation4] sm:$0xff]
        %v3806 = vld [vmem:[#allocation4 + $0x8] sm:$0xff]
        %v3807 = vld [vmem:[#allocation4 + $0x10] sm:$0xff]
        %v3808 = vld [vmem:[#allocation4 + $0x18] sm:$0xff]
        %v3809 = vld [vmem:[#allocation4 + $0x20] sm:$0xff]
        %v3810 = vld [vmem:[#allocation4 + $0x28] sm:$0xff]
        %v3811 = vld [vmem:[#allocation4 + $0x30] sm:$0xff]
        %v3812 = vld [vmem:[#allocation4 + $0x38] sm:$0xff]
        %3821 = vrot.lane.b32.xlu0 %v3805, 6
        %v3822 = vpop.permute.xlu0 %3821
        %3823 = vrot.lane.b32.xlu0 %v3806, 6
        %v3824 = vpop.permute.xlu0 %3823
        %3825 = vrot.lane.b32.xlu0 %v3807, 6
        %v3826 = vpop.permute.xlu0 %3825
        %3827 = vrot.lane.b32.xlu0 %v3808, 6
        %v3828 = vpop.permute.xlu0 %3827
        %3829 = vrot.lane.b32.xlu0 %v3809, 6
        %v3830 = vpop.permute.xlu0 %3829
        %3831 = vrot.lane.b32.xlu0 %v3810, 6
        %v3832 = vpop.permute.xlu0 %3831
        %3833 = vrot.lane.b32.xlu0 %v3811, 6
        %v3834 = vpop.permute.xlu0 %3833
        %3835 = vrot.lane.b32.xlu0 %v3812, 6
        %v3836 = vpop.permute.xlu0 %3835
        %vm3837 = vcmask 48128
        %v3838 = vsel %vm3837, %v3822, %v3824
        %v3839 = vsel %vm3837, %v3824, %v3826
        %v3840 = vsel %vm3837, %v3826, %v3828
        %v3841 = vsel %vm3837, %v3828, %v3830
        %v3842 = vsel %vm3837, %v3830, %v3832
        %v3843 = vsel %vm3837, %v3832, %v3834
        %v3844 = vsel %vm3837, %v3834, %v3836
        %3852 = vst [vmem:[#allocation3 + $0x4c8] sm:$0xff] %v3838
        %3853 = vst [vmem:[#allocation3 + $0x4d0] sm:$0xff] %v3839
        %3854 = vst [vmem:[#allocation3 + $0x4d8] sm:$0xff] %v3840
        %3855 = vst [vmem:[#allocation3 + $0x4e0] sm:$0xff] %v3841
        %3856 = vst [vmem:[#allocation3 + $0x4e8] sm:$0xff] %v3842
        %3857 = vst [vmem:[#allocation3 + $0x4f0] sm:$0xff] %v3843
        %3858 = vst [vmem:[#allocation3 + $0x4f8] sm:$0xff] %v3844
        %v3859 = vld [vmem:[#allocation4 + $0x8] sm:$0xff]
        %v3860 = vld [vmem:[#allocation4 + $0x10] sm:$0xff]
        %v3861 = vld [vmem:[#allocation4 + $0x18] sm:$0xff]
        %v3862 = vld [vmem:[#allocation4 + $0x20] sm:$0xff]
        %v3863 = vld [vmem:[#allocation4 + $0x28] sm:$0xff]
        %v3864 = vld [vmem:[#allocation4 + $0x30] sm:$0xff]
        %v3865 = vld [vmem:[#allocation4 + $0x38] sm:$0xff]
        %v3866 = vld [vmem:[#allocation4 + $0x40] sm:$0xff]
        %3875 = vrot.lane.b32.xlu0 %v3859, 56
        %v3876 = vpop.permute.xlu0 %3875
        %3877 = vrot.lane.b32.xlu0 %v3860, 56
        %v3878 = vpop.permute.xlu0 %3877
        %3879 = vrot.lane.b32.xlu0 %v3861, 56
        %v3880 = vpop.permute.xlu0 %3879
        %3881 = vrot.lane.b32.xlu0 %v3862, 56
        %v3882 = vpop.permute.xlu0 %3881
        %3883 = vrot.lane.b32.xlu0 %v3863, 56
        %v3884 = vpop.permute.xlu0 %3883
        %3885 = vrot.lane.b32.xlu0 %v3864, 56
        %v3886 = vpop.permute.xlu0 %3885
        %3887 = vrot.lane.b32.xlu0 %v3865, 56
        %v3888 = vpop.permute.xlu0 %3887
        %3889 = vrot.lane.b32.xlu0 %v3866, 56
        %v3890 = vpop.permute.xlu0 %3889
        %vm3891 = vcmask 457728
        %v3892 = vsel %vm3891, %v3876, %v3878
        %v3893 = vsel %vm3891, %v3878, %v3880
        %v3894 = vsel %vm3891, %v3880, %v3882
        %v3895 = vsel %vm3891, %v3882, %v3884
        %v3896 = vsel %vm3891, %v3884, %v3886
        %v3897 = vsel %vm3891, %v3886, %v3888
        %v3898 = vsel %vm3891, %v3888, %v3890
        %3906 = vst [vmem:[#allocation3 + $0x510] sm:$0xff] %v3892
        %3907 = vst [vmem:[#allocation3 + $0x518] sm:$0xff] %v3893
        %3908 = vst [vmem:[#allocation3 + $0x520] sm:$0xff] %v3894
        %3909 = vst [vmem:[#allocation3 + $0x528] sm:$0xff] %v3895
        %3910 = vst [vmem:[#allocation3 + $0x530] sm:$0xff] %v3896
        %3911 = vst [vmem:[#allocation3 + $0x538] sm:$0xff] %v3897
        %3912 = vst [vmem:[#allocation3 + $0x540] sm:$0xff] %v3898
        %v3913 = vld [vmem:[#allocation4 + $0x8] sm:$0xff]
        %v3914 = vld [vmem:[#allocation4 + $0x10] sm:$0xff]
        %v3915 = vld [vmem:[#allocation4 + $0x18] sm:$0xff]
        %v3916 = vld [vmem:[#allocation4 + $0x20] sm:$0xff]
        %v3917 = vld [vmem:[#allocation4 + $0x28] sm:$0xff]
        %v3918 = vld [vmem:[#allocation4 + $0x30] sm:$0xff]
        %v3919 = vld [vmem:[#allocation4 + $0x38] sm:$0xff]
        %v3920 = vld [vmem:[#allocation4 + $0x40] sm:$0xff]
        %3929 = vrot.lane.b32.xlu0 %v3913, 55
        %v3930 = vpop.permute.xlu0 %3929
        %3931 = vrot.lane.b32.xlu0 %v3914, 55
        %v3932 = vpop.permute.xlu0 %3931
        %3933 = vrot.lane.b32.xlu0 %v3915, 55
        %v3934 = vpop.permute.xlu0 %3933
        %3935 = vrot.lane.b32.xlu0 %v3916, 55
        %v3936 = vpop.permute.xlu0 %3935
        %3937 = vrot.lane.b32.xlu0 %v3917, 55
        %v3938 = vpop.permute.xlu0 %3937
        %3939 = vrot.lane.b32.xlu0 %v3918, 55
        %v3940 = vpop.permute.xlu0 %3939
        %3941 = vrot.lane.b32.xlu0 %v3919, 55
        %v3942 = vpop.permute.xlu0 %3941
        %3943 = vrot.lane.b32.xlu0 %v3920, 55
        %v3944 = vpop.permute.xlu0 %3943
        %vm3945 = vcmask 449536
        %v3946 = vsel %vm3945, %v3930, %v3932
        %v3947 = vsel %vm3945, %v3932, %v3934
        %v3948 = vsel %vm3945, %v3934, %v3936
        %v3949 = vsel %vm3945, %v3936, %v3938
        %v3950 = vsel %vm3945, %v3938, %v3940
        %v3951 = vsel %vm3945, %v3940, %v3942
        %v3952 = vsel %vm3945, %v3942, %v3944
        %3960 = vst [vmem:[#allocation3 + $0x558] sm:$0xff] %v3946
        %3961 = vst [vmem:[#allocation3 + $0x560] sm:$0xff] %v3947
        %3962 = vst [vmem:[#allocation3 + $0x568] sm:$0xff] %v3948
        %3963 = vst [vmem:[#allocation3 + $0x570] sm:$0xff] %v3949
        %3964 = vst [vmem:[#allocation3 + $0x578] sm:$0xff] %v3950
        %3965 = vst [vmem:[#allocation3 + $0x580] sm:$0xff] %v3951
        %3966 = vst [vmem:[#allocation3 + $0x588] sm:$0xff] %v3952
        %v3967 = vld [vmem:[#allocation4 + $0x8] sm:$0xff]
        %v3968 = vld [vmem:[#allocation4 + $0x10] sm:$0xff]
        %v3969 = vld [vmem:[#allocation4 + $0x18] sm:$0xff]
        %v3970 = vld [vmem:[#allocation4 + $0x20] sm:$0xff]
        %v3971 = vld [vmem:[#allocation4 + $0x28] sm:$0xff]
        %v3972 = vld [vmem:[#allocation4 + $0x30] sm:$0xff]
        %v3973 = vld [vmem:[#allocation4 + $0x38] sm:$0xff]
        %v3974 = vld [vmem:[#allocation4 + $0x40] sm:$0xff]
        %3983 = vrot.lane.b32.xlu0 %v3967, 54
        %v3984 = vpop.permute.xlu0 %3983
        %3985 = vrot.lane.b32.xlu0 %v3968, 54
        %v3986 = vpop.permute.xlu0 %3985
        %3987 = vrot.lane.b32.xlu0 %v3969, 54
        %v3988 = vpop.permute.xlu0 %3987
        %3989 = vrot.lane.b32.xlu0 %v3970, 54
        %v3990 = vpop.permute.xlu0 %3989
        %3991 = vrot.lane.b32.xlu0 %v3971, 54
        %v3992 = vpop.permute.xlu0 %3991
        %3993 = vrot.lane.b32.xlu0 %v3972, 54
        %v3994 = vpop.permute.xlu0 %3993
        %3995 = vrot.lane.b32.xlu0 %v3973, 54
        %v3996 = vpop.permute.xlu0 %3995
        %3997 = vrot.lane.b32.xlu0 %v3974, 54
        %v3998 = vpop.permute.xlu0 %3997
        %vm3999 = vcmask 441344
        %v4000 = vsel %vm3999, %v3984, %v3986
        %v4001 = vsel %vm3999, %v3986, %v3988
        %v4002 = vsel %vm3999, %v3988, %v3990
        %v4003 = vsel %vm3999, %v3990, %v3992
        %v4004 = vsel %vm3999, %v3992, %v3994
        %v4005 = vsel %vm3999, %v3994, %v3996
        %v4006 = vsel %vm3999, %v3996, %v3998
        %4014 = vst [vmem:[#allocation3 + $0x5a0] sm:$0xff] %v4000
        %4015 = vst [vmem:[#allocation3 + $0x5a8] sm:$0xff] %v4001
        %4016 = vst [vmem:[#allocation3 + $0x5b0] sm:$0xff] %v4002
        %4017 = vst [vmem:[#allocation3 + $0x5b8] sm:$0xff] %v4003
        %4018 = vst [vmem:[#allocation3 + $0x5c0] sm:$0xff] %v4004
        %4019 = vst [vmem:[#allocation3 + $0x5c8] sm:$0xff] %v4005
        %4020 = vst [vmem:[#allocation3 + $0x5d0] sm:$0xff] %v4006
        %v4021 = vld [vmem:[#allocation4 + $0x8] sm:$0xff]
        %v4022 = vld [vmem:[#allocation4 + $0x10] sm:$0xff]
        %v4023 = vld [vmem:[#allocation4 + $0x18] sm:$0xff]
        %v4024 = vld [vmem:[#allocation4 + $0x20] sm:$0xff]
        %v4025 = vld [vmem:[#allocation4 + $0x28] sm:$0xff]
        %v4026 = vld [vmem:[#allocation4 + $0x30] sm:$0xff]
        %v4027 = vld [vmem:[#allocation4 + $0x38] sm:$0xff]
        %v4028 = vld [vmem:[#allocation4 + $0x40] sm:$0xff]
        %4037 = vrot.lane.b32.xlu0 %v4021, 46
        %v4038 = vpop.permute.xlu0 %4037
        %4039 = vrot.lane.b32.xlu0 %v4022, 46
        %v4040 = vpop.permute.xlu0 %4039
        %4041 = vrot.lane.b32.xlu0 %v4023, 46
        %v4042 = vpop.permute.xlu0 %4041
        %4043 = vrot.lane.b32.xlu0 %v4024, 46
        %v4044 = vpop.permute.xlu0 %4043
        %4045 = vrot.lane.b32.xlu0 %v4025, 46
        %v4046 = vpop.permute.xlu0 %4045
        %4047 = vrot.lane.b32.xlu0 %v4026, 46
        %v4048 = vpop.permute.xlu0 %4047
        %4049 = vrot.lane.b32.xlu0 %v4027, 46
        %v4050 = vpop.permute.xlu0 %4049
        %4051 = vrot.lane.b32.xlu0 %v4028, 46
        %v4052 = vpop.permute.xlu0 %4051
        %vm4053 = vcmask 375808
        %v4054 = vsel %vm4053, %v4038, %v4040
        %v4055 = vsel %vm4053, %v4040, %v4042
        %v4056 = vsel %vm4053, %v4042, %v4044
        %v4057 = vsel %vm4053, %v4044, %v4046
        %v4058 = vsel %vm4053, %v4046, %v4048
        %v4059 = vsel %vm4053, %v4048, %v4050
        %v4060 = vsel %vm4053, %v4050, %v4052
        %4068 = vst [vmem:[#allocation3 + $0x5e8] sm:$0xff] %v4054
        %4069 = vst [vmem:[#allocation3 + $0x5f0] sm:$0xff] %v4055
        %4070 = vst [vmem:[#allocation3 + $0x5f8] sm:$0xff] %v4056
        %4071 = vst [vmem:[#allocation3 + $0x600] sm:$0xff] %v4057
        %4072 = vst [vmem:[#allocation3 + $0x608] sm:$0xff] %v4058
        %4073 = vst [vmem:[#allocation3 + $0x610] sm:$0xff] %v4059
        %4074 = vst [vmem:[#allocation3 + $0x618] sm:$0xff] %v4060
        %v4075 = vld [vmem:[#allocation4 + $0x8] sm:$0xff]
        %v4076 = vld [vmem:[#allocation4 + $0x10] sm:$0xff]
        %v4077 = vld [vmem:[#allocation4 + $0x18] sm:$0xff]
        %v4078 = vld [vmem:[#allocation4 + $0x20] sm:$0xff]
        %v4079 = vld [vmem:[#allocation4 + $0x28] sm:$0xff]
        %v4080 = vld [vmem:[#allocation4 + $0x30] sm:$0xff]
        %v4081 = vld [vmem:[#allocation4 + $0x38] sm:$0xff]
        %v4082 = vld [vmem:[#allocation4 + $0x40] sm:$0xff]
        %4091 = vrot.lane.b32.xlu0 %v4075, 45
        %v4092 = vpop.permute.xlu0 %4091
        %4093 = vrot.lane.b32.xlu0 %v4076, 45
        %v4094 = vpop.permute.xlu0 %4093
        %4095 = vrot.lane.b32.xlu0 %v4077, 45
        %v4096 = vpop.permute.xlu0 %4095
        %4097 = vrot.lane.b32.xlu0 %v4078, 45
        %v4098 = vpop.permute.xlu0 %4097
        %4099 = vrot.lane.b32.xlu0 %v4079, 45
        %v4100 = vpop.permute.xlu0 %4099
        %4101 = vrot.lane.b32.xlu0 %v4080, 45
        %v4102 = vpop.permute.xlu0 %4101
        %4103 = vrot.lane.b32.xlu0 %v4081, 45
        %v4104 = vpop.permute.xlu0 %4103
        %4105 = vrot.lane.b32.xlu0 %v4082, 45
        %v4106 = vpop.permute.xlu0 %4105
        %vm4107 = vcmask 367616
        %v4108 = vsel %vm4107, %v4092, %v4094
        %v4109 = vsel %vm4107, %v4094, %v4096
        %v4110 = vsel %vm4107, %v4096, %v4098
        %v4111 = vsel %vm4107, %v4098, %v4100
        %v4112 = vsel %vm4107, %v4100, %v4102
        %v4113 = vsel %vm4107, %v4102, %v4104
        %v4114 = vsel %vm4107, %v4104, %v4106
        %4122 = vst [vmem:[#allocation3 + $0x630] sm:$0xff] %v4108
        %4123 = vst [vmem:[#allocation3 + $0x638] sm:$0xff] %v4109
        %4124 = vst [vmem:[#allocation3 + $0x640] sm:$0xff] %v4110
        %4125 = vst [vmem:[#allocation3 + $0x648] sm:$0xff] %v4111
        %4126 = vst [vmem:[#allocation3 + $0x650] sm:$0xff] %v4112
        %4127 = vst [vmem:[#allocation3 + $0x658] sm:$0xff] %v4113
        %4128 = vst [vmem:[#allocation3 + $0x660] sm:$0xff] %v4114
        %v4129 = vld [vmem:[#allocation4 + $0x8] sm:$0xff]
        %v4130 = vld [vmem:[#allocation4 + $0x10] sm:$0xff]
        %v4131 = vld [vmem:[#allocation4 + $0x18] sm:$0xff]
        %v4132 = vld [vmem:[#allocation4 + $0x20] sm:$0xff]
        %v4133 = vld [vmem:[#allocation4 + $0x28] sm:$0xff]
        %v4134 = vld [vmem:[#allocation4 + $0x30] sm:$0xff]
        %v4135 = vld [vmem:[#allocation4 + $0x38] sm:$0xff]
        %v4136 = vld [vmem:[#allocation4 + $0x40] sm:$0xff]
        %4145 = vrot.lane.b32.xlu0 %v4129, 44
        %v4146 = vpop.permute.xlu0 %4145
        %4147 = vrot.lane.b32.xlu0 %v4130, 44
        %v4148 = vpop.permute.xlu0 %4147
        %4149 = vrot.lane.b32.xlu0 %v4131, 44
        %v4150 = vpop.permute.xlu0 %4149
        %4151 = vrot.lane.b32.xlu0 %v4132, 44
        %v4152 = vpop.permute.xlu0 %4151
        %4153 = vrot.lane.b32.xlu0 %v4133, 44
        %v4154 = vpop.permute.xlu0 %4153
        %4155 = vrot.lane.b32.xlu0 %v4134, 44
        %v4156 = vpop.permute.xlu0 %4155
        %4157 = vrot.lane.b32.xlu0 %v4135, 44
        %v4158 = vpop.permute.xlu0 %4157
        %4159 = vrot.lane.b32.xlu0 %v4136, 44
        %v4160 = vpop.permute.xlu0 %4159
        %vm4161 = vcmask 359424
        %v4162 = vsel %vm4161, %v4146, %v4148
        %v4163 = vsel %vm4161, %v4148, %v4150
        %v4164 = vsel %vm4161, %v4150, %v4152
        %v4165 = vsel %vm4161, %v4152, %v4154
        %v4166 = vsel %vm4161, %v4154, %v4156
        %v4167 = vsel %vm4161, %v4156, %v4158
        %v4168 = vsel %vm4161, %v4158, %v4160
        %4176 = vst [vmem:[#allocation3 + $0x678] sm:$0xff] %v4162
        %4177 = vst [vmem:[#allocation3 + $0x680] sm:$0xff] %v4163
        %4178 = vst [vmem:[#allocation3 + $0x688] sm:$0xff] %v4164
        %4179 = vst [vmem:[#allocation3 + $0x690] sm:$0xff] %v4165
        %4180 = vst [vmem:[#allocation3 + $0x698] sm:$0xff] %v4166
        %4181 = vst [vmem:[#allocation3 + $0x6a0] sm:$0xff] %v4167
        %4182 = vst [vmem:[#allocation3 + $0x6a8] sm:$0xff] %v4168
        %v4183 = vld [vmem:[#allocation4 + $0x8] sm:$0xff]
        %v4184 = vld [vmem:[#allocation4 + $0x10] sm:$0xff]
        %v4185 = vld [vmem:[#allocation4 + $0x18] sm:$0xff]
        %v4186 = vld [vmem:[#allocation4 + $0x20] sm:$0xff]
        %v4187 = vld [vmem:[#allocation4 + $0x28] sm:$0xff]
        %v4188 = vld [vmem:[#allocation4 + $0x30] sm:$0xff]
        %v4189 = vld [vmem:[#allocation4 + $0x38] sm:$0xff]
        %v4190 = vld [vmem:[#allocation4 + $0x40] sm:$0xff]
        %4199 = vrot.lane.b32.xlu0 %v4183, 36
        %v4200 = vpop.permute.xlu0 %4199
        %4201 = vrot.lane.b32.xlu0 %v4184, 36
        %v4202 = vpop.permute.xlu0 %4201
        %4203 = vrot.lane.b32.xlu0 %v4185, 36
        %v4204 = vpop.permute.xlu0 %4203
        %4205 = vrot.lane.b32.xlu0 %v4186, 36
        %v4206 = vpop.permute.xlu0 %4205
        %4207 = vrot.lane.b32.xlu0 %v4187, 36
        %v4208 = vpop.permute.xlu0 %4207
        %4209 = vrot.lane.b32.xlu0 %v4188, 36
        %v4210 = vpop.permute.xlu0 %4209
        %4211 = vrot.lane.b32.xlu0 %v4189, 36
        %v4212 = vpop.permute.xlu0 %4211
        %4213 = vrot.lane.b32.xlu0 %v4190, 36
        %v4214 = vpop.permute.xlu0 %4213
        %vm4215 = vcmask 293888
        %v4216 = vsel %vm4215, %v4200, %v4202
        %v4217 = vsel %vm4215, %v4202, %v4204
        %v4218 = vsel %vm4215, %v4204, %v4206
        %v4219 = vsel %vm4215, %v4206, %v4208
        %v4220 = vsel %vm4215, %v4208, %v4210
        %v4221 = vsel %vm4215, %v4210, %v4212
        %v4222 = vsel %vm4215, %v4212, %v4214
        %4230 = vst [vmem:[#allocation3 + $0x6c0] sm:$0xff] %v4216
        %4231 = vst [vmem:[#allocation3 + $0x6c8] sm:$0xff] %v4217
        %4232 = vst [vmem:[#allocation3 + $0x6d0] sm:$0xff] %v4218
        %4233 = vst [vmem:[#allocation3 + $0x6d8] sm:$0xff] %v4219
        %4234 = vst [vmem:[#allocation3 + $0x6e0] sm:$0xff] %v4220
        %4235 = vst [vmem:[#allocation3 + $0x6e8] sm:$0xff] %v4221
        %4236 = vst [vmem:[#allocation3 + $0x6f0] sm:$0xff] %v4222
        %v4237 = vld [vmem:[#allocation4 + $0x8] sm:$0xff]
        %v4238 = vld [vmem:[#allocation4 + $0x10] sm:$0xff]
        %v4239 = vld [vmem:[#allocation4 + $0x18] sm:$0xff]
        %v4240 = vld [vmem:[#allocation4 + $0x20] sm:$0xff]
        %v4241 = vld [vmem:[#allocation4 + $0x28] sm:$0xff]
        %v4242 = vld [vmem:[#allocation4 + $0x30] sm:$0xff]
        %v4243 = vld [vmem:[#allocation4 + $0x38] sm:$0xff]
        %v4244 = vld [vmem:[#allocation4 + $0x40] sm:$0xff]
        %4253 = vrot.lane.b32.xlu0 %v4237, 35
        %v4254 = vpop.permute.xlu0 %4253
        %4255 = vrot.lane.b32.xlu0 %v4238, 35
        %v4256 = vpop.permute.xlu0 %4255
        %4257 = vrot.lane.b32.xlu0 %v4239, 35
        %v4258 = vpop.permute.xlu0 %4257
        %4259 = vrot.lane.b32.xlu0 %v4240, 35
        %v4260 = vpop.permute.xlu0 %4259
        %4261 = vrot.lane.b32.xlu0 %v4241, 35
        %v4262 = vpop.permute.xlu0 %4261
        %4263 = vrot.lane.b32.xlu0 %v4242, 35
        %v4264 = vpop.permute.xlu0 %4263
        %4265 = vrot.lane.b32.xlu0 %v4243, 35
        %v4266 = vpop.permute.xlu0 %4265
        %4267 = vrot.lane.b32.xlu0 %v4244, 35
        %v4268 = vpop.permute.xlu0 %4267
        %vm4269 = vcmask 285696
        %v4270 = vsel %vm4269, %v4254, %v4256
        %v4271 = vsel %vm4269, %v4256, %v4258
        %v4272 = vsel %vm4269, %v4258, %v4260
        %v4273 = vsel %vm4269, %v4260, %v4262
        %v4274 = vsel %vm4269, %v4262, %v4264
        %v4275 = vsel %vm4269, %v4264, %v4266
        %v4276 = vsel %vm4269, %v4266, %v4268
        %4284 = vst [vmem:[#allocation3 + $0x708] sm:$0xff] %v4270
        %4285 = vst [vmem:[#allocation3 + $0x710] sm:$0xff] %v4271
        %4286 = vst [vmem:[#allocation3 + $0x718] sm:$0xff] %v4272
        %4287 = vst [vmem:[#allocation3 + $0x720] sm:$0xff] %v4273
        %4288 = vst [vmem:[#allocation3 + $0x728] sm:$0xff] %v4274
        %4289 = vst [vmem:[#allocation3 + $0x730] sm:$0xff] %v4275
        %4290 = vst [vmem:[#allocation3 + $0x738] sm:$0xff] %v4276
        %v4291 = vld [vmem:[#allocation4 + $0x8] sm:$0xff]
        %v4292 = vld [vmem:[#allocation4 + $0x10] sm:$0xff]
        %v4293 = vld [vmem:[#allocation4 + $0x18] sm:$0xff]
        %v4294 = vld [vmem:[#allocation4 + $0x20] sm:$0xff]
        %v4295 = vld [vmem:[#allocation4 + $0x28] sm:$0xff]
        %v4296 = vld [vmem:[#allocation4 + $0x30] sm:$0xff]
        %v4297 = vld [vmem:[#allocation4 + $0x38] sm:$0xff]
        %v4298 = vld [vmem:[#allocation4 + $0x40] sm:$0xff]
        %4307 = vrot.lane.b32.xlu0 %v4291, 34
        %v4308 = vpop.permute.xlu0 %4307
        %4309 = vrot.lane.b32.xlu0 %v4292, 34
        %v4310 = vpop.permute.xlu0 %4309
        %4311 = vrot.lane.b32.xlu0 %v4293, 34
        %v4312 = vpop.permute.xlu0 %4311
        %4313 = vrot.lane.b32.xlu0 %v4294, 34
        %v4314 = vpop.permute.xlu0 %4313
        %4315 = vrot.lane.b32.xlu0 %v4295, 34
        %v4316 = vpop.permute.xlu0 %4315
        %4317 = vrot.lane.b32.xlu0 %v4296, 34
        %v4318 = vpop.permute.xlu0 %4317
        %4319 = vrot.lane.b32.xlu0 %v4297, 34
        %v4320 = vpop.permute.xlu0 %4319
        %4321 = vrot.lane.b32.xlu0 %v4298, 34
        %v4322 = vpop.permute.xlu0 %4321
        %vm4323 = vcmask 277504
        %v4324 = vsel %vm4323, %v4308, %v4310
        %v4325 = vsel %vm4323, %v4310, %v4312
        %v4326 = vsel %vm4323, %v4312, %v4314
        %v4327 = vsel %vm4323, %v4314, %v4316
        %v4328 = vsel %vm4323, %v4316, %v4318
        %v4329 = vsel %vm4323, %v4318, %v4320
        %v4330 = vsel %vm4323, %v4320, %v4322
        %4338 = vst [vmem:[#allocation3 + $0x750] sm:$0xff] %v4324
        %4339 = vst [vmem:[#allocation3 + $0x758] sm:$0xff] %v4325
        %4340 = vst [vmem:[#allocation3 + $0x760] sm:$0xff] %v4326
        %4341 = vst [vmem:[#allocation3 + $0x768] sm:$0xff] %v4327
        %4342 = vst [vmem:[#allocation3 + $0x770] sm:$0xff] %v4328
        %4343 = vst [vmem:[#allocation3 + $0x778] sm:$0xff] %v4329
        %4344 = vst [vmem:[#allocation3 + $0x780] sm:$0xff] %v4330
        %v4345 = vld [vmem:[%s3] sm:$0xff]
        %v4346 = vld [vmem:[%s3 + $0x8] sm:$0xff]
        %v4347 = vld [vmem:[#allocation3] sm:$0xff]
        %v4348 = vld [vmem:[#allocation3 + $0x8] sm:$0xff]
        %v4349 = vld [vmem:[#allocation3 + $0x10] sm:$0xff]
        %v4350 = vld [vmem:[#allocation3 + $0x18] sm:$0xff]
        %v4351 = vld [vmem:[#allocation3 + $0x20] sm:$0xff]
        %v4352 = vld [vmem:[#allocation3 + $0x28] sm:$0xff]
        %v4353 = vld [vmem:[#allocation3 + $0x30] sm:$0xff]
        %v4354 = vld [vmem:[#allocation3 + $0x48] sm:$0xff]
        %v4355 = vld [vmem:[#allocation3 + $0x50] sm:$0xff]
        %v4356 = vld [vmem:[#allocation3 + $0x58] sm:$0xff]
        %v4357 = vld [vmem:[#allocation3 + $0x60] sm:$0xff]
        %v4358 = vld [vmem:[#allocation3 + $0x68] sm:$0xff]
        %v4359 = vld [vmem:[#allocation3 + $0x70] sm:$0xff]
        %v4360 = vld [vmem:[#allocation3 + $0x78] sm:$0xff]
        %v4361 = vld [vmem:[#allocation3 + $0x90] sm:$0xff]
        %v4362 = vld [vmem:[#allocation3 + $0x98] sm:$0xff]
        %v4363 = vld [vmem:[#allocation3 + $0xa0] sm:$0xff]
        %v4364 = vld [vmem:[#allocation3 + $0xa8] sm:$0xff]
        %v4365 = vld [vmem:[#allocation3 + $0xb0] sm:$0xff]
        %v4366 = vld [vmem:[#allocation3 + $0xb8] sm:$0xff]
        %v4367 = vld [vmem:[#allocation3 + $0xc0] sm:$0xff]
        %v4368 = vld [vmem:[#allocation3 + $0xd8] sm:$0xff]
        %v4369 = vld [vmem:[#allocation3 + $0xe0] sm:$0xff]
        %v4370 = vld [vmem:[#allocation3 + $0xe8] sm:$0xff]
        %v4371 = vld [vmem:[#allocation3 + $0xf0] sm:$0xff]
        %v4372 = vld [vmem:[#allocation3 + $0xf8] sm:$0xff]
        %v4373 = vld [vmem:[#allocation3 + $0x100] sm:$0xff]
        %v4374 = vld [vmem:[#allocation3 + $0x108] sm:$0xff]
        %v4375 = vld [vmem:[#allocation3 + $0x120] sm:$0xff]
        %v4376 = vld [vmem:[#allocation3 + $0x128] sm:$0xff]
        %v4377 = vld [vmem:[#allocation3 + $0x130] sm:$0xff]
        %v4378 = vld [vmem:[#allocation3 + $0x138] sm:$0xff]
        %v4379 = vld [vmem:[#allocation3 + $0x140] sm:$0xff]
        %v4380 = vld [vmem:[#allocation3 + $0x148] sm:$0xff]
        %v4381 = vld [vmem:[#allocation3 + $0x150] sm:$0xff]
        %v4382 = vld [vmem:[#allocation3 + $0x168] sm:$0xff]
        %v4383 = vld [vmem:[#allocation3 + $0x170] sm:$0xff]
        %v4384 = vld [vmem:[#allocation3 + $0x178] sm:$0xff]
        %v4385 = vld [vmem:[#allocation3 + $0x180] sm:$0xff]
        %v4386 = vld [vmem:[#allocation3 + $0x188] sm:$0xff]
        %v4387 = vld [vmem:[#allocation3 + $0x190] sm:$0xff]
        %v4388 = vld [vmem:[#allocation3 + $0x198] sm:$0xff]
        %v4389 = vld [vmem:[#allocation3 + $0x1b0] sm:$0xff]
        %v4390 = vld [vmem:[#allocation3 + $0x1b8] sm:$0xff]
        %v4391 = vld [vmem:[#allocation3 + $0x1c0] sm:$0xff]
        %v4392 = vld [vmem:[#allocation3 + $0x1c8] sm:$0xff]
        %v4393 = vld [vmem:[#allocation3 + $0x1d0] sm:$0xff]
        %v4394 = vld [vmem:[#allocation3 + $0x1d8] sm:$0xff]
        %v4395 = vld [vmem:[#allocation3 + $0x1e0] sm:$0xff]
        %v4396 = vld [vmem:[#allocation3 + $0x1f8] sm:$0xff]
        %v4397 = vld [vmem:[#allocation3 + $0x200] sm:$0xff]
        %v4398 = vld [vmem:[#allocation3 + $0x208] sm:$0xff]
        %v4399 = vld [vmem:[#allocation3 + $0x210] sm:$0xff]
        %v4400 = vld [vmem:[#allocation3 + $0x218] sm:$0xff]
        %v4401 = vld [vmem:[#allocation3 + $0x220] sm:$0xff]
        %v4402 = vld [vmem:[#allocation3 + $0x228] sm:$0xff]
        %v4403 = vld [vmem:[#allocation3 + $0x240] sm:$0xff]
        %v4404 = vld [vmem:[#allocation3 + $0x248] sm:$0xff]
        %v4405 = vld [vmem:[#allocation3 + $0x250] sm:$0xff]
        %v4406 = vld [vmem:[#allocation3 + $0x258] sm:$0xff]
        %v4407 = vld [vmem:[#allocation3 + $0x260] sm:$0xff]
        %v4408 = vld [vmem:[#allocation3 + $0x268] sm:$0xff]
        %v4409 = vld [vmem:[#allocation3 + $0x270] sm:$0xff]
        %v4410 = vld [vmem:[#allocation3 + $0x288] sm:$0xff]
        %v4411 = vld [vmem:[#allocation3 + $0x290] sm:$0xff]
        %v4412 = vld [vmem:[#allocation3 + $0x298] sm:$0xff]
        %v4413 = vld [vmem:[#allocation3 + $0x2a0] sm:$0xff]
        %v4414 = vld [vmem:[#allocation3 + $0x2a8] sm:$0xff]
        %v4415 = vld [vmem:[#allocation3 + $0x2b0] sm:$0xff]
        %v4416 = vld [vmem:[#allocation3 + $0x2b8] sm:$0xff]
        %v4417 = vld [vmem:[#allocation3 + $0x2d0] sm:$0xff]
        %v4418 = vld [vmem:[#allocation3 + $0x2d8] sm:$0xff]
        %v4419 = vld [vmem:[#allocation3 + $0x2e0] sm:$0xff]
        %v4420 = vld [vmem:[#allocation3 + $0x2e8] sm:$0xff]
        %v4421 = vld [vmem:[#allocation3 + $0x2f0] sm:$0xff]
        %v4422 = vld [vmem:[#allocation3 + $0x2f8] sm:$0xff]
        %v4423 = vld [vmem:[#allocation3 + $0x300] sm:$0xff]
        %v4424 = vld [vmem:[#allocation3 + $0x318] sm:$0xff]
        %v4425 = vld [vmem:[#allocation3 + $0x320] sm:$0xff]
        %v4426 = vld [vmem:[#allocation3 + $0x328] sm:$0xff]
        %v4427 = vld [vmem:[#allocation3 + $0x330] sm:$0xff]
        %v4428 = vld [vmem:[#allocation3 + $0x338] sm:$0xff]
        %v4429 = vld [vmem:[#allocation3 + $0x340] sm:$0xff]
        %v4430 = vld [vmem:[#allocation3 + $0x348] sm:$0xff]
        %v4431 = vld [vmem:[#allocation3 + $0x360] sm:$0xff]
        %v4432 = vld [vmem:[#allocation3 + $0x368] sm:$0xff]
        %v4433 = vld [vmem:[#allocation3 + $0x370] sm:$0xff]
        %v4434 = vld [vmem:[#allocation3 + $0x378] sm:$0xff]
        %v4435 = vld [vmem:[#allocation3 + $0x380] sm:$0xff]
        %v4436 = vld [vmem:[#allocation3 + $0x388] sm:$0xff]
        %v4437 = vld [vmem:[#allocation3 + $0x390] sm:$0xff]
        %v4438 = vld [vmem:[#allocation3 + $0x3a8] sm:$0xff]
        %v4439 = vld [vmem:[#allocation3 + $0x3b0] sm:$0xff]
        %v4440 = vld [vmem:[#allocation3 + $0x3b8] sm:$0xff]
        %v4441 = vld [vmem:[#allocation3 + $0x3c0] sm:$0xff]
        %v4442 = vld [vmem:[#allocation3 + $0x3c8] sm:$0xff]
        %v4443 = vld [vmem:[#allocation3 + $0x3d0] sm:$0xff]
        %v4444 = vld [vmem:[#allocation3 + $0x3d8] sm:$0xff]
        %v4445 = vld [vmem:[#allocation3 + $0x3f0] sm:$0xff]
        %v4446 = vld [vmem:[#allocation3 + $0x3f8] sm:$0xff]
        %v4447 = vld [vmem:[#allocation3 + $0x400] sm:$0xff]
        %v4448 = vld [vmem:[#allocation3 + $0x408] sm:$0xff]
        %v4449 = vld [vmem:[#allocation3 + $0x410] sm:$0xff]
        %v4450 = vld [vmem:[#allocation3 + $0x418] sm:$0xff]
        %v4451 = vld [vmem:[#allocation3 + $0x420] sm:$0xff]
        %v4452 = vld [vmem:[#allocation3 + $0x438] sm:$0xff]
        %v4453 = vld [vmem:[#allocation3 + $0x440] sm:$0xff]
        %v4454 = vld [vmem:[#allocation3 + $0x448] sm:$0xff]
        %v4455 = vld [vmem:[#allocation3 + $0x450] sm:$0xff]
        %v4456 = vld [vmem:[#allocation3 + $0x458] sm:$0xff]
        %v4457 = vld [vmem:[#allocation3 + $0x460] sm:$0xff]
        %v4458 = vld [vmem:[#allocation3 + $0x468] sm:$0xff]
        %v4459 = vld [vmem:[#allocation3 + $0x480] sm:$0xff]
        %v4460 = vld [vmem:[#allocation3 + $0x488] sm:$0xff]
        %v4461 = vld [vmem:[#allocation3 + $0x490] sm:$0xff]
        %v4462 = vld [vmem:[#allocation3 + $0x498] sm:$0xff]
        %v4463 = vld [vmem:[#allocation3 + $0x4a0] sm:$0xff]
        %v4464 = vld [vmem:[#allocation3 + $0x4a8] sm:$0xff]
        %v4465 = vld [vmem:[#allocation3 + $0x4b0] sm:$0xff]
        %v4466 = vld [vmem:[#allocation3 + $0x4c8] sm:$0xff]
        %v4467 = vld [vmem:[#allocation3 + $0x4d0] sm:$0xff]
        %v4468 = vld [vmem:[#allocation3 + $0x4d8] sm:$0xff]
        %v4469 = vld [vmem:[#allocation3 + $0x4e0] sm:$0xff]
        %v4470 = vld [vmem:[#allocation3 + $0x4e8] sm:$0xff]
        %v4471 = vld [vmem:[#allocation3 + $0x4f0] sm:$0xff]
        %v4472 = vld [vmem:[#allocation3 + $0x4f8] sm:$0xff]
        %v4473 = vld [vmem:[#allocation3 + $0x510] sm:$0xff]
        %v4474 = vld [vmem:[#allocation3 + $0x518] sm:$0xff]
        %v4475 = vld [vmem:[#allocation3 + $0x520] sm:$0xff]
        %v4476 = vld [vmem:[#allocation3 + $0x528] sm:$0xff]
        %v4477 = vld [vmem:[#allocation3 + $0x530] sm:$0xff]
        %v4478 = vld [vmem:[#allocation3 + $0x538] sm:$0xff]
        %v4479 = vld [vmem:[#allocation3 + $0x540] sm:$0xff]
        %v4480 = vld [vmem:[#allocation3 + $0x558] sm:$0xff]
        %v4481 = vld [vmem:[#allocation3 + $0x560] sm:$0xff]
        %v4482 = vld [vmem:[#allocation3 + $0x568] sm:$0xff]
        %v4483 = vld [vmem:[#allocation3 + $0x570] sm:$0xff]
        %v4484 = vld [vmem:[#allocation3 + $0x578] sm:$0xff]
        %v4485 = vld [vmem:[#allocation3 + $0x580] sm:$0xff]
        %v4486 = vld [vmem:[#allocation3 + $0x588] sm:$0xff]
        %v4487 = vld [vmem:[#allocation3 + $0x5a0] sm:$0xff]
        %v4488 = vld [vmem:[#allocation3 + $0x5a8] sm:$0xff]
        %v4489 = vld [vmem:[#allocation3 + $0x5b0] sm:$0xff]
        %v4490 = vld [vmem:[#allocation3 + $0x5b8] sm:$0xff]
        %v4491 = vld [vmem:[#allocation3 + $0x5c0] sm:$0xff]
        %v4492 = vld [vmem:[#allocation3 + $0x5c8] sm:$0xff]
        %v4493 = vld [vmem:[#allocation3 + $0x5d0] sm:$0xff]
        %v4494 = vld [vmem:[#allocation3 + $0x5e8] sm:$0xff]
        %v4495 = vld [vmem:[#allocation3 + $0x5f0] sm:$0xff]
        %v4496 = vld [vmem:[#allocation3 + $0x5f8] sm:$0xff]
        %v4497 = vld [vmem:[#allocation3 + $0x600] sm:$0xff]
        %v4498 = vld [vmem:[#allocation3 + $0x608] sm:$0xff]
        %v4499 = vld [vmem:[#allocation3 + $0x610] sm:$0xff]
        %v4500 = vld [vmem:[#allocation3 + $0x618] sm:$0xff]
        %v4501 = vld [vmem:[#allocation3 + $0x630] sm:$0xff]
        %v4502 = vld [vmem:[#allocation3 + $0x638] sm:$0xff]
        %v4503 = vld [vmem:[#allocation3 + $0x640] sm:$0xff]
        %v4504 = vld [vmem:[#allocation3 + $0x648] sm:$0xff]
        %v4505 = vld [vmem:[#allocation3 + $0x650] sm:$0xff]
        %v4506 = vld [vmem:[#allocation3 + $0x658] sm:$0xff]
        %v4507 = vld [vmem:[#allocation3 + $0x660] sm:$0xff]
        %v4508 = vld [vmem:[#allocation3 + $0x678] sm:$0xff]
        %v4509 = vld [vmem:[#allocation3 + $0x680] sm:$0xff]
        %v4510 = vld [vmem:[#allocation3 + $0x688] sm:$0xff]
        %v4511 = vld [vmem:[#allocation3 + $0x690] sm:$0xff]
        %v4512 = vld [vmem:[#allocation3 + $0x698] sm:$0xff]
        %v4513 = vld [vmem:[#allocation3 + $0x6a0] sm:$0xff]
        %v4514 = vld [vmem:[#allocation3 + $0x6a8] sm:$0xff]
        %v4515 = vld [vmem:[#allocation3 + $0x6c0] sm:$0xff]
        %v4516 = vld [vmem:[#allocation3 + $0x6c8] sm:$0xff]
        %v4517 = vld [vmem:[#allocation3 + $0x6d0] sm:$0xff]
        %v4518 = vld [vmem:[#allocation3 + $0x6d8] sm:$0xff]
        %v4519 = vld [vmem:[#allocation3 + $0x6e0] sm:$0xff]
        %v4520 = vld [vmem:[#allocation3 + $0x6e8] sm:$0xff]
        %v4521 = vld [vmem:[#allocation3 + $0x6f0] sm:$0xff]
        %v4522 = vld [vmem:[#allocation3 + $0x708] sm:$0xff]
        %v4523 = vld [vmem:[#allocation3 + $0x710] sm:$0xff]
        %v4524 = vld [vmem:[#allocation3 + $0x718] sm:$0xff]
        %v4525 = vld [vmem:[#allocation3 + $0x720] sm:$0xff]
        %v4526 = vld [vmem:[#allocation3 + $0x728] sm:$0xff]
        %v4527 = vld [vmem:[#allocation3 + $0x730] sm:$0xff]
        %v4528 = vld [vmem:[#allocation3 + $0x738] sm:$0xff]
        %v4529 = vld [vmem:[#allocation3 + $0x750] sm:$0xff]
        %v4530 = vld [vmem:[#allocation3 + $0x758] sm:$0xff]
        %v4531 = vld [vmem:[#allocation3 + $0x760] sm:$0xff]
        %v4532 = vld [vmem:[#allocation3 + $0x768] sm:$0xff]
        %v4533 = vld [vmem:[#allocation3 + $0x770] sm:$0xff]
        %v4534 = vld [vmem:[#allocation3 + $0x778] sm:$0xff]
        %v4535 = vld [vmem:[#allocation3 + $0x780] sm:$0xff]
        %v4536 = vld [vmem:[%s4] sm:$0xff]
        %4538 = vset.pattern.permute.xlu0 0
        %4539 = vperm.xlu0 %4538, %v4536
        %v4540 = vpop.permute.xlu0 %4539
        %v4544 = vunpack.c.l.b16 %v4345
        %v4545 = vunpack.c.h.b16 %v4345
        %v4546 = vunpack.c.l.b16 %v4346
        %v4547 = vunpack.c.h.b16 %v4346
        %v4548 = vpack.c.b16 %v4544, %v4544
        %v4549 = vpack.c.b16 %v4545, %v4545
        %v4550 = vpack.c.b16 %v4546, %v4546
        %v4551 = vpack.c.b16 %v4547, %v4547
        %v4556 = vsel %vm2394, %v4551, 0
        %4558 = vmatprep.subr.bf16.mxu0 %v4348
        %4559 = vmatpush1.bf16.msra.mxu0 %v4347
        %4560 = vmatprep.subr.bf16.mxu0 %v4355
        %4561 = vmatpush1.bf16.msra.mxu0 %v4354
        %4562 = vmatprep.subr.bf16.mxu0 %v4362
        %4563 = vmatpush1.bf16.msra.mxu0 %v4361
        %4564 = vmatprep.subr.bf16.mxu0 %v4369
        %4565 = vmatpush1.bf16.msra.mxu0 %v4368
        %4566 = vmatprep.subr.bf16.mxu0 %v4376
        %4567 = vmatpush1.bf16.msra.mxu0 %v4375
        %4568 = vmatprep.subr.bf16.mxu0 %v4383
        %4569 = vmatpush1.bf16.msra.mxu0 %v4382
        %4570 = vmatprep.subr.bf16.mxu0 %v4390
        %4571 = vmatpush1.bf16.msra.mxu0 %v4389
        %4572 = vmatprep.subr.bf16.mxu0 %v4397
        %4573 = vmatpush1.bf16.msra.mxu0 %v4396
        %4574 = vmatprep.subr.bf16.mxu0 %v4404
        %4575 = vmatpush1.bf16.msra.mxu0 %v4403
        %4576 = vmatprep.subr.bf16.mxu0 %v4411
        %4577 = vmatpush1.bf16.msra.mxu0 %v4410
        %4578 = vmatprep.subr.bf16.mxu0 %v4418
        %4579 = vmatpush1.bf16.msra.mxu0 %v4417
        %4580 = vmatprep.subr.bf16.mxu0 %v4425
        %4581 = vmatpush1.bf16.msra.mxu0 %v4424
        %4582 = vmatprep.subr.bf16.mxu0 %v4432
        %4583 = vmatpush1.bf16.msra.mxu0 %v4431
        %4584 = vmatprep.subr.bf16.mxu0 %v4439
        %4585 = vmatpush1.bf16.msra.mxu0 %v4438
        %4586 = vmatprep.subr.bf16.mxu0 %v4446
        %4587 = vmatpush1.bf16.msra.mxu0 %v4445
        %4588 = vmatprep.subr.bf16.mxu0 %v4453
        %4589 = vmatpush1.bf16.msra.mxu0 %v4452
        %4590 = vmatprep.mubr.bf16.mxu0 %v4549
        %4591 = vmatmul.mubr.bf16.gmra.mrb[0].mxu0 %v4548
        %v4592 = vpop.f32.mrb[0].mxu0
        %v4593 = vadd.f32 %v4540, %v4592
        %v4594 = vpop.f32.mrb[0].mxu0
        %v4595 = vadd.f32 %v4540, %v4594
        %v4596 = vpop.f32.mrb[0].mxu0
        %v4597 = vpop.f32.mrb[0].mxu0
        %4598 = vdwg.mxu0
        %4599 = vmatprep.subr.bf16.mxu0 %v4460
        %4600 = vmatpush1.bf16.msra.mxu0 %v4459
        %4601 = vmatprep.subr.bf16.mxu0 %v4467
        %4602 = vmatpush1.bf16.msra.mxu0 %v4466
        %4603 = vmatprep.subr.bf16.mxu0 %v4474
        %4604 = vmatpush1.bf16.msra.mxu0 %v4473
        %4605 = vmatprep.subr.bf16.mxu0 %v4481
        %4606 = vmatpush1.bf16.msra.mxu0 %v4480
        %4607 = vmatprep.subr.bf16.mxu0 %v4488
        %4608 = vmatpush1.bf16.msra.mxu0 %v4487
        %4609 = vmatprep.subr.bf16.mxu0 %v4495
        %4610 = vmatpush1.bf16.msra.mxu0 %v4494
        %4611 = vmatprep.subr.bf16.mxu0 %v4502
        %4612 = vmatpush1.bf16.msra.mxu0 %v4501
        %4613 = vmatprep.subr.bf16.mxu0 %v4509
        %4614 = vmatpush1.bf16.msra.mxu0 %v4508
        %4615 = vmatprep.subr.bf16.mxu0 %v4516
        %4616 = vmatpush1.bf16.msra.mxu0 %v4515
        %4617 = vmatprep.subr.bf16.mxu0 %v4523
        %4618 = vmatpush1.bf16.msra.mxu0 %v4522
        %4619 = vmatprep.subr.bf16.mxu0 %v4530
        %4620 = vmatpush1.bf16.msra.mxu0 %v4529
        %4621 = vmatprep.subr.bf16.mxu0 0
        %4622 = vmatpush1.bf16.msra.mxu0 0
        %4623 = vmatprep.subr.bf16.mxu0 0
        %4624 = vmatpush1.bf16.msra.mxu0 0
        %4625 = vmatprep.subr.bf16.mxu0 0
        %4626 = vmatpush1.bf16.msra.mxu0 0
        %4627 = vmatprep.subr.bf16.mxu0 0
        %4628 = vmatpush1.bf16.msra.mxu0 0
        %4629 = vmatprep.subr.bf16.mxu0 0
        %4630 = vmatpush1.bf16.msra.mxu0 0
        %4631 = vmatprep.mubr.bf16.mxu0 %v4556
        %4632 = vmatmul.mubr.bf16.gmra.mrb[0].mxu0 %v4550
        %v4633 = vpop.f32.mrb[0].mxu0
        %v4634 = vadd.f32 %v4593, %v4633
        %v4635 = vpop.f32.mrb[0].mxu0
        %v4636 = vadd.f32 %v4595, %v4635
        %v4637 = vpop.f32.mrb[0].mxu0
        %v4638 = vpop.f32.mrb[0].mxu0
        %4639 = vdwg.mxu0
        %4640 = vmatprep.subr.bf16.mxu0 %v4350
        %4641 = vmatpush1.bf16.msra.mxu0 %v4349
        %4642 = vmatprep.subr.bf16.mxu0 %v4357
        %4643 = vmatpush1.bf16.msra.mxu0 %v4356
        %4644 = vmatprep.subr.bf16.mxu0 %v4364
        %4645 = vmatpush1.bf16.msra.mxu0 %v4363
        %4646 = vmatprep.subr.bf16.mxu0 %v4371
        %4647 = vmatpush1.bf16.msra.mxu0 %v4370
        %4648 = vmatprep.subr.bf16.mxu0 %v4378
        %4649 = vmatpush1.bf16.msra.mxu0 %v4377
        %4650 = vmatprep.subr.bf16.mxu0 %v4385
        %4651 = vmatpush1.bf16.msra.mxu0 %v4384
        %4652 = vmatprep.subr.bf16.mxu0 %v4392
        %4653 = vmatpush1.bf16.msra.mxu0 %v4391
        %4654 = vmatprep.subr.bf16.mxu0 %v4399
        %4655 = vmatpush1.bf16.msra.mxu0 %v4398
        %4656 = vmatprep.subr.bf16.mxu0 %v4406
        %4657 = vmatpush1.bf16.msra.mxu0 %v4405
        %4658 = vmatprep.subr.bf16.mxu0 %v4413
        %4659 = vmatpush1.bf16.msra.mxu0 %v4412
        %4660 = vmatprep.subr.bf16.mxu0 %v4420
        %4661 = vmatpush1.bf16.msra.mxu0 %v4419
        %4662 = vmatprep.subr.bf16.mxu0 %v4427
        %4663 = vmatpush1.bf16.msra.mxu0 %v4426
        %4664 = vmatprep.subr.bf16.mxu0 %v4434
        %4665 = vmatpush1.bf16.msra.mxu0 %v4433
        %4666 = vmatprep.subr.bf16.mxu0 %v4441
        %4667 = vmatpush1.bf16.msra.mxu0 %v4440
        %4668 = vmatprep.subr.bf16.mxu0 %v4448
        %4669 = vmatpush1.bf16.msra.mxu0 %v4447
        %4670 = vmatprep.subr.bf16.mxu0 %v4455
        %4671 = vmatpush1.bf16.msra.mxu0 %v4454
        %4672 = vmatprep.mubr.bf16.mxu0 %v4549
        %4673 = vmatmul.mubr.bf16.gmra.mrb[0].mxu0 %v4548
        %v4674 = vpop.f32.mrb[0].mxu0
        %v4675 = vadd.f32 %v4540, %v4674
        %v4676 = vpop.f32.mrb[0].mxu0
        %v4677 = vadd.f32 %v4540, %v4676
        %v4678 = vpop.f32.mrb[0].mxu0
        %v4679 = vpop.f32.mrb[0].mxu0
        %4680 = vdwg.mxu0
        %4681 = vmatprep.subr.bf16.mxu0 %v4462
        %4682 = vmatpush1.bf16.msra.mxu0 %v4461
        %4683 = vmatprep.subr.bf16.mxu0 %v4469
        %4684 = vmatpush1.bf16.msra.mxu0 %v4468
        %4685 = vmatprep.subr.bf16.mxu0 %v4476
        %4686 = vmatpush1.bf16.msra.mxu0 %v4475
        %4687 = vmatprep.subr.bf16.mxu0 %v4483
        %4688 = vmatpush1.bf16.msra.mxu0 %v4482
        %4689 = vmatprep.subr.bf16.mxu0 %v4490
        %4690 = vmatpush1.bf16.msra.mxu0 %v4489
        %4691 = vmatprep.subr.bf16.mxu0 %v4497
        %4692 = vmatpush1.bf16.msra.mxu0 %v4496
        %4693 = vmatprep.subr.bf16.mxu0 %v4504
        %4694 = vmatpush1.bf16.msra.mxu0 %v4503
        %4695 = vmatprep.subr.bf16.mxu0 %v4511
        %4696 = vmatpush1.bf16.msra.mxu0 %v4510
        %4697 = vmatprep.subr.bf16.mxu0 %v4518
        %4698 = vmatpush1.bf16.msra.mxu0 %v4517
        %4699 = vmatprep.subr.bf16.mxu0 %v4525
        %4700 = vmatpush1.bf16.msra.mxu0 %v4524
        %4701 = vmatprep.subr.bf16.mxu0 %v4532
        %4702 = vmatpush1.bf16.msra.mxu0 %v4531
        %4703 = vmatprep.subr.bf16.mxu0 0
        %4704 = vmatpush1.bf16.msra.mxu0 0
        %4705 = vmatprep.subr.bf16.mxu0 0
        %4706 = vmatpush1.bf16.msra.mxu0 0
        %4707 = vmatprep.subr.bf16.mxu0 0
        %4708 = vmatpush1.bf16.msra.mxu0 0
        %4709 = vmatprep.subr.bf16.mxu0 0
        %4710 = vmatpush1.bf16.msra.mxu0 0
        %4711 = vmatprep.subr.bf16.mxu0 0
        %4712 = vmatpush1.bf16.msra.mxu0 0
        %4713 = vmatprep.mubr.bf16.mxu0 %v4556
        %4714 = vmatmul.mubr.bf16.gmra.mrb[0].mxu0 %v4550
        %v4715 = vpop.f32.mrb[0].mxu0
        %v4716 = vadd.f32 %v4675, %v4715
        %v4717 = vpop.f32.mrb[0].mxu0
        %v4718 = vadd.f32 %v4677, %v4717
        %v4719 = vpop.f32.mrb[0].mxu0
        %v4720 = vpop.f32.mrb[0].mxu0
        %4721 = vdwg.mxu0
        %4722 = vmatprep.subr.bf16.mxu0 %v4352
        %4723 = vmatpush1.bf16.msra.mxu0 %v4351
        %4724 = vmatprep.subr.bf16.mxu0 %v4359
        %4725 = vmatpush1.bf16.msra.mxu0 %v4358
        %4726 = vmatprep.subr.bf16.mxu0 %v4366
        %4727 = vmatpush1.bf16.msra.mxu0 %v4365
        %4728 = vmatprep.subr.bf16.mxu0 %v4373
        %4729 = vmatpush1.bf16.msra.mxu0 %v4372
        %4730 = vmatprep.subr.bf16.mxu0 %v4380
        %4731 = vmatpush1.bf16.msra.mxu0 %v4379
        %4732 = vmatprep.subr.bf16.mxu0 %v4387
        %4733 = vmatpush1.bf16.msra.mxu0 %v4386
        %4734 = vmatprep.subr.bf16.mxu0 %v4394
        %4735 = vmatpush1.bf16.msra.mxu0 %v4393
        %4736 = vmatprep.subr.bf16.mxu0 %v4401
        %4737 = vmatpush1.bf16.msra.mxu0 %v4400
        %4738 = vmatprep.subr.bf16.mxu0 %v4408
        %4739 = vmatpush1.bf16.msra.mxu0 %v4407
        %4740 = vmatprep.subr.bf16.mxu0 %v4415
        %4741 = vmatpush1.bf16.msra.mxu0 %v4414
        %4742 = vmatprep.subr.bf16.mxu0 %v4422
        %4743 = vmatpush1.bf16.msra.mxu0 %v4421
        %4744 = vmatprep.subr.bf16.mxu0 %v4429
        %4745 = vmatpush1.bf16.msra.mxu0 %v4428
        %4746 = vmatprep.subr.bf16.mxu0 %v4436
        %4747 = vmatpush1.bf16.msra.mxu0 %v4435
        %4748 = vmatprep.subr.bf16.mxu0 %v4443
        %4749 = vmatpush1.bf16.msra.mxu0 %v4442
        %4750 = vmatprep.subr.bf16.mxu0 %v4450
        %4751 = vmatpush1.bf16.msra.mxu0 %v4449
        %4752 = vmatprep.subr.bf16.mxu0 %v4457
        %4753 = vmatpush1.bf16.msra.mxu0 %v4456
        %4754 = vmatprep.mubr.bf16.mxu0 %v4549
        %4755 = vmatmul.mubr.bf16.gmra.mrb[0].mxu0 %v4548
        %v4756 = vpop.f32.mrb[0].mxu0
        %v4757 = vadd.f32 %v4540, %v4756
        %v4758 = vpop.f32.mrb[0].mxu0
        %v4759 = vadd.f32 %v4540, %v4758
        %v4760 = vpop.f32.mrb[0].mxu0
        %v4761 = vpop.f32.mrb[0].mxu0
        %4762 = vdwg.mxu0
        %4763 = vmatprep.subr.bf16.mxu0 %v4464
        %4764 = vmatpush1.bf16.msra.mxu0 %v4463
        %4765 = vmatprep.subr.bf16.mxu0 %v4471
        %4766 = vmatpush1.bf16.msra.mxu0 %v4470
        %4767 = vmatprep.subr.bf16.mxu0 %v4478
        %4768 = vmatpush1.bf16.msra.mxu0 %v4477
        %4769 = vmatprep.subr.bf16.mxu0 %v4485
        %4770 = vmatpush1.bf16.msra.mxu0 %v4484
        %4771 = vmatprep.subr.bf16.mxu0 %v4492
        %4772 = vmatpush1.bf16.msra.mxu0 %v4491
        %4773 = vmatprep.subr.bf16.mxu0 %v4499
        %4774 = vmatpush1.bf16.msra.mxu0 %v4498
        %4775 = vmatprep.subr.bf16.mxu0 %v4506
        %4776 = vmatpush1.bf16.msra.mxu0 %v4505
        %4777 = vmatprep.subr.bf16.mxu0 %v4513
        %4778 = vmatpush1.bf16.msra.mxu0 %v4512
        %4779 = vmatprep.subr.bf16.mxu0 %v4520
        %4780 = vmatpush1.bf16.msra.mxu0 %v4519
        %4781 = vmatprep.subr.bf16.mxu0 %v4527
        %4782 = vmatpush1.bf16.msra.mxu0 %v4526
        %4783 = vmatprep.subr.bf16.mxu0 %v4534
        %4784 = vmatpush1.bf16.msra.mxu0 %v4533
        %4785 = vmatprep.subr.bf16.mxu0 0
        %4786 = vmatpush1.bf16.msra.mxu0 0
        %4787 = vmatprep.subr.bf16.mxu0 0
        %4788 = vmatpush1.bf16.msra.mxu0 0
        %4789 = vmatprep.subr.bf16.mxu0 0
        %4790 = vmatpush1.bf16.msra.mxu0 0
        %4791 = vmatprep.subr.bf16.mxu0 0
        %4792 = vmatpush1.bf16.msra.mxu0 0
        %4793 = vmatprep.subr.bf16.mxu0 0
        %4794 = vmatpush1.bf16.msra.mxu0 0
        %4795 = vmatprep.mubr.bf16.mxu0 %v4556
        %4796 = vmatmul.mubr.bf16.gmra.mrb[0].mxu0 %v4550
        %v4797 = vpop.f32.mrb[0].mxu0
        %v4798 = vadd.f32 %v4757, %v4797
        %v4799 = vpop.f32.mrb[0].mxu0
        %v4800 = vadd.f32 %v4759, %v4799
        %v4801 = vpop.f32.mrb[0].mxu0
        %v4802 = vpop.f32.mrb[0].mxu0
        %4803 = vdwg.mxu0
        %4804 = vmatprep.subr.bf16.mxu0 0
        %4805 = vmatpush1.bf16.msra.mxu0 %v4353
        %4806 = vmatprep.subr.bf16.mxu0 0
        %4807 = vmatpush1.bf16.msra.mxu0 %v4360
        %4808 = vmatprep.subr.bf16.mxu0 0
        %4809 = vmatpush1.bf16.msra.mxu0 %v4367
        %4810 = vmatprep.subr.bf16.mxu0 0
        %4811 = vmatpush1.bf16.msra.mxu0 %v4374
        %4812 = vmatprep.subr.bf16.mxu0 0
        %4813 = vmatpush1.bf16.msra.mxu0 %v4381
        %4814 = vmatprep.subr.bf16.mxu0 0
        %4815 = vmatpush1.bf16.msra.mxu0 %v4388
        %4816 = vmatprep.subr.bf16.mxu0 0
        %4817 = vmatpush1.bf16.msra.mxu0 %v4395
        %4818 = vmatprep.subr.bf16.mxu0 0
        %4819 = vmatpush1.bf16.msra.mxu0 %v4402
        %4820 = vmatprep.subr.bf16.mxu0 0
        %4821 = vmatpush1.bf16.msra.mxu0 %v4409
        %4822 = vmatprep.subr.bf16.mxu0 0
        %4823 = vmatpush1.bf16.msra.mxu0 %v4416
        %4824 = vmatprep.subr.bf16.mxu0 0
        %4825 = vmatpush1.bf16.msra.mxu0 %v4423
        %4826 = vmatprep.subr.bf16.mxu0 0
        %4827 = vmatpush1.bf16.msra.mxu0 %v4430
        %4828 = vmatprep.subr.bf16.mxu0 0
        %4829 = vmatpush1.bf16.msra.mxu0 %v4437
        %4830 = vmatprep.subr.bf16.mxu0 0
        %4831 = vmatpush1.bf16.msra.mxu0 %v4444
        %4832 = vmatprep.subr.bf16.mxu0 0
        %4833 = vmatpush1.bf16.msra.mxu0 %v4451
        %4834 = vmatprep.subr.bf16.mxu0 0
        %4835 = vmatpush1.bf16.msra.mxu0 %v4458
        %4836 = vmatprep.mubr.bf16.mxu0 %v4549
        %4837 = vmatmul.mubr.bf16.gmra.mrb[0].mxu0 %v4548
        %v4838 = vpop.f32.mrb[0].mxu0
        %v4839 = vadd.f32 %v4540, %v4838
        %v4840 = vpop.f32.mrb[0].mxu0
        %v4841 = vpop.f32.mrb[0].mxu0
        %v4842 = vpop.f32.mrb[0].mxu0
        %4843 = vdwg.mxu0
        %4844 = vmatprep.subr.bf16.mxu0 0
        %4845 = vmatpush1.bf16.msra.mxu0 %v4465
        %4846 = vmatprep.subr.bf16.mxu0 0
        %4847 = vmatpush1.bf16.msra.mxu0 %v4472
        %4848 = vmatprep.subr.bf16.mxu0 0
        %4849 = vmatpush1.bf16.msra.mxu0 %v4479
        %4850 = vmatprep.subr.bf16.mxu0 0
        %4851 = vmatpush1.bf16.msra.mxu0 %v4486
        %4852 = vmatprep.subr.bf16.mxu0 0
        %4853 = vmatpush1.bf16.msra.mxu0 %v4493
        %4854 = vmatprep.subr.bf16.mxu0 0
        %4855 = vmatpush1.bf16.msra.mxu0 %v4500
        %4856 = vmatprep.subr.bf16.mxu0 0
        %4857 = vmatpush1.bf16.msra.mxu0 %v4507
        %4858 = vmatprep.subr.bf16.mxu0 0
        %4859 = vmatpush1.bf16.msra.mxu0 %v4514
        %4860 = vmatprep.subr.bf16.mxu0 0
        %4861 = vmatpush1.bf16.msra.mxu0 %v4521
        %4862 = vmatprep.subr.bf16.mxu0 0
        %4863 = vmatpush1.bf16.msra.mxu0 %v4528
        %4864 = vmatprep.subr.bf16.mxu0 0
        %4865 = vmatpush1.bf16.msra.mxu0 %v4535
        %4866 = vmatprep.subr.bf16.mxu0 0
        %4867 = vmatpush1.bf16.msra.mxu0 0
        %4868 = vmatprep.subr.bf16.mxu0 0
        %4869 = vmatpush1.bf16.msra.mxu0 0
        %4870 = vmatprep.subr.bf16.mxu0 0
        %4871 = vmatpush1.bf16.msra.mxu0 0
        %4872 = vmatprep.subr.bf16.mxu0 0
        %4873 = vmatpush1.bf16.msra.mxu0 0
        %4874 = vmatprep.subr.bf16.mxu0 0
        %4875 = vmatpush1.bf16.msra.mxu0 0
        %4876 = vmatprep.mubr.bf16.mxu0 %v4556
        %4877 = vmatmul.mubr.bf16.gmra.mrb[0].mxu0 %v4550
        %v4878 = vpop.f32.mrb[0].mxu0
        %v4879 = vadd.f32 %v4839, %v4878
        %v4880 = vpop.f32.mrb[0].mxu0
        %v4881 = vpop.f32.mrb[0].mxu0
        %v4882 = vpop.f32.mrb[0].mxu0
        %4883 = vdwg.mxu0
        %v4884 = vld [vmem:[%s252 + $0x10] sm:$0xff]
        %v4885 = vld [vmem:[%s252 + $0x18] sm:$0xff]
        %v4886 = vld [vmem:[%s252 + $0x20] sm:$0xff]
        %v4887 = vld [vmem:[%s252 + $0x28] sm:$0xff]
        %v4888 = vld [vmem:[%s252 + $0x30] sm:$0xff]
        %v4889 = vld [vmem:[%s252 + $0x38] sm:$0xff]
        %v4890 = vld [vmem:[%s252 + $0x40] sm:$0xff]
        %v4891 = vadd.f32 %v4634, %v4884
        %v4892 = vadd.f32 %v4636, %v4885
        %v4893 = vadd.f32 %v4716, %v4886
        %v4894 = vadd.f32 %v4718, %v4887
        %v4895 = vadd.f32 %v4798, %v4888
        %v4896 = vadd.f32 %v4800, %v4889
        %v4897 = vadd.f32 %v4879, %v4890
        %v4898 = vmax.f32 %v4891, 0.0
        %v4899 = vmax.f32 %v4892, 0.0
        %v4900 = vmax.f32 %v4893, 0.0
        %v4901 = vmax.f32 %v4894, 0.0
        %v4902 = vmax.f32 %v4895, 0.0
        %v4903 = vmax.f32 %v4896, 0.0
        %v4904 = vmax.f32 %v4897, 0.0
        %4905 = vst [vmem:[%s284] sm:$0xff] %v4898
        %4906 = vst [vmem:[%s284 + $0x8] sm:$0xff] %v4899
        %4907 = vst [vmem:[%s284 + $0x10] sm:$0xff] %v4900
        %4908 = vst [vmem:[%s284 + $0x18] sm:$0xff] %v4901
        %4909 = vst [vmem:[%s284 + $0x20] sm:$0xff] %v4902
        %4910 = vst [vmem:[%s284 + $0x28] sm:$0xff] %v4903
        %4911 = vst [vmem:[%s284 + $0x30] sm:$0xff] %v4904
        %s4912 = sand.u32 %s163, 1
        %s4913 = scalar_lea.sflag [#allocation7], %s4912
        %s4914 = sand.u32 %s163, 1
        %s4915 = smul.addr %s4914, 56
        %s4916 = scalar_lea.vmem [#allocation10], %s4915
        // Predicated region
        $region53: #{tpu_custom_call.1} parent=43 // pred_check
          %p4917 = pneg %p173
        $region54: #{tpu_custom_call.1} parent=43 // pred_check_branch
          %4919 = sbr.rel (%p4917) target = $region56
        $region55: #{tpu_custom_call.1} parent=43 // pred_region
          %s4921 = ssub.s32 896, 896
          %4922 = vsyncadd %s4913, %s4921
          %s4923 = smul.addr %s24, 7
          %s4924 = smul.addr %s4923, 128
          %s4925 = scalar_lea.hbm %s6, %s4924
          %s4927 = sshll.u32 %s4916, 4
          %s4928 = int_to_ptr.vmem [resolvable:$true] %s4927
          %4930 = dma.vmem_to_hbm [thread:$0]  %s4928, 896, %s4925, %s4913
        $region56: #{tpu_custom_call.1} parent=43 // pred_fallthru
          _
      $region44: #{tpu_custom_call.1} parent=5 // pred_fallthru
        _
      %p4931 = scmp.le.s32.totalorder 2, %s19
      // Predicated region
      $region57: #{tpu_custom_call.1} parent=5 // pred_check
        %p4932 = pneg %p4931
      $region58: #{tpu_custom_call.1} parent=5 // pred_check_branch
        %4934 = sbr.rel (%p4932) target = $region60
      $region59: #{tpu_custom_call.1} parent=5 // pred_region
        %s4935 = ssub.s32 %s19, 2
        // Predicated region
        $region61: #{tpu_custom_call.1} parent=59 // pred_check
          %p4936 = pneg %p179
        $region62: #{tpu_custom_call.1} parent=59 // pred_check_branch
          %4938 = sbr.rel (%p4936) target = $region64
        $region63: #{tpu_custom_call.1} parent=59 // pred_region
          %s4939 = sand.u32 %s164, 1
          %s4940 = scalar_lea.sflag [#allocation7], %s4939
          %s4941 = sand.u32 %s164, 1
          %s4942 = smul.addr %s4941, 56
          %s4943 = scalar_lea.vmem [#allocation10], %s4942
          %4944 = dma.done %s4940, 896
        $region64: #{tpu_custom_call.1} parent=59 // pred_fallthru
          _
      $region60: #{tpu_custom_call.1} parent=5 // pred_fallthru
        _
    $region6: #{tpu_custom_call.1} parent=1 // loop_footer
      %s23 = sadd.s32 1, %s19
    $region7: #{tpu_custom_call.1} parent=1 // loop_footer_branch
      %18 = sbr.rel target = $region3
    $region8: #{tpu_custom_call.1} parent=1 // loop_exit
      _
    %4945 = vsyncpa [#allocation6], 1
    %s4946 = scalar_lea.sflag [#allocation6], 1
    %4947 = vsyncpa %s4946, 1
    %4948 = vsyncpa [#allocation9], 1
    %4949 = vsyncpa [#allocation7], 1
    %s4950 = scalar_lea.sflag [#allocation7], 1
    %4951 = vsyncpa %s4950, 1

</llo_original>
